<compile_context>
chip_gen: v7x
topology: tpu7x:2x2x1
jax: 0.10.0
libtpu: 0.0.40
codegen_flags: <defaults>
</compile_context>

<pallas_src>
import functools

import jax
import jax.numpy as jnp
from jax import lax
from jax.experimental import pallas as pl
from jax.experimental.pallas import tpu as pltpu

# Assumed encoder structure (see TODO above).
CONV1_K, CONV1_S, CONV1_P = 4, 2, 1
CONV2_K = 3
CONV1_C, CONV2_C = 32, 64


# ----------------------------- Pallas kernel ------------------------------ #
def _discriminator_kernel(p1_ref, w1_ref, b1_ref, w2_ref, b2_ref,
                          w3_ref, b3_ref, w4_ref, b4_ref, w5_ref, b5_ref,
                          o_ref, *, n, gh, gw, oh, ow, kh, kw):
    """Entire Discriminator forward; every intermediate stays in VMEM.

    Row layout of p1 / h1 / h2 is (y, x, n) -- spatial-major, batch-minor -- so
    a conv2 tap (i, j) is a constant row shift of (i*gw + j)*n, and the rows of
    one spatial position form a contiguous (n, C) block for the FC flatten.
    """
    f32 = jnp.float32
    m = n * gh * gw                          # rows of the full conv1 output grid

    # ---- conv1: one GEMM + bias + ReLU (bf16 operands, f32 accumulate) ----
    h1 = jnp.dot(p1_ref[...], w1_ref[...], preferred_element_type=f32)
    h1 = jnp.maximum(h1 + b1_ref[...], 0.0).astype(w2_ref.dtype)   # (m + pad, C1)

    # ---- conv2: kh*kw shifted-slice GEMMs + bias + ReLU ----
    acc = None
    for i in range(kh):
        for j in range(kw):
            shift = (i * gw + j) * n
            d = jnp.dot(h1[shift:shift + m, :], w2_ref[i * kw + j],
                        preferred_element_type=f32)
            acc = d if acc is None else acc + d
    # Rows with y >= oh or x >= ow hold junk; they are never read below.
    h2 = jnp.maximum(acc + b2_ref[...], 0.0).astype(w3_ref.dtype)  # (m, C2)

    # ---- flatten + efc1: accumulate over the oh*ow valid spatial positions ----
    e1 = None
    for oy in range(oh):
        for ox in range(ow):
            r0 = (oy * gw + ox) * n
            d = jnp.dot(h2[r0:r0 + n, :], w3_ref[oy * ow + ox],
                        preferred_element_type=f32)
            e1 = d if e1 is None else e1 + d
    e1 = jnp.maximum(e1 + b3_ref[...], 0.0).astype(w4_ref.dtype)   # (n, F1)

    # ---- efc2 (linear, no activation) ----
    e2 = jnp.dot(e1, w4_ref[...], preferred_element_type=f32) + b4_ref[...]
    e2 = e2.astype(w5_ref.dtype)                                   # (n, F2)

    # ---- Discriminator head: fc1 + sigmoid (EUP exp + reciprocal) ----
    logit = jnp.dot(e2, w5_ref[...], preferred_element_type=f32) + b5_ref[...]
    sig = pl.reciprocal(1.0 + jnp.exp(-logit), approx=True)
    o_ref[...] = jnp.clip(sig, 0.0, 1.0).astype(o_ref.dtype)


# --------------------------- parameter handling ---------------------------- #
def init_torch_params(key, n_channels, h, w, x_fdim1, x_fdim2):
    """PyTorch-layout parameters (OIHW convs, (out,in) linears), uniform init."""
    def u(k, shape, fan_in):
        bound = 1.0 / float(fan_in) ** 0.5
        return jax.random.uniform(k, shape, jnp.float32, -bound, bound)

    ks = jax.random.split(key, 10)
    c1, c2 = CONV1_C, CONV2_C
    h1 = (h + 2 * CONV1_P - CONV1_K) // CONV1_S + 1
    w1 = (w + 2 * CONV1_P - CONV1_K) // CONV1_S + 1
    h2, w2 = h1 - CONV2_K + 1, w1 - CONV2_K + 1
    flat = c2 * h2 * w2
    fan_c1 = n_channels * CONV1_K * CONV1_K
    fan_c2 = c1 * CONV2_K * CONV2_K
    return {
        "conv1_w": u(ks[0], (c1, n_channels, CONV1_K, CONV1_K), fan_c1),
        "conv1_b": u(ks[1], (c1,), fan_c1),
        "conv2_w": u(ks[2], (c2, c1, CONV2_K, CONV2_K), fan_c2),
        "conv2_b": u(ks[3], (c2,), fan_c2),
        "efc1_w": u(ks[4], (x_fdim1, flat), flat),
        "efc1_b": u(ks[5], (x_fdim1,), flat),
        "efc2_w": u(ks[6], (x_fdim2, x_fdim1), x_fdim1),
        "efc2_b": u(ks[7], (x_fdim2,), x_fdim1),
        "fc1_w": u(ks[8], (1, x_fdim2), x_fdim2),     # Discriminator.fc1
        "fc1_b": u(ks[9], (1,), x_fdim2),
    }


def prepare_params(tp):
    """One-time re-layout: PyTorch weights -> kernel layout.

    GEMM operands are stored bf16 (halves weight DMA bytes; MXU accumulates
    f32), biases stay f32.  efc1's rows are permuted from PyTorch's NCHW
    (C-major, then H, then W) flatten order to the kernel's spatial-major,
    channel-minor layout: row (s, c) <- PyTorch input feature c*S2 + s.
    """
    bf16, f32 = jnp.bfloat16, jnp.float32
    c1 = tp["conv1_w"].shape[0]
    c2, _, kh, kw = tp["conv2_w"].shape
    f1 = tp["efc1_w"].shape[0]
    s2 = tp["efc1_w"].shape[1] // c2            # number of conv2 output positions
    return {
        # conv1 as GEMM: (C*kh*kw, C1); feature order (c, i, j) == OIHW flatten
        "w1": tp["conv1_w"].reshape(c1, -1).T.astype(bf16),
        "b1": tp["conv1_b"].reshape(1, -1).astype(f32),
        # conv2 per-tap matrices: (kh*kw, C1, C2), tap index t = i*kw + j
        "w2": tp["conv2_w"].transpose(2, 3, 1, 0).reshape(kh * kw, c1, c2).astype(bf16),
        "b2": tp["conv2_b"].reshape(1, -1).astype(f32),
        # efc1 permuted to (S2, C2, F1)
        "w3": tp["efc1_w"].T.reshape(c2, s2, f1).transpose(1, 0, 2).astype(bf16),
        "b3": tp["efc1_b"].reshape(1, -1).astype(f32),
        "w4": tp["efc2_w"].T.astype(bf16),
        "b4": tp["efc2_b"].reshape(1, -1).astype(f32),
        "w5": tp["fc1_w"].T.astype(bf16),
        "b5": tp["fc1_b"].reshape(1, -1).astype(f32),
    }


# ------------------------------- forward ----------------------------------- #
def discriminator_forward(params, x):
    """Single fused pallas_call for the whole Discriminator forward (NCHW input)."""
    n = x.shape[0]
    c1 = params["w1"].shape[1]
    c2 = params["w2"].shape[2]
    f1 = params["w3"].shape[2]
    f2 = params["w4"].shape[1]
    kh = kw = CONV2_K

    # conv1 patches via a single XLA op.  Output: (N, C*K*K, H1, W1) with the
    # feature dim ordered (c, i, j) -- same order as the OIHW weight flatten.
    p = lax.conv_general_dilated_patches(
        x, filter_shape=(CONV1_K, CONV1_K), window_strides=(CONV1_S, CONV1_S),
        padding=((CONV1_P, CONV1_P), (CONV1_P, CONV1_P)))
    k1 = p.shape[1]
    gh, gw = p.shape[2], p.shape[3]             # conv1 output grid (H1, W1)
    oh, ow = gh - kh + 1, gw - kw + 1           # conv2 output grid (H2, W2)

    # Rows ordered (y, x, n) so conv2 taps become constant row shifts in-kernel;
    # pad rows keep every shifted slice in bounds (pad values never reach a
    # valid output position).
    p = p.transpose(2, 3, 0, 1).reshape(gh * gw * n, k1)
    pad_rows = ((kh - 1) * gw + (kw - 1)) * n
    p = jnp.pad(p, ((0, pad_rows), (0, 0))).astype(jnp.bfloat16)

    m = n * gh * gw
    flops = 2 * (p.shape[0] * k1 * c1 + kh * kw * m * c1 * c2
                 + oh * ow * n * c2 * f1 + n * f1 * f2 + n * f2)
    args = (p, params["w1"], params["b1"], params["w2"], params["b2"],
            params["w3"], params["b3"], params["w4"], params["b4"],
            params["w5"], params["b5"])
    bytes_accessed = sum(int(a.size) * a.dtype.itemsize for a in args) + n * 4

    kernel = functools.partial(_discriminator_kernel, n=n, gh=gh, gw=gw,
                               oh=oh, ow=ow, kh=kh, kw=kw)
    # TODO(synk): if batch grows, tile rows over a ("parallel",) grid so v7x's
    # two TensorCores share the work and per-step VMEM stays bounded; at
    # batch=2 a single gridless invocation is launch-overhead optimal.
    return pl.pallas_call(
        kernel,
        out_shape=jax.ShapeDtypeStruct((n, 1), jnp.float32),
        in_specs=[pl.BlockSpec(memory_space=pltpu.MemorySpace.VMEM)] * len(args),
        out_specs=pl.BlockSpec(memory_space=pltpu.MemorySpace.VMEM),
        cost_estimate=pl.CostEstimate(flops=int(flops), transcendentals=2 * n,
                                      bytes_accessed=int(bytes_accessed)),
    )(*args)


# ---------------------------- pure-JAX reference --------------------------- #
def _reference_forward(tp, x):
    """f32 reference of the same (assumed) Discriminator forward."""
    dn = ("NCHW", "OIHW", "NCHW")
    h = lax.conv_general_dilated(x, tp["conv1_w"], (CONV1_S, CONV1_S),
                                 ((CONV1_P, CONV1_P), (CONV1_P, CONV1_P)),
                                 dimension_numbers=dn)
    h = jax.nn.relu(h + tp["conv1_b"][None, :, None, None])
    h = lax.conv_general_dilated(h, tp["conv2_w"], (1, 1), ((0, 0), (0, 0)),
                                 dimension_numbers=dn)
    h = jax.nn.relu(h + tp["conv2_b"][None, :, None, None])
    h = h.reshape(h.shape[0], -1)                  # PyTorch NCHW .view flatten
    h = jax.nn.relu(h @ tp["efc1_w"].T + tp["efc1_b"])
    h = h @ tp["efc2_w"].T + tp["efc2_b"]
    return jax.nn.sigmoid(h @ tp["fc1_w"].T + tp["fc1_b"])


if __name__ == "__main__":
    key = jax.random.PRNGKey(0)
    k_param, k_x = jax.random.split(key)

    batch, n_channels, H, W = 2, 1, 16, 16      # ipVec_dim = 256 <= 28*28*3 branch
    x_fdim1, x_fdim2 = 32, 16                   # args.x_fdim1 / args.x_fdim2

    torch_params = init_torch_params(k_param, n_channels, H, W, x_fdim1, x_fdim2)
    params = prepare_params(torch_params)       # one-time weight re-layout

    x = jax.random.normal(k_x, (batch, n_channels, H, W), dtype=jnp.float32)

    fwd = jax.jit(discriminator_forward)
    out = jax.block_until_ready(fwd(params, x))

    assert out.shape == (batch, 1), out.shape
    assert bool(jnp.all(jnp.isfinite(out)))
    assert bool(jnp.all((out >= 0.0) & (out <= 1.0)))   # sigmoid range

    ref = _reference_forward(torch_params, x)           # bf16-operand tolerance
    assert bool(jnp.allclose(out, ref, atol=5e-2)), (out, ref)

    print("KERNEL_OK")
</pallas_src>

<mosaic_0001>
module attributes {stable_mosaic.version = 11 : i64} {
  func.func @_discriminator_kernel(%arg0: memref<164x16xbf16, #tpu.memory_space<vmem>>, %arg1: memref<16x32xbf16, #tpu.memory_space<vmem>>, %arg2: memref<1x32xf32, #tpu.memory_space<vmem>>, %arg3: memref<9x32x64xbf16, #tpu.memory_space<vmem>>, %arg4: memref<1x64xf32, #tpu.memory_space<vmem>>, %arg5: memref<36x64x32xbf16, #tpu.memory_space<vmem>>, %arg6: memref<1x32xf32, #tpu.memory_space<vmem>>, %arg7: memref<32x16xbf16, #tpu.memory_space<vmem>>, %arg8: memref<1x16xf32, #tpu.memory_space<vmem>>, %arg9: memref<16x1xbf16, #tpu.memory_space<vmem>>, %arg10: memref<1x1xf32, #tpu.memory_space<vmem>>, %arg11: memref<2x1xf32, #tpu.memory_space<vmem>>) attributes {dimension_semantics = [], scalar_prefetch = 0 : i64, scratch_operands = 0 : i64, tpu.core_type = #tpu.core_type<tc>} {
    %c0 = arith.constant 0 : index
    %c0_0 = arith.constant 0 : index
    %0 = vector.load %arg0[%c0, %c0_0] : memref<164x16xbf16, #tpu.memory_space<vmem>>, vector<164x16xbf16>
    %c0_1 = arith.constant 0 : index
    %c0_2 = arith.constant 0 : index
    %1 = vector.load %arg1[%c0_1, %c0_2] : memref<16x32xbf16, #tpu.memory_space<vmem>>, vector<16x32xbf16>
    %cst = arith.constant dense<0.000000e+00> : vector<164x32xf32>
    %2 = tpu.matmul %0, %1, %cst {dimension_numbers = #tpu.dot_dimension_numbers<[1], [0], [0], [1], [0, 0, 1, 1], [], []>} : vector<164x16xbf16>, vector<16x32xbf16>, vector<164x32xf32> -> vector<164x32xf32>
    %c0_3 = arith.constant 0 : index
    %c0_4 = arith.constant 0 : index
    %3 = vector.load %arg2[%c0_3, %c0_4] : memref<1x32xf32, #tpu.memory_space<vmem>>, vector<1x32xf32>
    %4 = vector.broadcast %3 : vector<1x32xf32> to vector<164x32xf32>
    %5 = arith.addf %2, %4 : vector<164x32xf32>
    %cst_5 = arith.constant 0.000000e+00 : f32
    %6 = vector.broadcast %cst_5 : f32 to vector<164x32xf32>
    %7 = arith.maximumf %5, %6 : vector<164x32xf32>
    %8 = arith.truncf %7 : vector<164x32xf32> to vector<164x32xbf16>
    %9 = vector.extract_strided_slice %8 {offsets = [0, 0], sizes = [128, 32], strides = [1, 1]} : vector<164x32xbf16> to vector<128x32xbf16>
    %c0_6 = arith.constant 0 : index
    %c0_7 = arith.constant 0 : index
    %c0_8 = arith.constant 0 : index
    %10 = vector.load %arg3[%c0_6, %c0_7, %c0_8] : memref<9x32x64xbf16, #tpu.memory_space<vmem>>, vector<1x32x64xbf16>
    %11 = vector.shape_cast %10 : vector<1x32x64xbf16> to vector<32x64xbf16>
    %cst_9 = arith.constant dense<0.000000e+00> : vector<128x64xf32>
    %12 = tpu.matmul %9, %11, %cst_9 {dimension_numbers = #tpu.dot_dimension_numbers<[1], [0], [0], [1], [0, 0, 1, 1], [], []>} : vector<128x32xbf16>, vector<32x64xbf16>, vector<128x64xf32> -> vector<128x64xf32>
    %13 = vector.extract_strided_slice %8 {offsets = [2, 0], sizes = [128, 32], strides = [1, 1]} : vector<164x32xbf16> to vector<128x32xbf16>
    %c1 = arith.constant 1 : index
    %c0_10 = arith.constant 0 : index
    %c0_11 = arith.constant 0 : index
    %14 = vector.load %arg3[%c1, %c0_10, %c0_11] : memref<9x32x64xbf16, #tpu.memory_space<vmem>>, vector<1x32x64xbf16>
    %15 = vector.shape_cast %14 : vector<1x32x64xbf16> to vector<32x64xbf16>
    %cst_12 = arith.constant dense<0.000000e+00> : vector<128x64xf32>
    %16 = tpu.matmul %13, %15, %cst_12 {dimension_numbers = #tpu.dot_dimension_numbers<[1], [0], [0], [1], [0, 0, 1, 1], [], []>} : vector<128x32xbf16>, vector<32x64xbf16>, vector<128x64xf32> -> vector<128x64xf32>
    %17 = arith.addf %12, %16 : vector<128x64xf32>
    %18 = vector.extract_strided_slice %8 {offsets = [4, 0], sizes = [128, 32], strides = [1, 1]} : vector<164x32xbf16> to vector<128x32xbf16>
    %c2 = arith.constant 2 : index
    %c0_13 = arith.constant 0 : index
    %c0_14 = arith.constant 0 : index
    %19 = vector.load %arg3[%c2, %c0_13, %c0_14] : memref<9x32x64xbf16, #tpu.memory_space<vmem>>, vector<1x32x64xbf16>
    %20 = vector.shape_cast %19 : vector<1x32x64xbf16> to vector<32x64xbf16>
    %cst_15 = arith.constant dense<0.000000e+00> : vector<128x64xf32>
    %21 = tpu.matmul %18, %20, %cst_15 {dimension_numbers = #tpu.dot_dimension_numbers<[1], [0], [0], [1], [0, 0, 1, 1], [], []>} : vector<128x32xbf16>, vector<32x64xbf16>, vector<128x64xf32> -> vector<128x64xf32>
    %22 = arith.addf %17, %21 : vector<128x64xf32>
    %23 = vector.extract_strided_slice %8 {offsets = [16, 0], sizes = [128, 32], strides = [1, 1]} : vector<164x32xbf16> to vector<128x32xbf16>
    %c3 = arith.constant 3 : index
    %c0_16 = arith.constant 0 : index
    %c0_17 = arith.constant 0 : index
    %24 = vector.load %arg3[%c3, %c0_16, %c0_17] : memref<9x32x64xbf16, #tpu.memory_space<vmem>>, vector<1x32x64xbf16>
    %25 = vector.shape_cast %24 : vector<1x32x64xbf16> to vector<32x64xbf16>
    %cst_18 = arith.constant dense<0.000000e+00> : vector<128x64xf32>
    %26 = tpu.matmul %23, %25, %cst_18 {dimension_numbers = #tpu.dot_dimension_numbers<[1], [0], [0], [1], [0, 0, 1, 1], [], []>} : vector<128x32xbf16>, vector<32x64xbf16>, vector<128x64xf32> -> vector<128x64xf32>
    %27 = arith.addf %22, %26 : vector<128x64xf32>
    %28 = vector.extract_strided_slice %8 {offsets = [18, 0], sizes = [128, 32], strides = [1, 1]} : vector<164x32xbf16> to vector<128x32xbf16>
    %c4 = arith.constant 4 : index
    %c0_19 = arith.constant 0 : index
    %c0_20 = arith.constant 0 : index
    %29 = vector.load %arg3[%c4, %c0_19, %c0_20] : memref<9x32x64xbf16, #tpu.memory_space<vmem>>, vector<1x32x64xbf16>
    %30 = vector.shape_cast %29 : vector<1x32x64xbf16> to vector<32x64xbf16>
    %cst_21 = arith.constant dense<0.000000e+00> : vector<128x64xf32>
    %31 = tpu.matmul %28, %30, %cst_21 {dimension_numbers = #tpu.dot_dimension_numbers<[1], [0], [0], [1], [0, 0, 1, 1], [], []>} : vector<128x32xbf16>, vector<32x64xbf16>, vector<128x64xf32> -> vector<128x64xf32>
    %32 = arith.addf %27, %31 : vector<128x64xf32>
    %33 = vector.extract_strided_slice %8 {offsets = [20, 0], sizes = [128, 32], strides = [1, 1]} : vector<164x32xbf16> to vector<128x32xbf16>
    %c5 = arith.constant 5 : index
    %c0_22 = arith.constant 0 : index
    %c0_23 = arith.constant 0 : index
    %34 = vector.load %arg3[%c5, %c0_22, %c0_23] : memref<9x32x64xbf16, #tpu.memory_space<vmem>>, vector<1x32x64xbf16>
    %35 = vector.shape_cast %34 : vector<1x32x64xbf16> to vector<32x64xbf16>
    %cst_24 = arith.constant dense<0.000000e+00> : vector<128x64xf32>
    %36 = tpu.matmul %33, %35, %cst_24 {dimension_numbers = #tpu.dot_dimension_numbers<[1], [0], [0], [1], [0, 0, 1, 1], [], []>} : vector<128x32xbf16>, vector<32x64xbf16>, vector<128x64xf32> -> vector<128x64xf32>
    %37 = arith.addf %32, %36 : vector<128x64xf32>
    %38 = vector.extract_strided_slice %8 {offsets = [32, 0], sizes = [128, 32], strides = [1, 1]} : vector<164x32xbf16> to vector<128x32xbf16>
    %c6 = arith.constant 6 : index
    %c0_25 = arith.constant 0 : index
    %c0_26 = arith.constant 0 : index
    %39 = vector.load %arg3[%c6, %c0_25, %c0_26] : memref<9x32x64xbf16, #tpu.memory_space<vmem>>, vector<1x32x64xbf16>
    %40 = vector.shape_cast %39 : vector<1x32x64xbf16> to vector<32x64xbf16>
    %cst_27 = arith.constant dense<0.000000e+00> : vector<128x64xf32>
    %41 = tpu.matmul %38, %40, %cst_27 {dimension_numbers = #tpu.dot_dimension_numbers<[1], [0], [0], [1], [0, 0, 1, 1], [], []>} : vector<128x32xbf16>, vector<32x64xbf16>, vector<128x64xf32> -> vector<128x64xf32>
    %42 = arith.addf %37, %41 : vector<128x64xf32>
    %43 = vector.extract_strided_slice %8 {offsets = [34, 0], sizes = [128, 32], strides = [1, 1]} : vector<164x32xbf16> to vector<128x32xbf16>
    %c7 = arith.constant 7 : index
    %c0_28 = arith.constant 0 : index
    %c0_29 = arith.constant 0 : index
    %44 = vector.load %arg3[%c7, %c0_28, %c0_29] : memref<9x32x64xbf16, #tpu.memory_space<vmem>>, vector<1x32x64xbf16>
    %45 = vector.shape_cast %44 : vector<1x32x64xbf16> to vector<32x64xbf16>
    %cst_30 = arith.constant dense<0.000000e+00> : vector<128x64xf32>
    %46 = tpu.matmul %43, %45, %cst_30 {dimension_numbers = #tpu.dot_dimension_numbers<[1], [0], [0], [1], [0, 0, 1, 1], [], []>} : vector<128x32xbf16>, vector<32x64xbf16>, vector<128x64xf32> -> vector<128x64xf32>
    %47 = arith.addf %42, %46 : vector<128x64xf32>
    %48 = vector.extract_strided_slice %8 {offsets = [36, 0], sizes = [128, 32], strides = [1, 1]} : vector<164x32xbf16> to vector<128x32xbf16>
    %c8 = arith.constant 8 : index
    %c0_31 = arith.constant 0 : index
    %c0_32 = arith.constant 0 : index
    %49 = vector.load %arg3[%c8, %c0_31, %c0_32] : memref<9x32x64xbf16, #tpu.memory_space<vmem>>, vector<1x32x64xbf16>
    %50 = vector.shape_cast %49 : vector<1x32x64xbf16> to vector<32x64xbf16>
    %cst_33 = arith.constant dense<0.000000e+00> : vector<128x64xf32>
    %51 = tpu.matmul %48, %50, %cst_33 {dimension_numbers = #tpu.dot_dimension_numbers<[1], [0], [0], [1], [0, 0, 1, 1], [], []>} : vector<128x32xbf16>, vector<32x64xbf16>, vector<128x64xf32> -> vector<128x64xf32>
    %52 = arith.addf %47, %51 : vector<128x64xf32>
    %c0_34 = arith.constant 0 : index
    %c0_35 = arith.constant 0 : index
    %53 = vector.load %arg4[%c0_34, %c0_35] : memref<1x64xf32, #tpu.memory_space<vmem>>, vector<1x64xf32>
    %54 = vector.broadcast %53 : vector<1x64xf32> to vector<128x64xf32>
    %55 = arith.addf %52, %54 : vector<128x64xf32>
    %cst_36 = arith.constant 0.000000e+00 : f32
    %56 = vector.broadcast %cst_36 : f32 to vector<128x64xf32>
    %57 = arith.maximumf %55, %56 : vector<128x64xf32>
    %58 = arith.truncf %57 : vector<128x64xf32> to vector<128x64xbf16>
    %59 = vector.extract_strided_slice %58 {offsets = [0, 0], sizes = [2, 64], strides = [1, 1]} : vector<128x64xbf16> to vector<2x64xbf16>
    %c0_37 = arith.constant 0 : index
    %c0_38 = arith.constant 0 : index
    %c0_39 = arith.constant 0 : index
    %60 = vector.load %arg5[%c0_37, %c0_38, %c0_39] : memref<36x64x32xbf16, #tpu.memory_space<vmem>>, vector<1x64x32xbf16>
    %61 = vector.shape_cast %60 : vector<1x64x32xbf16> to vector<64x32xbf16>
    %cst_40 = arith.constant dense<0.000000e+00> : vector<2x32xf32>
    %62 = tpu.matmul %59, %61, %cst_40 {dimension_numbers = #tpu.dot_dimension_numbers<[1], [0], [0], [1], [0, 0, 1, 1], [], []>} : vector<2x64xbf16>, vector<64x32xbf16>, vector<2x32xf32> -> vector<2x32xf32>
    %63 = vector.extract_strided_slice %58 {offsets = [2, 0], sizes = [2, 64], strides = [1, 1]} : vector<128x64xbf16> to vector<2x64xbf16>
    %c1_41 = arith.constant 1 : index
    %c0_42 = arith.constant 0 : index
    %c0_43 = arith.constant 0 : index
    %64 = vector.load %arg5[%c1_41, %c0_42, %c0_43] : memref<36x64x32xbf16, #tpu.memory_space<vmem>>, vector<1x64x32xbf16>
    %65 = vector.shape_cast %64 : vector<1x64x32xbf16> to vector<64x32xbf16>
    %cst_44 = arith.constant dense<0.000000e+00> : vector<2x32xf32>
    %66 = tpu.matmul %63, %65, %cst_44 {dimension_numbers = #tpu.dot_dimension_numbers<[1], [0], [0], [1], [0, 0, 1, 1], [], []>} : vector<2x64xbf16>, vector<64x32xbf16>, vector<2x32xf32> -> vector<2x32xf32>
    %67 = arith.addf %62, %66 : vector<2x32xf32>
    %68 = vector.extract_strided_slice %58 {offsets = [4, 0], sizes = [2, 64], strides = [1, 1]} : vector<128x64xbf16> to vector<2x64xbf16>
    %c2_45 = arith.constant 2 : index
    %c0_46 = arith.constant 0 : index
    %c0_47 = arith.constant 0 : index
    %69 = vector.load %arg5[%c2_45, %c0_46, %c0_47] : memref<36x64x32xbf16, #tpu.memory_space<vmem>>, vector<1x64x32xbf16>
    %70 = vector.shape_cast %69 : vector<1x64x32xbf16> to vector<64x32xbf16>
    %cst_48 = arith.constant dense<0.000000e+00> : vector<2x32xf32>
    %71 = tpu.matmul %68, %70, %cst_48 {dimension_numbers = #tpu.dot_dimension_numbers<[1], [0], [0], [1], [0, 0, 1, 1], [], []>} : vector<2x64xbf16>, vector<64x32xbf16>, vector<2x32xf32> -> vector<2x32xf32>
    %72 = arith.addf %67, %71 : vector<2x32xf32>
    %73 = vector.extract_strided_slice %58 {offsets = [6, 0], sizes = [2, 64], strides = [1, 1]} : vector<128x64xbf16> to vector<2x64xbf16>
    %c3_49 = arith.constant 3 : index
    %c0_50 = arith.constant 0 : index
    %c0_51 = arith.constant 0 : index
    %74 = vector.load %arg5[%c3_49, %c0_50, %c0_51] : memref<36x64x32xbf16, #tpu.memory_space<vmem>>, vector<1x64x32xbf16>
    %75 = vector.shape_cast %74 : vector<1x64x32xbf16> to vector<64x32xbf16>
    %cst_52 = arith.constant dense<0.000000e+00> : vector<2x32xf32>
    %76 = tpu.matmul %73, %75, %cst_52 {dimension_numbers = #tpu.dot_dimension_numbers<[1], [0], [0], [1], [0, 0, 1, 1], [], []>} : vector<2x64xbf16>, vector<64x32xbf16>, vector<2x32xf32> -> vector<2x32xf32>
    %77 = arith.addf %72, %76 : vector<2x32xf32>
    %78 = vector.extract_strided_slice %58 {offsets = [8, 0], sizes = [2, 64], strides = [1, 1]} : vector<128x64xbf16> to vector<2x64xbf16>
    %c4_53 = arith.constant 4 : index
    %c0_54 = arith.constant 0 : index
    %c0_55 = arith.constant 0 : index
    %79 = vector.load %arg5[%c4_53, %c0_54, %c0_55] : memref<36x64x32xbf16, #tpu.memory_space<vmem>>, vector<1x64x32xbf16>
    %80 = vector.shape_cast %79 : vector<1x64x32xbf16> to vector<64x32xbf16>
    %cst_56 = arith.constant dense<0.000000e+00> : vector<2x32xf32>
    %81 = tpu.matmul %78, %80, %cst_56 {dimension_numbers = #tpu.dot_dimension_numbers<[1], [0], [0], [1], [0, 0, 1, 1], [], []>} : vector<2x64xbf16>, vector<64x32xbf16>, vector<2x32xf32> -> vector<2x32xf32>
    %82 = arith.addf %77, %81 : vector<2x32xf32>
    %83 = vector.extract_strided_slice %58 {offsets = [10, 0], sizes = [2, 64], strides = [1, 1]} : vector<128x64xbf16> to vector<2x64xbf16>
    %c5_57 = arith.constant 5 : index
    %c0_58 = arith.constant 0 : index
    %c0_59 = arith.constant 0 : index
    %84 = vector.load %arg5[%c5_57, %c0_58, %c0_59] : memref<36x64x32xbf16, #tpu.memory_space<vmem>>, vector<1x64x32xbf16>
    %85 = vector.shape_cast %84 : vector<1x64x32xbf16> to vector<64x32xbf16>
    %cst_60 = arith.constant dense<0.000000e+00> : vector<2x32xf32>
    %86 = tpu.matmul %83, %85, %cst_60 {dimension_numbers = #tpu.dot_dimension_numbers<[1], [0], [0], [1], [0, 0, 1, 1], [], []>} : vector<2x64xbf16>, vector<64x32xbf16>, vector<2x32xf32> -> vector<2x32xf32>
    %87 = arith.addf %82, %86 : vector<2x32xf32>
    %88 = vector.extract_strided_slice %58 {offsets = [16, 0], sizes = [2, 64], strides = [1, 1]} : vector<128x64xbf16> to vector<2x64xbf16>
    %c6_61 = arith.constant 6 : index
    %c0_62 = arith.constant 0 : index
    %c0_63 = arith.constant 0 : index
    %89 = vector.load %arg5[%c6_61, %c0_62, %c0_63] : memref<36x64x32xbf16, #tpu.memory_space<vmem>>, vector<1x64x32xbf16>
    %90 = vector.shape_cast %89 : vector<1x64x32xbf16> to vector<64x32xbf16>
    %cst_64 = arith.constant dense<0.000000e+00> : vector<2x32xf32>
    %91 = tpu.matmul %88, %90, %cst_64 {dimension_numbers = #tpu.dot_dimension_numbers<[1], [0], [0], [1], [0, 0, 1, 1], [], []>} : vector<2x64xbf16>, vector<64x32xbf16>, vector<2x32xf32> -> vector<2x32xf32>
    %92 = arith.addf %87, %91 : vector<2x32xf32>
    %93 = vector.extract_strided_slice %58 {offsets = [18, 0], sizes = [2, 64], strides = [1, 1]} : vector<128x64xbf16> to vector<2x64xbf16>
    %c7_65 = arith.constant 7 : index
    %c0_66 = arith.constant 0 : index
    %c0_67 = arith.constant 0 : index
    %94 = vector.load %arg5[%c7_65, %c0_66, %c0_67] : memref<36x64x32xbf16, #tpu.memory_space<vmem>>, vector<1x64x32xbf16>
    %95 = vector.shape_cast %94 : vector<1x64x32xbf16> to vector<64x32xbf16>
    %cst_68 = arith.constant dense<0.000000e+00> : vector<2x32xf32>
    %96 = tpu.matmul %93, %95, %cst_68 {dimension_numbers = #tpu.dot_dimension_numbers<[1], [0], [0], [1], [0, 0, 1, 1], [], []>} : vector<2x64xbf16>, vector<64x32xbf16>, vector<2x32xf32> -> vector<2x32xf32>
    %97 = arith.addf %92, %96 : vector<2x32xf32>
    %98 = vector.extract_strided_slice %58 {offsets = [20, 0], sizes = [2, 64], strides = [1, 1]} : vector<128x64xbf16> to vector<2x64xbf16>
    %c8_69 = arith.constant 8 : index
    %c0_70 = arith.constant 0 : index
    %c0_71 = arith.constant 0 : index
    %99 = vector.load %arg5[%c8_69, %c0_70, %c0_71] : memref<36x64x32xbf16, #tpu.memory_space<vmem>>, vector<1x64x32xbf16>
    %100 = vector.shape_cast %99 : vector<1x64x32xbf16> to vector<64x32xbf16>
    %cst_72 = arith.constant dense<0.000000e+00> : vector<2x32xf32>
    %101 = tpu.matmul %98, %100, %cst_72 {dimension_numbers = #tpu.dot_dimension_numbers<[1], [0], [0], [1], [0, 0, 1, 1], [], []>} : vector<2x64xbf16>, vector<64x32xbf16>, vector<2x32xf32> -> vector<2x32xf32>
    %102 = arith.addf %97, %101 : vector<2x32xf32>
    %103 = vector.extract_strided_slice %58 {offsets = [22, 0], sizes = [2, 64], strides = [1, 1]} : vector<128x64xbf16> to vector<2x64xbf16>
    %c9 = arith.constant 9 : index
    %c0_73 = arith.constant 0 : index
    %c0_74 = arith.constant 0 : index
    %104 = vector.load %arg5[%c9, %c0_73, %c0_74] : memref<36x64x32xbf16, #tpu.memory_space<vmem>>, vector<1x64x32xbf16>
    %105 = vector.shape_cast %104 : vector<1x64x32xbf16> to vector<64x32xbf16>
    %cst_75 = arith.constant dense<0.000000e+00> : vector<2x32xf32>
    %106 = tpu.matmul %103, %105, %cst_75 {dimension_numbers = #tpu.dot_dimension_numbers<[1], [0], [0], [1], [0, 0, 1, 1], [], []>} : vector<2x64xbf16>, vector<64x32xbf16>, vector<2x32xf32> -> vector<2x32xf32>
    %107 = arith.addf %102, %106 : vector<2x32xf32>
    %108 = vector.extract_strided_slice %58 {offsets = [24, 0], sizes = [2, 64], strides = [1, 1]} : vector<128x64xbf16> to vector<2x64xbf16>
    %c10 = arith.constant 10 : index
    %c0_76 = arith.constant 0 : index
    %c0_77 = arith.constant 0 : index
    %109 = vector.load %arg5[%c10, %c0_76, %c0_77] : memref<36x64x32xbf16, #tpu.memory_space<vmem>>, vector<1x64x32xbf16>
    %110 = vector.shape_cast %109 : vector<1x64x32xbf16> to vector<64x32xbf16>
    %cst_78 = arith.constant dense<0.000000e+00> : vector<2x32xf32>
    %111 = tpu.matmul %108, %110, %cst_78 {dimension_numbers = #tpu.dot_dimension_numbers<[1], [0], [0], [1], [0, 0, 1, 1], [], []>} : vector<2x64xbf16>, vector<64x32xbf16>, vector<2x32xf32> -> vector<2x32xf32>
    %112 = arith.addf %107, %111 : vector<2x32xf32>
    %113 = vector.extract_strided_slice %58 {offsets = [26, 0], sizes = [2, 64], strides = [1, 1]} : vector<128x64xbf16> to vector<2x64xbf16>
    %c11 = arith.constant 11 : index
    %c0_79 = arith.constant 0 : index
    %c0_80 = arith.constant 0 : index
    %114 = vector.load %arg5[%c11, %c0_79, %c0_80] : memref<36x64x32xbf16, #tpu.memory_space<vmem>>, vector<1x64x32xbf16>
    %115 = vector.shape_cast %114 : vector<1x64x32xbf16> to vector<64x32xbf16>
    %cst_81 = arith.constant dense<0.000000e+00> : vector<2x32xf32>
    %116 = tpu.matmul %113, %115, %cst_81 {dimension_numbers = #tpu.dot_dimension_numbers<[1], [0], [0], [1], [0, 0, 1, 1], [], []>} : vector<2x64xbf16>, vector<64x32xbf16>, vector<2x32xf32> -> vector<2x32xf32>
    %117 = arith.addf %112, %116 : vector<2x32xf32>
    %118 = vector.extract_strided_slice %58 {offsets = [32, 0], sizes = [2, 64], strides = [1, 1]} : vector<128x64xbf16> to vector<2x64xbf16>
    %c12 = arith.constant 12 : index
    %c0_82 = arith.constant 0 : index
    %c0_83 = arith.constant 0 : index
    %119 = vector.load %arg5[%c12, %c0_82, %c0_83] : memref<36x64x32xbf16, #tpu.memory_space<vmem>>, vector<1x64x32xbf16>
    %120 = vector.shape_cast %119 : vector<1x64x32xbf16> to vector<64x32xbf16>
    %cst_84 = arith.constant dense<0.000000e+00> : vector<2x32xf32>
    %121 = tpu.matmul %118, %120, %cst_84 {dimension_numbers = #tpu.dot_dimension_numbers<[1], [0], [0], [1], [0, 0, 1, 1], [], []>} : vector<2x64xbf16>, vector<64x32xbf16>, vector<2x32xf32> -> vector<2x32xf32>
    %122 = arith.addf %117, %121 : vector<2x32xf32>
    %123 = vector.extract_strided_slice %58 {offsets = [34, 0], sizes = [2, 64], strides = [1, 1]} : vector<128x64xbf16> to vector<2x64xbf16>
    %c13 = arith.constant 13 : index
    %c0_85 = arith.constant 0 : index
    %c0_86 = arith.constant 0 : index
    %124 = vector.load %arg5[%c13, %c0_85, %c0_86] : memref<36x64x32xbf16, #tpu.memory_space<vmem>>, vector<1x64x32xbf16>
    %125 = vector.shape_cast %124 : vector<1x64x32xbf16> to vector<64x32xbf16>
    %cst_87 = arith.constant dense<0.000000e+00> : vector<2x32xf32>
    %126 = tpu.matmul %123, %125, %cst_87 {dimension_numbers = #tpu.dot_dimension_numbers<[1], [0], [0], [1], [0, 0, 1, 1], [], []>} : vector<2x64xbf16>, vector<64x32xbf16>, vector<2x32xf32> -> vector<2x32xf32>
    %127 = arith.addf %122, %126 : vector<2x32xf32>
    %128 = vector.extract_strided_slice %58 {offsets = [36, 0], sizes = [2, 64], strides = [1, 1]} : vector<128x64xbf16> to vector<2x64xbf16>
    %c14 = arith.constant 14 : index
    %c0_88 = arith.constant 0 : index
    %c0_89 = arith.constant 0 : index
    %129 = vector.load %arg5[%c14, %c0_88, %c0_89] : memref<36x64x32xbf16, #tpu.memory_space<vmem>>, vector<1x64x32xbf16>
    %130 = vector.shape_cast %129 : vector<1x64x32xbf16> to vector<64x32xbf16>
    %cst_90 = arith.constant dense<0.000000e+00> : vector<2x32xf32>
    %131 = tpu.matmul %128, %130, %cst_90 {dimension_numbers = #tpu.dot_dimension_numbers<[1], [0], [0], [1], [0, 0, 1, 1], [], []>} : vector<2x64xbf16>, vector<64x32xbf16>, vector<2x32xf32> -> vector<2x32xf32>
    %132 = arith.addf %127, %131 : vector<2x32xf32>
    %133 = vector.extract_strided_slice %58 {offsets = [38, 0], sizes = [2, 64], strides = [1, 1]} : vector<128x64xbf16> to vector<2x64xbf16>
    %c15 = arith.constant 15 : index
    %c0_91 = arith.constant 0 : index
    %c0_92 = arith.constant 0 : index
    %134 = vector.load %arg5[%c15, %c0_91, %c0_92] : memref<36x64x32xbf16, #tpu.memory_space<vmem>>, vector<1x64x32xbf16>
    %135 = vector.shape_cast %134 : vector<1x64x32xbf16> to vector<64x32xbf16>
    %cst_93 = arith.constant dense<0.000000e+00> : vector<2x32xf32>
    %136 = tpu.matmul %133, %135, %cst_93 {dimension_numbers = #tpu.dot_dimension_numbers<[1], [0], [0], [1], [0, 0, 1, 1], [], []>} : vector<2x64xbf16>, vector<64x32xbf16>, vector<2x32xf32> -> vector<2x32xf32>
    %137 = arith.addf %132, %136 : vector<2x32xf32>
    %138 = vector.extract_strided_slice %58 {offsets = [40, 0], sizes = [2, 64], strides = [1, 1]} : vector<128x64xbf16> to vector<2x64xbf16>
    %c16 = arith.constant 16 : index
    %c0_94 = arith.constant 0 : index
    %c0_95 = arith.constant 0 : index
    %139 = vector.load %arg5[%c16, %c0_94, %c0_95] : memref<36x64x32xbf16, #tpu.memory_space<vmem>>, vector<1x64x32xbf16>
    %140 = vector.shape_cast %139 : vector<1x64x32xbf16> to vector<64x32xbf16>
    %cst_96 = arith.constant dense<0.000000e+00> : vector<2x32xf32>
    %141 = tpu.matmul %138, %140, %cst_96 {dimension_numbers = #tpu.dot_dimension_numbers<[1], [0], [0], [1], [0, 0, 1, 1], [], []>} : vector<2x64xbf16>, vector<64x32xbf16>, vector<2x32xf32> -> vector<2x32xf32>
    %142 = arith.addf %137, %141 : vector<2x32xf32>
    %143 = vector.extract_strided_slice %58 {offsets = [42, 0], sizes = [2, 64], strides = [1, 1]} : vector<128x64xbf16> to vector<2x64xbf16>
    %c17 = arith.constant 17 : index
    %c0_97 = arith.constant 0 : index
    %c0_98 = arith.constant 0 : index
    %144 = vector.load %arg5[%c17, %c0_97, %c0_98] : memref<36x64x32xbf16, #tpu.memory_space<vmem>>, vector<1x64x32xbf16>
    %145 = vector.shape_cast %144 : vector<1x64x32xbf16> to vector<64x32xbf16>
    %cst_99 = arith.constant dense<0.000000e+00> : vector<2x32xf32>
    %146 = tpu.matmul %143, %145, %cst_99 {dimension_numbers = #tpu.dot_dimension_numbers<[1], [0], [0], [1], [0, 0, 1, 1], [], []>} : vector<2x64xbf16>, vector<64x32xbf16>, vector<2x32xf32> -> vector<2x32xf32>
    %147 = arith.addf %142, %146 : vector<2x32xf32>
    %148 = vector.extract_strided_slice %58 {offsets = [48, 0], sizes = [2, 64], strides = [1, 1]} : vector<128x64xbf16> to vector<2x64xbf16>
    %c18 = arith.constant 18 : index
    %c0_100 = arith.constant 0 : index
    %c0_101 = arith.constant 0 : index
    %149 = vector.load %arg5[%c18, %c0_100, %c0_101] : memref<36x64x32xbf16, #tpu.memory_space<vmem>>, vector<1x64x32xbf16>
    %150 = vector.shape_cast %149 : vector<1x64x32xbf16> to vector<64x32xbf16>
    %cst_102 = arith.constant dense<0.000000e+00> : vector<2x32xf32>
    %151 = tpu.matmul %148, %150, %cst_102 {dimension_numbers = #tpu.dot_dimension_numbers<[1], [0], [0], [1], [0, 0, 1, 1], [], []>} : vector<2x64xbf16>, vector<64x32xbf16>, vector<2x32xf32> -> vector<2x32xf32>
    %152 = arith.addf %147, %151 : vector<2x32xf32>
    %153 = vector.extract_strided_slice %58 {offsets = [50, 0], sizes = [2, 64], strides = [1, 1]} : vector<128x64xbf16> to vector<2x64xbf16>
    %c19 = arith.constant 19 : index
    %c0_103 = arith.constant 0 : index
    %c0_104 = arith.constant 0 : index
    %154 = vector.load %arg5[%c19, %c0_103, %c0_104] : memref<36x64x32xbf16, #tpu.memory_space<vmem>>, vector<1x64x32xbf16>
    %155 = vector.shape_cast %154 : vector<1x64x32xbf16> to vector<64x32xbf16>
    %cst_105 = arith.constant dense<0.000000e+00> : vector<2x32xf32>
    %156 = tpu.matmul %153, %155, %cst_105 {dimension_numbers = #tpu.dot_dimension_numbers<[1], [0], [0], [1], [0, 0, 1, 1], [], []>} : vector<2x64xbf16>, vector<64x32xbf16>, vector<2x32xf32> -> vector<2x32xf32>
    %157 = arith.addf %152, %156 : vector<2x32xf32>
    %158 = vector.extract_strided_slice %58 {offsets = [52, 0], sizes = [2, 64], strides = [1, 1]} : vector<128x64xbf16> to vector<2x64xbf16>
    %c20 = arith.constant 20 : index
    %c0_106 = arith.constant 0 : index
    %c0_107 = arith.constant 0 : index
    %159 = vector.load %arg5[%c20, %c0_106, %c0_107] : memref<36x64x32xbf16, #tpu.memory_space<vmem>>, vector<1x64x32xbf16>
    %160 = vector.shape_cast %159 : vector<1x64x32xbf16> to vector<64x32xbf16>
    %cst_108 = arith.constant dense<0.000000e+00> : vector<2x32xf32>
    %161 = tpu.matmul %158, %160, %cst_108 {dimension_numbers = #tpu.dot_dimension_numbers<[1], [0], [0], [1], [0, 0, 1, 1], [], []>} : vector<2x64xbf16>, vector<64x32xbf16>, vector<2x32xf32> -> vector<2x32xf32>
    %162 = arith.addf %157, %161 : vector<2x32xf32>
    %163 = vector.extract_strided_slice %58 {offsets = [54, 0], sizes = [2, 64], strides = [1, 1]} : vector<128x64xbf16> to vector<2x64xbf16>
    %c21 = arith.constant 21 : index
    %c0_109 = arith.constant 0 : index
    %c0_110 = arith.constant 0 : index
    %164 = vector.load %arg5[%c21, %c0_109, %c0_110] : memref<36x64x32xbf16, #tpu.memory_space<vmem>>, vector<1x64x32xbf16>
    %165 = vector.shape_cast %164 : vector<1x64x32xbf16> to vector<64x32xbf16>
    %cst_111 = arith.constant dense<0.000000e+00> : vector<2x32xf32>
    %166 = tpu.matmul %163, %165, %cst_111 {dimension_numbers = #tpu.dot_dimension_numbers<[1], [0], [0], [1], [0, 0, 1, 1], [], []>} : vector<2x64xbf16>, vector<64x32xbf16>, vector<2x32xf32> -> vector<2x32xf32>
    %167 = arith.addf %162, %166 : vector<2x32xf32>
    %168 = vector.extract_strided_slice %58 {offsets = [56, 0], sizes = [2, 64], strides = [1, 1]} : vector<128x64xbf16> to vector<2x64xbf16>
    %c22 = arith.constant 22 : index
    %c0_112 = arith.constant 0 : index
    %c0_113 = arith.constant 0 : index
    %169 = vector.load %arg5[%c22, %c0_112, %c0_113] : memref<36x64x32xbf16, #tpu.memory_space<vmem>>, vector<1x64x32xbf16>
    %170 = vector.shape_cast %169 : vector<1x64x32xbf16> to vector<64x32xbf16>
    %cst_114 = arith.constant dense<0.000000e+00> : vector<2x32xf32>
    %171 = tpu.matmul %168, %170, %cst_114 {dimension_numbers = #tpu.dot_dimension_numbers<[1], [0], [0], [1], [0, 0, 1, 1], [], []>} : vector<2x64xbf16>, vector<64x32xbf16>, vector<2x32xf32> -> vector<2x32xf32>
    %172 = arith.addf %167, %171 : vector<2x32xf32>
    %173 = vector.extract_strided_slice %58 {offsets = [58, 0], sizes = [2, 64], strides = [1, 1]} : vector<128x64xbf16> to vector<2x64xbf16>
    %c23 = arith.constant 23 : index
    %c0_115 = arith.constant 0 : index
    %c0_116 = arith.constant 0 : index
    %174 = vector.load %arg5[%c23, %c0_115, %c0_116] : memref<36x64x32xbf16, #tpu.memory_space<vmem>>, vector<1x64x32xbf16>
    %175 = vector.shape_cast %174 : vector<1x64x32xbf16> to vector<64x32xbf16>
    %cst_117 = arith.constant dense<0.000000e+00> : vector<2x32xf32>
    %176 = tpu.matmul %173, %175, %cst_117 {dimension_numbers = #tpu.dot_dimension_numbers<[1], [0], [0], [1], [0, 0, 1, 1], [], []>} : vector<2x64xbf16>, vector<64x32xbf16>, vector<2x32xf32> -> vector<2x32xf32>
    %177 = arith.addf %172, %176 : vector<2x32xf32>
    %178 = vector.extract_strided_slice %58 {offsets = [64, 0], sizes = [2, 64], strides = [1, 1]} : vector<128x64xbf16> to vector<2x64xbf16>
    %c24 = arith.constant 24 : index
    %c0_118 = arith.constant 0 : index
    %c0_119 = arith.constant 0 : index
    %179 = vector.load %arg5[%c24, %c0_118, %c0_119] : memref<36x64x32xbf16, #tpu.memory_space<vmem>>, vector<1x64x32xbf16>
    %180 = vector.shape_cast %179 : vector<1x64x32xbf16> to vector<64x32xbf16>
    %cst_120 = arith.constant dense<0.000000e+00> : vector<2x32xf32>
    %181 = tpu.matmul %178, %180, %cst_120 {dimension_numbers = #tpu.dot_dimension_numbers<[1], [0], [0], [1], [0, 0, 1, 1], [], []>} : vector<2x64xbf16>, vector<64x32xbf16>, vector<2x32xf32> -> vector<2x32xf32>
    %182 = arith.addf %177, %181 : vector<2x32xf32>
    %183 = vector.extract_strided_slice %58 {offsets = [66, 0], sizes = [2, 64], strides = [1, 1]} : vector<128x64xbf16> to vector<2x64xbf16>
    %c25 = arith.constant 25 : index
    %c0_121 = arith.constant 0 : index
    %c0_122 = arith.constant 0 : index
    %184 = vector.load %arg5[%c25, %c0_121, %c0_122] : memref<36x64x32xbf16, #tpu.memory_space<vmem>>, vector<1x64x32xbf16>
    %185 = vector.shape_cast %184 : vector<1x64x32xbf16> to vector<64x32xbf16>
    %cst_123 = arith.constant dense<0.000000e+00> : vector<2x32xf32>
    %186 = tpu.matmul %183, %185, %cst_123 {dimension_numbers = #tpu.dot_dimension_numbers<[1], [0], [0], [1], [0, 0, 1, 1], [], []>} : vector<2x64xbf16>, vector<64x32xbf16>, vector<2x32xf32> -> vector<2x32xf32>
    %187 = arith.addf %182, %186 : vector<2x32xf32>
    %188 = vector.extract_strided_slice %58 {offsets = [68, 0], sizes = [2, 64], strides = [1, 1]} : vector<128x64xbf16> to vector<2x64xbf16>
    %c26 = arith.constant 26 : index
    %c0_124 = arith.constant 0 : index
    %c0_125 = arith.constant 0 : index
    %189 = vector.load %arg5[%c26, %c0_124, %c0_125] : memref<36x64x32xbf16, #tpu.memory_space<vmem>>, vector<1x64x32xbf16>
    %190 = vector.shape_cast %189 : vector<1x64x32xbf16> to vector<64x32xbf16>
    %cst_126 = arith.constant dense<0.000000e+00> : vector<2x32xf32>
    %191 = tpu.matmul %188, %190, %cst_126 {dimension_numbers = #tpu.dot_dimension_numbers<[1], [0], [0], [1], [0, 0, 1, 1], [], []>} : vector<2x64xbf16>, vector<64x32xbf16>, vector<2x32xf32> -> vector<2x32xf32>
    %192 = arith.addf %187, %191 : vector<2x32xf32>
    %193 = vector.extract_strided_slice %58 {offsets = [70, 0], sizes = [2, 64], strides = [1, 1]} : vector<128x64xbf16> to vector<2x64xbf16>
    %c27 = arith.constant 27 : index
    %c0_127 = arith.constant 0 : index
    %c0_128 = arith.constant 0 : index
    %194 = vector.load %arg5[%c27, %c0_127, %c0_128] : memref<36x64x32xbf16, #tpu.memory_space<vmem>>, vector<1x64x32xbf16>
    %195 = vector.shape_cast %194 : vector<1x64x32xbf16> to vector<64x32xbf16>
    %cst_129 = arith.constant dense<0.000000e+00> : vector<2x32xf32>
    %196 = tpu.matmul %193, %195, %cst_129 {dimension_numbers = #tpu.dot_dimension_numbers<[1], [0], [0], [1], [0, 0, 1, 1], [], []>} : vector<2x64xbf16>, vector<64x32xbf16>, vector<2x32xf32> -> vector<2x32xf32>
    %197 = arith.addf %192, %196 : vector<2x32xf32>
    %198 = vector.extract_strided_slice %58 {offsets = [72, 0], sizes = [2, 64], strides = [1, 1]} : vector<128x64xbf16> to vector<2x64xbf16>
    %c28 = arith.constant 28 : index
    %c0_130 = arith.constant 0 : index
    %c0_131 = arith.constant 0 : index
    %199 = vector.load %arg5[%c28, %c0_130, %c0_131] : memref<36x64x32xbf16, #tpu.memory_space<vmem>>, vector<1x64x32xbf16>
    %200 = vector.shape_cast %199 : vector<1x64x32xbf16> to vector<64x32xbf16>
    %cst_132 = arith.constant dense<0.000000e+00> : vector<2x32xf32>
    %201 = tpu.matmul %198, %200, %cst_132 {dimension_numbers = #tpu.dot_dimension_numbers<[1], [0], [0], [1], [0, 0, 1, 1], [], []>} : vector<2x64xbf16>, vector<64x32xbf16>, vector<2x32xf32> -> vector<2x32xf32>
    %202 = arith.addf %197, %201 : vector<2x32xf32>
    %203 = vector.extract_strided_slice %58 {offsets = [74, 0], sizes = [2, 64], strides = [1, 1]} : vector<128x64xbf16> to vector<2x64xbf16>
    %c29 = arith.constant 29 : index
    %c0_133 = arith.constant 0 : index
    %c0_134 = arith.constant 0 : index
    %204 = vector.load %arg5[%c29, %c0_133, %c0_134] : memref<36x64x32xbf16, #tpu.memory_space<vmem>>, vector<1x64x32xbf16>
    %205 = vector.shape_cast %204 : vector<1x64x32xbf16> to vector<64x32xbf16>
    %cst_135 = arith.constant dense<0.000000e+00> : vector<2x32xf32>
    %206 = tpu.matmul %203, %205, %cst_135 {dimension_numbers = #tpu.dot_dimension_numbers<[1], [0], [0], [1], [0, 0, 1, 1], [], []>} : vector<2x64xbf16>, vector<64x32xbf16>, vector<2x32xf32> -> vector<2x32xf32>
    %207 = arith.addf %202, %206 : vector<2x32xf32>
    %208 = vector.extract_strided_slice %58 {offsets = [80, 0], sizes = [2, 64], strides = [1, 1]} : vector<128x64xbf16> to vector<2x64xbf16>
    %c30 = arith.constant 30 : index
    %c0_136 = arith.constant 0 : index
    %c0_137 = arith.constant 0 : index
    %209 = vector.load %arg5[%c30, %c0_136, %c0_137] : memref<36x64x32xbf16, #tpu.memory_space<vmem>>, vector<1x64x32xbf16>
    %210 = vector.shape_cast %209 : vector<1x64x32xbf16> to vector<64x32xbf16>
    %cst_138 = arith.constant dense<0.000000e+00> : vector<2x32xf32>
    %211 = tpu.matmul %208, %210, %cst_138 {dimension_numbers = #tpu.dot_dimension_numbers<[1], [0], [0], [1], [0, 0, 1, 1], [], []>} : vector<2x64xbf16>, vector<64x32xbf16>, vector<2x32xf32> -> vector<2x32xf32>
    %212 = arith.addf %207, %211 : vector<2x32xf32>
    %213 = vector.extract_strided_slice %58 {offsets = [82, 0], sizes = [2, 64], strides = [1, 1]} : vector<128x64xbf16> to vector<2x64xbf16>
    %c31 = arith.constant 31 : index
    %c0_139 = arith.constant 0 : index
    %c0_140 = arith.constant 0 : index
    %214 = vector.load %arg5[%c31, %c0_139, %c0_140] : memref<36x64x32xbf16, #tpu.memory_space<vmem>>, vector<1x64x32xbf16>
    %215 = vector.shape_cast %214 : vector<1x64x32xbf16> to vector<64x32xbf16>
    %cst_141 = arith.constant dense<0.000000e+00> : vector<2x32xf32>
    %216 = tpu.matmul %213, %215, %cst_141 {dimension_numbers = #tpu.dot_dimension_numbers<[1], [0], [0], [1], [0, 0, 1, 1], [], []>} : vector<2x64xbf16>, vector<64x32xbf16>, vector<2x32xf32> -> vector<2x32xf32>
    %217 = arith.addf %212, %216 : vector<2x32xf32>
    %218 = vector.extract_strided_slice %58 {offsets = [84, 0], sizes = [2, 64], strides = [1, 1]} : vector<128x64xbf16> to vector<2x64xbf16>
    %c32 = arith.constant 32 : index
    %c0_142 = arith.constant 0 : index
    %c0_143 = arith.constant 0 : index
    %219 = vector.load %arg5[%c32, %c0_142, %c0_143] : memref<36x64x32xbf16, #tpu.memory_space<vmem>>, vector<1x64x32xbf16>
    %220 = vector.shape_cast %219 : vector<1x64x32xbf16> to vector<64x32xbf16>
    %cst_144 = arith.constant dense<0.000000e+00> : vector<2x32xf32>
    %221 = tpu.matmul %218, %220, %cst_144 {dimension_numbers = #tpu.dot_dimension_numbers<[1], [0], [0], [1], [0, 0, 1, 1], [], []>} : vector<2x64xbf16>, vector<64x32xbf16>, vector<2x32xf32> -> vector<2x32xf32>
    %222 = arith.addf %217, %221 : vector<2x32xf32>
    %223 = vector.extract_strided_slice %58 {offsets = [86, 0], sizes = [2, 64], strides = [1, 1]} : vector<128x64xbf16> to vector<2x64xbf16>
    %c33 = arith.constant 33 : index
    %c0_145 = arith.constant 0 : index
    %c0_146 = arith.constant 0 : index
    %224 = vector.load %arg5[%c33, %c0_145, %c0_146] : memref<36x64x32xbf16, #tpu.memory_space<vmem>>, vector<1x64x32xbf16>
    %225 = vector.shape_cast %224 : vector<1x64x32xbf16> to vector<64x32xbf16>
    %cst_147 = arith.constant dense<0.000000e+00> : vector<2x32xf32>
    %226 = tpu.matmul %223, %225, %cst_147 {dimension_numbers = #tpu.dot_dimension_numbers<[1], [0], [0], [1], [0, 0, 1, 1], [], []>} : vector<2x64xbf16>, vector<64x32xbf16>, vector<2x32xf32> -> vector<2x32xf32>
    %227 = arith.addf %222, %226 : vector<2x32xf32>
    %228 = vector.extract_strided_slice %58 {offsets = [88, 0], sizes = [2, 64], strides = [1, 1]} : vector<128x64xbf16> to vector<2x64xbf16>
    %c34 = arith.constant 34 : index
    %c0_148 = arith.constant 0 : index
    %c0_149 = arith.constant 0 : index
    %229 = vector.load %arg5[%c34, %c0_148, %c0_149] : memref<36x64x32xbf16, #tpu.memory_space<vmem>>, vector<1x64x32xbf16>
    %230 = vector.shape_cast %229 : vector<1x64x32xbf16> to vector<64x32xbf16>
    %cst_150 = arith.constant dense<0.000000e+00> : vector<2x32xf32>
    %231 = tpu.matmul %228, %230, %cst_150 {dimension_numbers = #tpu.dot_dimension_numbers<[1], [0], [0], [1], [0, 0, 1, 1], [], []>} : vector<2x64xbf16>, vector<64x32xbf16>, vector<2x32xf32> -> vector<2x32xf32>
    %232 = arith.addf %227, %231 : vector<2x32xf32>
    %233 = vector.extract_strided_slice %58 {offsets = [90, 0], sizes = [2, 64], strides = [1, 1]} : vector<128x64xbf16> to vector<2x64xbf16>
    %c35 = arith.constant 35 : index
    %c0_151 = arith.constant 0 : index
    %c0_152 = arith.constant 0 : index
    %234 = vector.load %arg5[%c35, %c0_151, %c0_152] : memref<36x64x32xbf16, #tpu.memory_space<vmem>>, vector<1x64x32xbf16>
    %235 = vector.shape_cast %234 : vector<1x64x32xbf16> to vector<64x32xbf16>
    %cst_153 = arith.constant dense<0.000000e+00> : vector<2x32xf32>
    %236 = tpu.matmul %233, %235, %cst_153 {dimension_numbers = #tpu.dot_dimension_numbers<[1], [0], [0], [1], [0, 0, 1, 1], [], []>} : vector<2x64xbf16>, vector<64x32xbf16>, vector<2x32xf32> -> vector<2x32xf32>
    %237 = arith.addf %232, %236 : vector<2x32xf32>
    %c0_154 = arith.constant 0 : index
    %c0_155 = arith.constant 0 : index
    %238 = vector.load %arg6[%c0_154, %c0_155] : memref<1x32xf32, #tpu.memory_space<vmem>>, vector<1x32xf32>
    %239 = vector.broadcast %238 : vector<1x32xf32> to vector<2x32xf32>
    %240 = arith.addf %237, %239 : vector<2x32xf32>
    %cst_156 = arith.constant 0.000000e+00 : f32
    %241 = vector.broadcast %cst_156 : f32 to vector<2x32xf32>
    %242 = arith.maximumf %240, %241 : vector<2x32xf32>
    %243 = arith.truncf %242 : vector<2x32xf32> to vector<2x32xbf16>
    %c0_157 = arith.constant 0 : index
    %c0_158 = arith.constant 0 : index
    %244 = vector.load %arg7[%c0_157, %c0_158] : memref<32x16xbf16, #tpu.memory_space<vmem>>, vector<32x16xbf16>
    %cst_159 = arith.constant dense<0.000000e+00> : vector<2x16xf32>
    %245 = tpu.matmul %243, %244, %cst_159 {dimension_numbers = #tpu.dot_dimension_numbers<[1], [0], [0], [1], [0, 0, 1, 1], [], []>} : vector<2x32xbf16>, vector<32x16xbf16>, vector<2x16xf32> -> vector<2x16xf32>
    %c0_160 = arith.constant 0 : index
    %c0_161 = arith.constant 0 : index
    %246 = vector.load %arg8[%c0_160, %c0_161] : memref<1x16xf32, #tpu.memory_space<vmem>>, vector<1x16xf32>
    %247 = vector.broadcast %246 : vector<1x16xf32> to vector<2x16xf32>
    %248 = arith.addf %245, %247 : vector<2x16xf32>
    %249 = arith.truncf %248 : vector<2x16xf32> to vector<2x16xbf16>
    %c0_162 = arith.constant 0 : index
    %c0_163 = arith.constant 0 : index
    %250 = vector.load %arg9[%c0_162, %c0_163] : memref<16x1xbf16, #tpu.memory_space<vmem>>, vector<16x1xbf16>
    %cst_164 = arith.constant dense<0.000000e+00> : vector<2x1xf32>
    %251 = tpu.matmul %249, %250, %cst_164 {dimension_numbers = #tpu.dot_dimension_numbers<[1], [0], [0], [1], [0, 0, 1, 1], [], []>} : vector<2x16xbf16>, vector<16x1xbf16>, vector<2x1xf32> -> vector<2x1xf32>
    %c0_165 = arith.constant 0 : index
    %c0_166 = arith.constant 0 : index
    %252 = vector.load %arg10[%c0_165, %c0_166] : memref<1x1xf32, #tpu.memory_space<vmem>>, vector<1x1xf32>
    %253 = vector.broadcast %252 : vector<1x1xf32> to vector<2x1xf32>
    %254 = arith.addf %251, %253 : vector<2x1xf32>
    %cst_167 = arith.constant 0.000000e+00 : f32
    %255 = vector.broadcast %cst_167 : f32 to vector<2x1xf32>
    %256 = arith.subf %255, %254 : vector<2x1xf32>
    %257 = math.exp %256 : vector<2x1xf32>
    %cst_168 = arith.constant 1.000000e+00 : f32
    %258 = vector.broadcast %cst_168 : f32 to vector<2x1xf32>
    %259 = arith.addf %258, %257 : vector<2x1xf32>
    %260 = tpu.reciprocal %259 {approx = true} : vector<2x1xf32> -> vector<2x1xf32>
    %cst_169 = arith.constant 0.000000e+00 : f32
    %cst_170 = arith.constant 1.000000e+00 : f32
    %261 = vector.broadcast %cst_169 : f32 to vector<2x1xf32>
    %262 = arith.maximumf %261, %260 : vector<2x1xf32>
    %263 = vector.broadcast %cst_170 : f32 to vector<2x1xf32>
    %264 = arith.minimumf %263, %262 : vector<2x1xf32>
    %c0_171 = arith.constant 0 : index
    %c0_172 = arith.constant 0 : index
    %265 = vector.load %arg11[%c0_171, %c0_172] : memref<2x1xf32, #tpu.memory_space<vmem>>, vector<2x1xf32>
    tpu.vector_store %arg11[%c0_171, %c0_172], %264 {strides = array<i32>} : memref<2x1xf32, #tpu.memory_space<vmem>>, vector<2x1xf32>,
    return
  }
}

</mosaic_0001>

<llo_original>
// kernel: discriminator_forward.1
$region0: #{discriminator_forward.1}
  #allocation0 [shape = 'u32[]', space=smem, size = 0x4, offset = 0x4, fixed_abs, tag = 'smem constant byte address 0x4 - core index']
  #allocation1 [shape = 'u32[144,128]{1,0:T(1,128)}', space=vmem, size = 0x12000, scoped, tag = 'internal scratch']
  #allocation2 [shape = 'f32[1,1]{1,0:T(1,128)S(1)}', space=vmem, size = 0x200, scoped, tag = 'scoped memory for discriminator_forward.1']
  %s0 = inlined_call_operand.vmem [shape: bf16[164,16], index: 0, kind: input, shape index: {}]
  %s1 = inlined_call_operand.vmem [shape: bf16[16,32], index: 1, kind: input, shape index: {}]
  %s2 = inlined_call_operand.vmem [shape: f32[1,32], index: 2, kind: input, shape index: {}]
  %s3 = inlined_call_operand.vmem [shape: bf16[9,32,64], index: 3, kind: input, shape index: {}]
  %s4 = inlined_call_operand.vmem [shape: f32[1,64], index: 4, kind: input, shape index: {}]
  %s5 = inlined_call_operand.vmem [shape: bf16[36,64,32], index: 5, kind: input, shape index: {}]
  %s6 = inlined_call_operand.vmem [shape: f32[1,32], index: 6, kind: input, shape index: {}]
  %s7 = inlined_call_operand.vmem [shape: bf16[32,16], index: 7, kind: input, shape index: {}]
  %s8 = inlined_call_operand.vmem [shape: f32[1,16], index: 8, kind: input, shape index: {}]
  %s9 = inlined_call_operand.vmem [shape: bf16[16,1], index: 9, kind: input, shape index: {}]
  %s10 = inlined_call_operand.<no memory space> [shape: f32[1,1], index: 10, kind: input, shape index: {}]
  %s11 = inlined_call_operand.vmem [shape: f32[2,1], index: 11, kind: output, shape index: {}]
  %s12 = sld [smem:[#allocation0]]
  $region54: #{discriminator_forward.1} parent=0
    _
  %s14 = ssub.s32 1, %s12
  %s15 = scalar_select 0, %s14, %s12
  %v16 = vstv %s10
  %17 = vst [vmem:[#allocation2] sm:$0x1] %v16
  // Predicated region
  $region2: #{discriminator_forward.1} parent=0 // pred_check
    _
  $region3: #{discriminator_forward.1} parent=0 // pred_check_branch
    %19 = sbr.rel (0) target = $region5
  $region4: #{discriminator_forward.1} parent=0 // pred_region
    _
  $region5: #{discriminator_forward.1} parent=0 // pred_fallthru
    _
  // Predicated region
  $region6: #{discriminator_forward.1} parent=0 // pred_check
    _
  $region7: #{discriminator_forward.1} parent=0 // pred_check_branch
    %21 = sbr.rel (0) target = $region9
  $region8: #{discriminator_forward.1} parent=0 // pred_region
    _
  $region9: #{discriminator_forward.1} parent=0 // pred_fallthru
    _
  // Predicated region
  $region10: #{discriminator_forward.1} parent=0 // pred_check
    _
  $region11: #{discriminator_forward.1} parent=0 // pred_check_branch
    %23 = sbr.rel (0) target = $region13
  $region12: #{discriminator_forward.1} parent=0 // pred_region
    _
  $region13: #{discriminator_forward.1} parent=0 // pred_fallthru
    _
  // Predicated region
  $region14: #{discriminator_forward.1} parent=0 // pred_check
    _
  $region15: #{discriminator_forward.1} parent=0 // pred_check_branch
    %25 = sbr.rel (0) target = $region17
  $region16: #{discriminator_forward.1} parent=0 // pred_region
    _
  $region17: #{discriminator_forward.1} parent=0 // pred_fallthru
    _
  // Predicated region
  $region18: #{discriminator_forward.1} parent=0 // pred_check
    _
  $region19: #{discriminator_forward.1} parent=0 // pred_check_branch
    %27 = sbr.rel (0) target = $region21
  $region20: #{discriminator_forward.1} parent=0 // pred_region
    _
  $region21: #{discriminator_forward.1} parent=0 // pred_fallthru
    _
  // Predicated region
  $region22: #{discriminator_forward.1} parent=0 // pred_check
    _
  $region23: #{discriminator_forward.1} parent=0 // pred_check_branch
    %29 = sbr.rel (0) target = $region25
  $region24: #{discriminator_forward.1} parent=0 // pred_region
    _
  $region25: #{discriminator_forward.1} parent=0 // pred_fallthru
    _
  // Predicated region
  $region26: #{discriminator_forward.1} parent=0 // pred_check
    _
  $region27: #{discriminator_forward.1} parent=0 // pred_check_branch
    %31 = sbr.rel (0) target = $region29
  $region28: #{discriminator_forward.1} parent=0 // pred_region
    _
  $region29: #{discriminator_forward.1} parent=0 // pred_fallthru
    _
  // Predicated region
  $region30: #{discriminator_forward.1} parent=0 // pred_check
    _
  $region31: #{discriminator_forward.1} parent=0 // pred_check_branch
    %33 = sbr.rel (0) target = $region33
  $region32: #{discriminator_forward.1} parent=0 // pred_region
    _
  $region33: #{discriminator_forward.1} parent=0 // pred_fallthru
    _
  // Predicated region
  $region34: #{discriminator_forward.1} parent=0 // pred_check
    _
  $region35: #{discriminator_forward.1} parent=0 // pred_check_branch
    %35 = sbr.rel (0) target = $region37
  $region36: #{discriminator_forward.1} parent=0 // pred_region
    _
  $region37: #{discriminator_forward.1} parent=0 // pred_fallthru
    _
  // Predicated region
  $region38: #{discriminator_forward.1} parent=0 // pred_check
    _
  $region39: #{discriminator_forward.1} parent=0 // pred_check_branch
    %37 = sbr.rel (0) target = $region41
  $region40: #{discriminator_forward.1} parent=0 // pred_region
    _
  $region41: #{discriminator_forward.1} parent=0 // pred_fallthru
    _
  // Predicated region
  $region42: #{discriminator_forward.1} parent=0 // pred_check
    _
  $region43: #{discriminator_forward.1} parent=0 // pred_check_branch
    %39 = sbr.rel (0) target = $region45
  $region44: #{discriminator_forward.1} parent=0 // pred_region
    _
  $region45: #{discriminator_forward.1} parent=0 // pred_fallthru
    _
  %v41 = vld [vmem:[%s0] sm:$0xf]
  %v42 = vld [vmem:[%s0 + $0x4] sm:$0xf]
  %v43 = vld [vmem:[%s0 + $0x8] sm:$0xf]
  %v44 = vld [vmem:[%s0 + $0xc] sm:$0xf]
  %v45 = vld [vmem:[%s0 + $0x10] sm:$0xf]
  %v46 = vld [vmem:[%s0 + $0x14] sm:$0xf]
  %v47 = vld [vmem:[%s0 + $0x18] sm:$0xf]
  %v48 = vld [vmem:[%s0 + $0x1c] sm:$0xf]
  %v49 = vld [vmem:[%s0 + $0x20] sm:$0xf]
  %v50 = vld [vmem:[%s0 + $0x24] sm:$0xf]
  %v51 = vld [vmem:[%s0 + $0x28] sm:$0xf]
  %v52 = vld [vmem:[%s0 + $0x2c] sm:$0xf]
  %v53 = vld [vmem:[%s0 + $0x30] sm:$0xf]
  %v54 = vld [vmem:[%s0 + $0x34] sm:$0xf]
  %v55 = vld [vmem:[%s0 + $0x38] sm:$0xf]
  %v56 = vld [vmem:[%s0 + $0x3c] sm:$0xf]
  %v57 = vld [vmem:[%s0 + $0x40] sm:$0xf]
  %v58 = vld [vmem:[%s0 + $0x44] sm:$0xf]
  %v59 = vld [vmem:[%s0 + $0x48] sm:$0xf]
  %v60 = vld [vmem:[%s0 + $0x4c] sm:$0xf]
  %v61 = vld [vmem:[%s0 + $0x50] sm:$0x3]
  %v62 = vld [vmem:[%s1] sm:$0xf]
  %v63 = vld [vmem:[%s1 + $0x4] sm:$0xf]
  %v64 = vld [vmem:[%s2] sm:$0x1]
  %v66 = vlaneseq
  %v67 = vshrl.u32 %v66, 7
  %v68 = vsub.s32 0, %v67
  %v69 = vrot.slane %v64, %v68
  %v92 = vunpack.c.l.b16 %v41
  %v93 = vunpack.c.l.b16 %v42
  %v94 = vunpack.c.l.b16 %v43
  %v95 = vunpack.c.l.b16 %v44
  %v96 = vunpack.c.l.b16 %v45
  %v97 = vunpack.c.l.b16 %v46
  %v98 = vunpack.c.l.b16 %v47
  %v99 = vunpack.c.l.b16 %v48
  %v100 = vunpack.c.l.b16 %v49
  %v101 = vunpack.c.l.b16 %v50
  %v102 = vunpack.c.l.b16 %v51
  %v103 = vunpack.c.l.b16 %v52
  %v104 = vunpack.c.l.b16 %v53
  %v105 = vunpack.c.l.b16 %v54
  %v106 = vunpack.c.l.b16 %v55
  %v107 = vunpack.c.l.b16 %v56
  %v108 = vunpack.c.l.b16 %v57
  %v109 = vunpack.c.l.b16 %v58
  %v110 = vunpack.c.l.b16 %v59
  %v111 = vunpack.c.l.b16 %v60
  %v112 = vunpack.c.l.b16 %v61
  %v113 = vpack.c.b16 %v93, %v92
  %v114 = vpack.c.b16 %v95, %v94
  %v115 = vpack.c.b16 %v97, %v96
  %v116 = vpack.c.b16 %v99, %v98
  %v117 = vpack.c.b16 %v101, %v100
  %v118 = vpack.c.b16 %v103, %v102
  %v119 = vpack.c.b16 %v105, %v104
  %v120 = vpack.c.b16 %v107, %v106
  %v121 = vpack.c.b16 %v109, %v108
  %v122 = vpack.c.b16 %v111, %v110
  %v123 = vpack.c.b16 %v112, %v112
  %v126 = vunpack.c.l.b16 %v62
  %v127 = vunpack.c.l.b16 %v63
  %v128 = vpack.c.b16 %v127, %v126
  %vm130 = vcmask 130048
  %v132 = vsel %vm130, %v113, 0
  %v135 = vsel %vm130, %v114, 0
  %v138 = vsel %vm130, %v115, 0
  %v141 = vsel %vm130, %v116, 0
  %v144 = vsel %vm130, %v117, 0
  %v147 = vsel %vm130, %v118, 0
  %v150 = vsel %vm130, %v119, 0
  %v153 = vsel %vm130, %v120, 0
  %v156 = vsel %vm130, %v121, 0
  %v159 = vsel %vm130, %v122, 0
  %v162 = vsel %vm130, %v123, 0
  %164 = vmatprep.subr.bf16.mxu0 0
  %165 = vmatpush1.bf16.msra.mxu0 %v128
  %166 = vmatprep.subr.bf16.mxu0 0
  %167 = vmatpush1.bf16.msra.mxu0 0
  %168 = vmatprep.subr.bf16.mxu0 0
  %169 = vmatpush1.bf16.msra.mxu0 0
  %170 = vmatprep.subr.bf16.mxu0 0
  %171 = vmatpush1.bf16.msra.mxu0 0
  %172 = vmatprep.subr.bf16.mxu0 0
  %173 = vmatpush1.bf16.msra.mxu0 0
  %174 = vmatprep.subr.bf16.mxu0 0
  %175 = vmatpush1.bf16.msra.mxu0 0
  %176 = vmatprep.subr.bf16.mxu0 0
  %177 = vmatpush1.bf16.msra.mxu0 0
  %178 = vmatprep.subr.bf16.mxu0 0
  %179 = vmatpush1.bf16.msra.mxu0 0
  %180 = vmatprep.subr.bf16.mxu0 0
  %181 = vmatpush1.bf16.msra.mxu0 0
  %182 = vmatprep.subr.bf16.mxu0 0
  %183 = vmatpush1.bf16.msra.mxu0 0
  %184 = vmatprep.subr.bf16.mxu0 0
  %185 = vmatpush1.bf16.msra.mxu0 0
  %186 = vmatprep.subr.bf16.mxu0 0
  %187 = vmatpush1.bf16.msra.mxu0 0
  %188 = vmatprep.subr.bf16.mxu0 0
  %189 = vmatpush1.bf16.msra.mxu0 0
  %190 = vmatprep.subr.bf16.mxu0 0
  %191 = vmatpush1.bf16.msra.mxu0 0
  %192 = vmatprep.subr.bf16.mxu0 0
  %193 = vmatpush1.bf16.msra.mxu0 0
  %194 = vmatprep.subr.bf16.mxu0 0
  %195 = vmatpush1.bf16.msra.mxu0 0
  %196 = vmatprep.mubr.bf16.mxu0 0
  %197 = vmatmul.mubr.bf16.gmra.mrb[0].mxu0 %v132
  %v198 = vpop.f32.mrb[0].mxu0
  %v199 = vadd.f32 %v69, %v198
  %v200 = vpop.f32.mrb[0].mxu0
  %v201 = vpop.f32.mrb[0].mxu0
  %v202 = vadd.f32 %v69, %v201
  %v203 = vpop.f32.mrb[0].mxu0
  %204 = vmatprep.mubr.bf16.mxu0 0
  %205 = vmatmul.mubr.bf16.gmra.mrb[0].mxu0 %v135
  %v206 = vpop.f32.mrb[0].mxu0
  %v207 = vadd.f32 %v69, %v206
  %v208 = vpop.f32.mrb[0].mxu0
  %v209 = vpop.f32.mrb[0].mxu0
  %v210 = vadd.f32 %v69, %v209
  %v211 = vpop.f32.mrb[0].mxu0
  %212 = vmatprep.mubr.bf16.mxu0 0
  %213 = vmatmul.mubr.bf16.gmra.mrb[0].mxu0 %v138
  %v214 = vpop.f32.mrb[0].mxu0
  %v215 = vadd.f32 %v69, %v214
  %v216 = vpop.f32.mrb[0].mxu0
  %v217 = vpop.f32.mrb[0].mxu0
  %v218 = vadd.f32 %v69, %v217
  %v219 = vpop.f32.mrb[0].mxu0
  %220 = vmatprep.mubr.bf16.mxu0 0
  %221 = vmatmul.mubr.bf16.gmra.mrb[0].mxu0 %v141
  %v222 = vpop.f32.mrb[0].mxu0
  %v223 = vadd.f32 %v69, %v222
  %v224 = vpop.f32.mrb[0].mxu0
  %v225 = vpop.f32.mrb[0].mxu0
  %v226 = vadd.f32 %v69, %v225
  %v227 = vpop.f32.mrb[0].mxu0
  %228 = vmatprep.mubr.bf16.mxu0 0
  %229 = vmatmul.mubr.bf16.gmra.mrb[0].mxu0 %v144
  %v230 = vpop.f32.mrb[0].mxu0
  %v231 = vadd.f32 %v69, %v230
  %v232 = vpop.f32.mrb[0].mxu0
  %v233 = vpop.f32.mrb[0].mxu0
  %v234 = vadd.f32 %v69, %v233
  %v235 = vpop.f32.mrb[0].mxu0
  %236 = vmatprep.mubr.bf16.mxu0 0
  %237 = vmatmul.mubr.bf16.gmra.mrb[0].mxu0 %v147
  %v238 = vpop.f32.mrb[0].mxu0
  %v239 = vadd.f32 %v69, %v238
  %v240 = vpop.f32.mrb[0].mxu0
  %v241 = vpop.f32.mrb[0].mxu0
  %v242 = vadd.f32 %v69, %v241
  %v243 = vpop.f32.mrb[0].mxu0
  %244 = vmatprep.mubr.bf16.mxu0 0
  %245 = vmatmul.mubr.bf16.gmra.mrb[0].mxu0 %v150
  %v246 = vpop.f32.mrb[0].mxu0
  %v247 = vadd.f32 %v69, %v246
  %v248 = vpop.f32.mrb[0].mxu0
  %v249 = vpop.f32.mrb[0].mxu0
  %v250 = vadd.f32 %v69, %v249
  %v251 = vpop.f32.mrb[0].mxu0
  %252 = vmatprep.mubr.bf16.mxu0 0
  %253 = vmatmul.mubr.bf16.gmra.mrb[0].mxu0 %v153
  %v254 = vpop.f32.mrb[0].mxu0
  %v255 = vadd.f32 %v69, %v254
  %v256 = vpop.f32.mrb[0].mxu0
  %v257 = vpop.f32.mrb[0].mxu0
  %v258 = vadd.f32 %v69, %v257
  %v259 = vpop.f32.mrb[0].mxu0
  %260 = vmatprep.mubr.bf16.mxu0 0
  %261 = vmatmul.mubr.bf16.gmra.mrb[0].mxu0 %v156
  %v262 = vpop.f32.mrb[0].mxu0
  %v263 = vadd.f32 %v69, %v262
  %v264 = vpop.f32.mrb[0].mxu0
  %v265 = vpop.f32.mrb[0].mxu0
  %v266 = vadd.f32 %v69, %v265
  %v267 = vpop.f32.mrb[0].mxu0
  %268 = vmatprep.mubr.bf16.mxu0 0
  %269 = vmatmul.mubr.bf16.gmra.mrb[0].mxu0 %v159
  %v270 = vpop.f32.mrb[0].mxu0
  %v271 = vadd.f32 %v69, %v270
  %v272 = vpop.f32.mrb[0].mxu0
  %v273 = vpop.f32.mrb[0].mxu0
  %v274 = vadd.f32 %v69, %v273
  %v275 = vpop.f32.mrb[0].mxu0
  %276 = vmatprep.mubr.bf16.mxu0 0
  %277 = vmatmul.mubr.bf16.gmra.mrb[0].mxu0 %v162
  %v278 = vpop.f32.mrb[0].mxu0
  %v279 = vadd.f32 %v69, %v278
  %v280 = vpop.f32.mrb[0].mxu0
  %v281 = vpop.f32.mrb[0].mxu0
  %v282 = vpop.f32.mrb[0].mxu0
  %283 = vdwg.mxu0
  %v284 = vmax.f32 %v199, 0.0
  %v285 = vmax.f32 %v202, 0.0
  %v286 = vmax.f32 %v207, 0.0
  %v287 = vmax.f32 %v210, 0.0
  %v288 = vmax.f32 %v215, 0.0
  %v289 = vmax.f32 %v218, 0.0
  %v290 = vmax.f32 %v223, 0.0
  %v291 = vmax.f32 %v226, 0.0
  %v292 = vmax.f32 %v231, 0.0
  %v293 = vmax.f32 %v234, 0.0
  %v294 = vmax.f32 %v239, 0.0
  %v295 = vmax.f32 %v242, 0.0
  %v296 = vmax.f32 %v247, 0.0
  %v297 = vmax.f32 %v250, 0.0
  %v298 = vmax.f32 %v255, 0.0
  %v299 = vmax.f32 %v258, 0.0
  %v300 = vmax.f32 %v263, 0.0
  %v301 = vmax.f32 %v266, 0.0
  %v302 = vmax.f32 %v271, 0.0
  %v303 = vmax.f32 %v274, 0.0
  %v304 = vmax.f32 %v279, 0.0
  %v305 = vpack.c.bf16 %v285, %v284
  %v306 = vpack.c.bf16 %v287, %v286
  %v307 = vpack.c.bf16 %v289, %v288
  %v308 = vpack.c.bf16 %v291, %v290
  %v309 = vpack.c.bf16 %v293, %v292
  %v310 = vpack.c.bf16 %v295, %v294
  %v311 = vpack.c.bf16 %v297, %v296
  %v312 = vpack.c.bf16 %v299, %v298
  %v313 = vpack.c.bf16 %v301, %v300
  %v314 = vpack.c.bf16 %v303, %v302
  %v315 = vpack.c.bf16 %v304, %v304
  %v316 = vld [vmem:[%s3] sm:$0xf]
  %v317 = vld [vmem:[%s3 + $0x4] sm:$0xf]
  %v318 = vld [vmem:[%s3 + $0x8] sm:$0xf]
  %v319 = vld [vmem:[%s3 + $0xc] sm:$0xf]
  %s320 = scalar_lea.vmem %s3, 16
  %v321 = vld [vmem:[%s320] sm:$0xf]
  %v322 = vld [vmem:[%s320 + $0x4] sm:$0xf]
  %v323 = vld [vmem:[%s320 + $0x8] sm:$0xf]
  %v324 = vld [vmem:[%s320 + $0xc] sm:$0xf]
  %vm334 = vcmask 1046528
  %v335 = vrot.slane %v305, 1
  %v336 = vrot.slane %v306, 1
  %v337 = vsel %vm334, %v335, %v336
  %v338 = vrot.slane %v307, 1
  %v339 = vsel %vm334, %v336, %v338
  %v340 = vrot.slane %v308, 1
  %v341 = vsel %vm334, %v338, %v340
  %v342 = vrot.slane %v309, 1
  %v343 = vsel %vm334, %v340, %v342
  %v344 = vrot.slane %v310, 1
  %v345 = vsel %vm334, %v342, %v344
  %v346 = vrot.slane %v311, 1
  %v347 = vsel %vm334, %v344, %v346
  %v348 = vrot.slane %v312, 1
  %v349 = vsel %vm334, %v346, %v348
  %v350 = vrot.slane %v313, 1
  %v351 = vsel %vm334, %v348, %v350
  %v356 = vunpack.c.l.b16 %v321
  %v357 = vunpack.c.l.b16 %v322
  %v358 = vunpack.c.l.b16 %v323
  %v359 = vunpack.c.l.b16 %v324
  %v360 = vpack.c.b16 %v357, %v356
  %v361 = vpack.c.b16 %v359, %v358
  %vm364 = vcmask 261120
  %v366 = vsel %vm364, %v337, 0
  %v369 = vsel %vm364, %v339, 0
  %v372 = vsel %vm364, %v341, 0
  %v375 = vsel %vm364, %v343, 0
  %v378 = vsel %vm364, %v345, 0
  %v381 = vsel %vm364, %v347, 0
  %v384 = vsel %vm364, %v349, 0
  %v387 = vsel %vm364, %v351, 0
  %389 = vmatprep.subr.bf16.mxu0 0
  %390 = vmatpush1.bf16.msra.mxu0 %v360
  %391 = vmatprep.subr.bf16.mxu0 0
  %392 = vmatpush1.bf16.msra.mxu0 %v361
  %393 = vmatprep.subr.bf16.mxu0 0
  %394 = vmatpush1.bf16.msra.mxu0 0
  %395 = vmatprep.subr.bf16.mxu0 0
  %396 = vmatpush1.bf16.msra.mxu0 0
  %397 = vmatprep.subr.bf16.mxu0 0
  %398 = vmatpush1.bf16.msra.mxu0 0
  %399 = vmatprep.subr.bf16.mxu0 0
  %400 = vmatpush1.bf16.msra.mxu0 0
  %401 = vmatprep.subr.bf16.mxu0 0
  %402 = vmatpush1.bf16.msra.mxu0 0
  %403 = vmatprep.subr.bf16.mxu0 0
  %404 = vmatpush1.bf16.msra.mxu0 0
  %405 = vmatprep.subr.bf16.mxu0 0
  %406 = vmatpush1.bf16.msra.mxu0 0
  %407 = vmatprep.subr.bf16.mxu0 0
  %408 = vmatpush1.bf16.msra.mxu0 0
  %409 = vmatprep.subr.bf16.mxu0 0
  %410 = vmatpush1.bf16.msra.mxu0 0
  %411 = vmatprep.subr.bf16.mxu0 0
  %412 = vmatpush1.bf16.msra.mxu0 0
  %413 = vmatprep.subr.bf16.mxu0 0
  %414 = vmatpush1.bf16.msra.mxu0 0
  %415 = vmatprep.subr.bf16.mxu0 0
  %416 = vmatpush1.bf16.msra.mxu0 0
  %417 = vmatprep.subr.bf16.mxu0 0
  %418 = vmatpush1.bf16.msra.mxu0 0
  %419 = vmatprep.subr.bf16.mxu0 0
  %420 = vmatpush1.bf16.msra.mxu0 0
  %421 = vmatprep.mubr.bf16.mxu0 0
  %422 = vmatmul.mubr.bf16.gmra.mrb[0].mxu0 %v366
  %v423 = vpop.f32.mrb[0].mxu0
  %v424 = vadd.f32 0.0, %v423
  %v425 = vpop.f32.mrb[0].mxu0
  %v426 = vpop.f32.mrb[0].mxu0
  %v427 = vadd.f32 0.0, %v426
  %v428 = vpop.f32.mrb[0].mxu0
  %429 = vmatprep.mubr.bf16.mxu0 0
  %430 = vmatmul.mubr.bf16.gmra.mrb[0].mxu0 %v369
  %v431 = vpop.f32.mrb[0].mxu0
  %v432 = vadd.f32 0.0, %v431
  %v433 = vpop.f32.mrb[0].mxu0
  %v434 = vpop.f32.mrb[0].mxu0
  %v435 = vadd.f32 0.0, %v434
  %v436 = vpop.f32.mrb[0].mxu0
  %437 = vmatprep.mubr.bf16.mxu0 0
  %438 = vmatmul.mubr.bf16.gmra.mrb[0].mxu0 %v372
  %v439 = vpop.f32.mrb[0].mxu0
  %v440 = vadd.f32 0.0, %v439
  %v441 = vpop.f32.mrb[0].mxu0
  %v442 = vpop.f32.mrb[0].mxu0
  %v443 = vadd.f32 0.0, %v442
  %v444 = vpop.f32.mrb[0].mxu0
  %445 = vmatprep.mubr.bf16.mxu0 0
  %446 = vmatmul.mubr.bf16.gmra.mrb[0].mxu0 %v375
  %v447 = vpop.f32.mrb[0].mxu0
  %v448 = vadd.f32 0.0, %v447
  %v449 = vpop.f32.mrb[0].mxu0
  %v450 = vpop.f32.mrb[0].mxu0
  %v451 = vadd.f32 0.0, %v450
  %v452 = vpop.f32.mrb[0].mxu0
  %453 = vmatprep.mubr.bf16.mxu0 0
  %454 = vmatmul.mubr.bf16.gmra.mrb[0].mxu0 %v378
  %v455 = vpop.f32.mrb[0].mxu0
  %v456 = vadd.f32 0.0, %v455
  %v457 = vpop.f32.mrb[0].mxu0
  %v458 = vpop.f32.mrb[0].mxu0
  %v459 = vadd.f32 0.0, %v458
  %v460 = vpop.f32.mrb[0].mxu0
  %461 = vmatprep.mubr.bf16.mxu0 0
  %462 = vmatmul.mubr.bf16.gmra.mrb[0].mxu0 %v381
  %v463 = vpop.f32.mrb[0].mxu0
  %v464 = vadd.f32 0.0, %v463
  %v465 = vpop.f32.mrb[0].mxu0
  %v466 = vpop.f32.mrb[0].mxu0
  %v467 = vadd.f32 0.0, %v466
  %v468 = vpop.f32.mrb[0].mxu0
  %469 = vmatprep.mubr.bf16.mxu0 0
  %470 = vmatmul.mubr.bf16.gmra.mrb[0].mxu0 %v384
  %v471 = vpop.f32.mrb[0].mxu0
  %v472 = vpop.f32.mrb[0].mxu0
  %v473 = vpop.f32.mrb[0].mxu0
  %v474 = vpop.f32.mrb[0].mxu0
  %475 = vmatprep.mubr.bf16.mxu0 0
  %476 = vmatmul.mubr.bf16.gmra.mrb[0].mxu0 %v387
  %v477 = vpop.f32.mrb[0].mxu0
  %v478 = vpop.f32.mrb[0].mxu0
  %v479 = vpop.f32.mrb[0].mxu0
  %v480 = vpop.f32.mrb[0].mxu0
  %481 = vdwg.mxu0
  %v486 = vunpack.c.l.b16 %v316
  %v487 = vunpack.c.l.b16 %v317
  %v488 = vunpack.c.l.b16 %v318
  %v489 = vunpack.c.l.b16 %v319
  %v490 = vpack.c.b16 %v487, %v486
  %v491 = vpack.c.b16 %v489, %v488
  %v495 = vsel %vm364, %v305, 0
  %v498 = vsel %vm364, %v306, 0
  %v501 = vsel %vm364, %v307, 0
  %v504 = vsel %vm364, %v308, 0
  %v507 = vsel %vm364, %v309, 0
  %v510 = vsel %vm364, %v310, 0
  %v513 = vsel %vm364, %v311, 0
  %v516 = vsel %vm364, %v312, 0
  %518 = vmatprep.subr.bf16.mxu0 0
  %519 = vmatpush1.bf16.msra.mxu0 %v490
  %520 = vmatprep.subr.bf16.mxu0 0
  %521 = vmatpush1.bf16.msra.mxu0 %v491
  %522 = vmatprep.subr.bf16.mxu0 0
  %523 = vmatpush1.bf16.msra.mxu0 0
  %524 = vmatprep.subr.bf16.mxu0 0
  %525 = vmatpush1.bf16.msra.mxu0 0
  %526 = vmatprep.subr.bf16.mxu0 0
  %527 = vmatpush1.bf16.msra.mxu0 0
  %528 = vmatprep.subr.bf16.mxu0 0
  %529 = vmatpush1.bf16.msra.mxu0 0
  %530 = vmatprep.subr.bf16.mxu0 0
  %531 = vmatpush1.bf16.msra.mxu0 0
  %532 = vmatprep.subr.bf16.mxu0 0
  %533 = vmatpush1.bf16.msra.mxu0 0
  %534 = vmatprep.subr.bf16.mxu0 0
  %535 = vmatpush1.bf16.msra.mxu0 0
  %536 = vmatprep.subr.bf16.mxu0 0
  %537 = vmatpush1.bf16.msra.mxu0 0
  %538 = vmatprep.subr.bf16.mxu0 0
  %539 = vmatpush1.bf16.msra.mxu0 0
  %540 = vmatprep.subr.bf16.mxu0 0
  %541 = vmatpush1.bf16.msra.mxu0 0
  %542 = vmatprep.subr.bf16.mxu0 0
  %543 = vmatpush1.bf16.msra.mxu0 0
  %544 = vmatprep.subr.bf16.mxu0 0
  %545 = vmatpush1.bf16.msra.mxu0 0
  %546 = vmatprep.subr.bf16.mxu0 0
  %547 = vmatpush1.bf16.msra.mxu0 0
  %548 = vmatprep.subr.bf16.mxu0 0
  %549 = vmatpush1.bf16.msra.mxu0 0
  %550 = vmatprep.mubr.bf16.mxu0 0
  %551 = vmatmul.mubr.bf16.gmra.mrb[0].mxu0 %v495
  %v552 = vpop.f32.mrb[0].mxu0
  %v553 = vadd.f32 %v424, %v552
  %v554 = vpop.f32.mrb[0].mxu0
  %v555 = vpop.f32.mrb[0].mxu0
  %v556 = vadd.f32 %v427, %v555
  %v557 = vpop.f32.mrb[0].mxu0
  %558 = vmatprep.mubr.bf16.mxu0 0
  %559 = vmatmul.mubr.bf16.gmra.mrb[0].mxu0 %v498
  %v560 = vpop.f32.mrb[0].mxu0
  %v561 = vadd.f32 %v432, %v560
  %v562 = vpop.f32.mrb[0].mxu0
  %v563 = vpop.f32.mrb[0].mxu0
  %v564 = vadd.f32 %v435, %v563
  %v565 = vpop.f32.mrb[0].mxu0
  %566 = vmatprep.mubr.bf16.mxu0 0
  %567 = vmatmul.mubr.bf16.gmra.mrb[0].mxu0 %v501
  %v568 = vpop.f32.mrb[0].mxu0
  %v569 = vadd.f32 %v440, %v568
  %v570 = vpop.f32.mrb[0].mxu0
  %v571 = vpop.f32.mrb[0].mxu0
  %v572 = vadd.f32 %v443, %v571
  %v573 = vpop.f32.mrb[0].mxu0
  %574 = vmatprep.mubr.bf16.mxu0 0
  %575 = vmatmul.mubr.bf16.gmra.mrb[0].mxu0 %v504
  %v576 = vpop.f32.mrb[0].mxu0
  %v577 = vadd.f32 %v448, %v576
  %v578 = vpop.f32.mrb[0].mxu0
  %v579 = vpop.f32.mrb[0].mxu0
  %v580 = vadd.f32 %v451, %v579
  %v581 = vpop.f32.mrb[0].mxu0
  %582 = vmatprep.mubr.bf16.mxu0 0
  %583 = vmatmul.mubr.bf16.gmra.mrb[0].mxu0 %v507
  %v584 = vpop.f32.mrb[0].mxu0
  %v585 = vadd.f32 %v456, %v584
  %v586 = vpop.f32.mrb[0].mxu0
  %v587 = vpop.f32.mrb[0].mxu0
  %v588 = vadd.f32 %v459, %v587
  %v589 = vpop.f32.mrb[0].mxu0
  %590 = vmatprep.mubr.bf16.mxu0 0
  %591 = vmatmul.mubr.bf16.gmra.mrb[0].mxu0 %v510
  %v592 = vpop.f32.mrb[0].mxu0
  %v593 = vadd.f32 %v464, %v592
  %v594 = vpop.f32.mrb[0].mxu0
  %v595 = vpop.f32.mrb[0].mxu0
  %v596 = vadd.f32 %v467, %v595
  %v597 = vpop.f32.mrb[0].mxu0
  %598 = vmatprep.mubr.bf16.mxu0 0
  %599 = vmatmul.mubr.bf16.gmra.mrb[0].mxu0 %v513
  %v600 = vpop.f32.mrb[0].mxu0
  %v601 = vpop.f32.mrb[0].mxu0
  %v602 = vpop.f32.mrb[0].mxu0
  %v603 = vpop.f32.mrb[0].mxu0
  %604 = vmatprep.mubr.bf16.mxu0 0
  %605 = vmatmul.mubr.bf16.gmra.mrb[0].mxu0 %v516
  %v606 = vpop.f32.mrb[0].mxu0
  %v607 = vpop.f32.mrb[0].mxu0
  %v608 = vpop.f32.mrb[0].mxu0
  %v609 = vpop.f32.mrb[0].mxu0
  %610 = vdwg.mxu0
  %s611 = scalar_lea.vmem %s3, 32
  %v612 = vld [vmem:[%s611] sm:$0xf]
  %v613 = vld [vmem:[%s611 + $0x4] sm:$0xf]
  %v614 = vld [vmem:[%s611 + $0x8] sm:$0xf]
  %v615 = vld [vmem:[%s611 + $0xc] sm:$0xf]
  %vm616 = vcmask 1045504
  %v617 = vrot.slane %v305, 2
  %v618 = vrot.slane %v306, 2
  %v619 = vsel %vm616, %v617, %v618
  %v620 = vrot.slane %v307, 2
  %v621 = vsel %vm616, %v618, %v620
  %v622 = vrot.slane %v308, 2
  %v623 = vsel %vm616, %v620, %v622
  %v624 = vrot.slane %v309, 2
  %v625 = vsel %vm616, %v622, %v624
  %v626 = vrot.slane %v310, 2
  %v627 = vsel %vm616, %v624, %v626
  %v628 = vrot.slane %v311, 2
  %v629 = vsel %vm616, %v626, %v628
  %v630 = vrot.slane %v312, 2
  %v631 = vsel %vm616, %v628, %v630
  %v632 = vrot.slane %v313, 2
  %v633 = vsel %vm616, %v630, %v632
  %v638 = vunpack.c.l.b16 %v612
  %v639 = vunpack.c.l.b16 %v613
  %v640 = vunpack.c.l.b16 %v614
  %v641 = vunpack.c.l.b16 %v615
  %v642 = vpack.c.b16 %v639, %v638
  %v643 = vpack.c.b16 %v641, %v640
  %v647 = vsel %vm364, %v619, 0
  %v650 = vsel %vm364, %v621, 0
  %v653 = vsel %vm364, %v623, 0
  %v656 = vsel %vm364, %v625, 0
  %v659 = vsel %vm364, %v627, 0
  %v662 = vsel %vm364, %v629, 0
  %v665 = vsel %vm364, %v631, 0
  %v668 = vsel %vm364, %v633, 0
  %670 = vmatprep.subr.bf16.mxu0 0
  %671 = vmatpush1.bf16.msra.mxu0 %v642
  %672 = vmatprep.subr.bf16.mxu0 0
  %673 = vmatpush1.bf16.msra.mxu0 %v643
  %674 = vmatprep.subr.bf16.mxu0 0
  %675 = vmatpush1.bf16.msra.mxu0 0
  %676 = vmatprep.subr.bf16.mxu0 0
  %677 = vmatpush1.bf16.msra.mxu0 0
  %678 = vmatprep.subr.bf16.mxu0 0
  %679 = vmatpush1.bf16.msra.mxu0 0
  %680 = vmatprep.subr.bf16.mxu0 0
  %681 = vmatpush1.bf16.msra.mxu0 0
  %682 = vmatprep.subr.bf16.mxu0 0
  %683 = vmatpush1.bf16.msra.mxu0 0
  %684 = vmatprep.subr.bf16.mxu0 0
  %685 = vmatpush1.bf16.msra.mxu0 0
  %686 = vmatprep.subr.bf16.mxu0 0
  %687 = vmatpush1.bf16.msra.mxu0 0
  %688 = vmatprep.subr.bf16.mxu0 0
  %689 = vmatpush1.bf16.msra.mxu0 0
  %690 = vmatprep.subr.bf16.mxu0 0
  %691 = vmatpush1.bf16.msra.mxu0 0
  %692 = vmatprep.subr.bf16.mxu0 0
  %693 = vmatpush1.bf16.msra.mxu0 0
  %694 = vmatprep.subr.bf16.mxu0 0
  %695 = vmatpush1.bf16.msra.mxu0 0
  %696 = vmatprep.subr.bf16.mxu0 0
  %697 = vmatpush1.bf16.msra.mxu0 0
  %698 = vmatprep.subr.bf16.mxu0 0
  %699 = vmatpush1.bf16.msra.mxu0 0
  %700 = vmatprep.subr.bf16.mxu0 0
  %701 = vmatpush1.bf16.msra.mxu0 0
  %702 = vmatprep.mubr.bf16.mxu0 0
  %703 = vmatmul.mubr.bf16.gmra.mrb[0].mxu0 %v647
  %v704 = vpop.f32.mrb[0].mxu0
  %v705 = vadd.f32 0.0, %v704
  %v706 = vpop.f32.mrb[0].mxu0
  %v707 = vpop.f32.mrb[0].mxu0
  %v708 = vadd.f32 0.0, %v707
  %v709 = vpop.f32.mrb[0].mxu0
  %710 = vmatprep.mubr.bf16.mxu0 0
  %711 = vmatmul.mubr.bf16.gmra.mrb[0].mxu0 %v650
  %v712 = vpop.f32.mrb[0].mxu0
  %v713 = vadd.f32 0.0, %v712
  %v714 = vpop.f32.mrb[0].mxu0
  %v715 = vpop.f32.mrb[0].mxu0
  %v716 = vadd.f32 0.0, %v715
  %v717 = vpop.f32.mrb[0].mxu0
  %718 = vmatprep.mubr.bf16.mxu0 0
  %719 = vmatmul.mubr.bf16.gmra.mrb[0].mxu0 %v653
  %v720 = vpop.f32.mrb[0].mxu0
  %v721 = vadd.f32 0.0, %v720
  %v722 = vpop.f32.mrb[0].mxu0
  %v723 = vpop.f32.mrb[0].mxu0
  %v724 = vadd.f32 0.0, %v723
  %v725 = vpop.f32.mrb[0].mxu0
  %726 = vmatprep.mubr.bf16.mxu0 0
  %727 = vmatmul.mubr.bf16.gmra.mrb[0].mxu0 %v656
  %v728 = vpop.f32.mrb[0].mxu0
  %v729 = vadd.f32 0.0, %v728
  %v730 = vpop.f32.mrb[0].mxu0
  %v731 = vpop.f32.mrb[0].mxu0
  %v732 = vadd.f32 0.0, %v731
  %v733 = vpop.f32.mrb[0].mxu0
  %734 = vmatprep.mubr.bf16.mxu0 0
  %735 = vmatmul.mubr.bf16.gmra.mrb[0].mxu0 %v659
  %v736 = vpop.f32.mrb[0].mxu0
  %v737 = vadd.f32 0.0, %v736
  %v738 = vpop.f32.mrb[0].mxu0
  %v739 = vpop.f32.mrb[0].mxu0
  %v740 = vadd.f32 0.0, %v739
  %v741 = vpop.f32.mrb[0].mxu0
  %742 = vmatprep.mubr.bf16.mxu0 0
  %743 = vmatmul.mubr.bf16.gmra.mrb[0].mxu0 %v662
  %v744 = vpop.f32.mrb[0].mxu0
  %v745 = vadd.f32 0.0, %v744
  %v746 = vpop.f32.mrb[0].mxu0
  %v747 = vpop.f32.mrb[0].mxu0
  %v748 = vadd.f32 0.0, %v747
  %v749 = vpop.f32.mrb[0].mxu0
  %750 = vmatprep.mubr.bf16.mxu0 0
  %751 = vmatmul.mubr.bf16.gmra.mrb[0].mxu0 %v665
  %v752 = vpop.f32.mrb[0].mxu0
  %v753 = vpop.f32.mrb[0].mxu0
  %v754 = vpop.f32.mrb[0].mxu0
  %v755 = vpop.f32.mrb[0].mxu0
  %756 = vmatprep.mubr.bf16.mxu0 0
  %757 = vmatmul.mubr.bf16.gmra.mrb[0].mxu0 %v668
  %v758 = vpop.f32.mrb[0].mxu0
  %v759 = vpop.f32.mrb[0].mxu0
  %v760 = vpop.f32.mrb[0].mxu0
  %v761 = vpop.f32.mrb[0].mxu0
  %762 = vdwg.mxu0
  %v763 = vadd.f32 %v553, %v705
  %v764 = vadd.f32 %v556, %v708
  %v765 = vadd.f32 %v561, %v713
  %v766 = vadd.f32 %v564, %v716
  %v767 = vadd.f32 %v569, %v721
  %v768 = vadd.f32 %v572, %v724
  %v769 = vadd.f32 %v577, %v729
  %v770 = vadd.f32 %v580, %v732
  %v771 = vadd.f32 %v585, %v737
  %v772 = vadd.f32 %v588, %v740
  %v773 = vadd.f32 %v593, %v745
  %v774 = vadd.f32 %v596, %v748
  %s775 = scalar_lea.vmem %s3, 48
  %v776 = vld [vmem:[%s775] sm:$0xf]
  %v777 = vld [vmem:[%s775 + $0x4] sm:$0xf]
  %v778 = vld [vmem:[%s775 + $0x8] sm:$0xf]
  %v779 = vld [vmem:[%s775 + $0xc] sm:$0xf]
  %v784 = vunpack.c.l.b16 %v776
  %v785 = vunpack.c.l.b16 %v777
  %v786 = vunpack.c.l.b16 %v778
  %v787 = vunpack.c.l.b16 %v779
  %v788 = vpack.c.b16 %v785, %v784
  %v789 = vpack.c.b16 %v787, %v786
  %v793 = vsel %vm364, %v313, 0
  %795 = vmatprep.subr.bf16.mxu0 0
  %796 = vmatpush1.bf16.msra.mxu0 %v788
  %797 = vmatprep.subr.bf16.mxu0 0
  %798 = vmatpush1.bf16.msra.mxu0 %v789
  %799 = vmatprep.subr.bf16.mxu0 0
  %800 = vmatpush1.bf16.msra.mxu0 0
  %801 = vmatprep.subr.bf16.mxu0 0
  %802 = vmatpush1.bf16.msra.mxu0 0
  %803 = vmatprep.subr.bf16.mxu0 0
  %804 = vmatpush1.bf16.msra.mxu0 0
  %805 = vmatprep.subr.bf16.mxu0 0
  %806 = vmatpush1.bf16.msra.mxu0 0
  %807 = vmatprep.subr.bf16.mxu0 0
  %808 = vmatpush1.bf16.msra.mxu0 0
  %809 = vmatprep.subr.bf16.mxu0 0
  %810 = vmatpush1.bf16.msra.mxu0 0
  %811 = vmatprep.subr.bf16.mxu0 0
  %812 = vmatpush1.bf16.msra.mxu0 0
  %813 = vmatprep.subr.bf16.mxu0 0
  %814 = vmatpush1.bf16.msra.mxu0 0
  %815 = vmatprep.subr.bf16.mxu0 0
  %816 = vmatpush1.bf16.msra.mxu0 0
  %817 = vmatprep.subr.bf16.mxu0 0
  %818 = vmatpush1.bf16.msra.mxu0 0
  %819 = vmatprep.subr.bf16.mxu0 0
  %820 = vmatpush1.bf16.msra.mxu0 0
  %821 = vmatprep.subr.bf16.mxu0 0
  %822 = vmatpush1.bf16.msra.mxu0 0
  %823 = vmatprep.subr.bf16.mxu0 0
  %824 = vmatpush1.bf16.msra.mxu0 0
  %825 = vmatprep.subr.bf16.mxu0 0
  %826 = vmatpush1.bf16.msra.mxu0 0
  %827 = vmatprep.mubr.bf16.mxu0 0
  %828 = vmatmul.mubr.bf16.gmra.mrb[0].mxu0 %v498
  %v829 = vpop.f32.mrb[0].mxu0
  %v830 = vadd.f32 0.0, %v829
  %v831 = vpop.f32.mrb[0].mxu0
  %v832 = vpop.f32.mrb[0].mxu0
  %v833 = vadd.f32 0.0, %v832
  %v834 = vpop.f32.mrb[0].mxu0
  %835 = vmatprep.mubr.bf16.mxu0 0
  %836 = vmatmul.mubr.bf16.gmra.mrb[0].mxu0 %v501
  %v837 = vpop.f32.mrb[0].mxu0
  %v838 = vadd.f32 0.0, %v837
  %v839 = vpop.f32.mrb[0].mxu0
  %v840 = vpop.f32.mrb[0].mxu0
  %v841 = vadd.f32 0.0, %v840
  %v842 = vpop.f32.mrb[0].mxu0
  %843 = vmatprep.mubr.bf16.mxu0 0
  %844 = vmatmul.mubr.bf16.gmra.mrb[0].mxu0 %v504
  %v845 = vpop.f32.mrb[0].mxu0
  %v846 = vadd.f32 0.0, %v845
  %v847 = vpop.f32.mrb[0].mxu0
  %v848 = vpop.f32.mrb[0].mxu0
  %v849 = vadd.f32 0.0, %v848
  %v850 = vpop.f32.mrb[0].mxu0
  %851 = vmatprep.mubr.bf16.mxu0 0
  %852 = vmatmul.mubr.bf16.gmra.mrb[0].mxu0 %v507
  %v853 = vpop.f32.mrb[0].mxu0
  %v854 = vadd.f32 0.0, %v853
  %v855 = vpop.f32.mrb[0].mxu0
  %v856 = vpop.f32.mrb[0].mxu0
  %v857 = vadd.f32 0.0, %v856
  %v858 = vpop.f32.mrb[0].mxu0
  %859 = vmatprep.mubr.bf16.mxu0 0
  %860 = vmatmul.mubr.bf16.gmra.mrb[0].mxu0 %v510
  %v861 = vpop.f32.mrb[0].mxu0
  %v862 = vadd.f32 0.0, %v861
  %v863 = vpop.f32.mrb[0].mxu0
  %v864 = vpop.f32.mrb[0].mxu0
  %v865 = vadd.f32 0.0, %v864
  %v866 = vpop.f32.mrb[0].mxu0
  %867 = vmatprep.mubr.bf16.mxu0 0
  %868 = vmatmul.mubr.bf16.gmra.mrb[0].mxu0 %v513
  %v869 = vpop.f32.mrb[0].mxu0
  %v870 = vadd.f32 0.0, %v869
  %v871 = vpop.f32.mrb[0].mxu0
  %v872 = vpop.f32.mrb[0].mxu0
  %v873 = vadd.f32 0.0, %v872
  %v874 = vpop.f32.mrb[0].mxu0
  %875 = vmatprep.mubr.bf16.mxu0 0
  %876 = vmatmul.mubr.bf16.gmra.mrb[0].mxu0 %v516
  %v877 = vpop.f32.mrb[0].mxu0
  %v878 = vpop.f32.mrb[0].mxu0
  %v879 = vpop.f32.mrb[0].mxu0
  %v880 = vpop.f32.mrb[0].mxu0
  %881 = vmatprep.mubr.bf16.mxu0 0
  %882 = vmatmul.mubr.bf16.gmra.mrb[0].mxu0 %v793
  %v883 = vpop.f32.mrb[0].mxu0
  %v884 = vpop.f32.mrb[0].mxu0
  %v885 = vpop.f32.mrb[0].mxu0
  %v886 = vpop.f32.mrb[0].mxu0
  %887 = vdwg.mxu0
  %v888 = vadd.f32 %v763, %v830
  %v889 = vadd.f32 %v764, %v833
  %v890 = vadd.f32 %v765, %v838
  %v891 = vadd.f32 %v766, %v841
  %v892 = vadd.f32 %v767, %v846
  %v893 = vadd.f32 %v768, %v849
  %v894 = vadd.f32 %v769, %v854
  %v895 = vadd.f32 %v770, %v857
  %v896 = vadd.f32 %v771, %v862
  %v897 = vadd.f32 %v772, %v865
  %v898 = vadd.f32 %v773, %v870
  %v899 = vadd.f32 %v774, %v873
  %s900 = scalar_lea.vmem %s3, 64
  %v901 = vld [vmem:[%s900] sm:$0xf]
  %v902 = vld [vmem:[%s900 + $0x4] sm:$0xf]
  %v903 = vld [vmem:[%s900 + $0x8] sm:$0xf]
  %v904 = vld [vmem:[%s900 + $0xc] sm:$0xf]
  %v906 = vrot.slane %v314, 1
  %v907 = vsel %vm334, %v350, %v906
  %v912 = vunpack.c.l.b16 %v901
  %v913 = vunpack.c.l.b16 %v902
  %v914 = vunpack.c.l.b16 %v903
  %v915 = vunpack.c.l.b16 %v904
  %v916 = vpack.c.b16 %v913, %v912
  %v917 = vpack.c.b16 %v915, %v914
  %v921 = vsel %vm364, %v907, 0
  %923 = vmatprep.subr.bf16.mxu0 0
  %924 = vmatpush1.bf16.msra.mxu0 %v916
  %925 = vmatprep.subr.bf16.mxu0 0
  %926 = vmatpush1.bf16.msra.mxu0 %v917
  %927 = vmatprep.subr.bf16.mxu0 0
  %928 = vmatpush1.bf16.msra.mxu0 0
  %929 = vmatprep.subr.bf16.mxu0 0
  %930 = vmatpush1.bf16.msra.mxu0 0
  %931 = vmatprep.subr.bf16.mxu0 0
  %932 = vmatpush1.bf16.msra.mxu0 0
  %933 = vmatprep.subr.bf16.mxu0 0
  %934 = vmatpush1.bf16.msra.mxu0 0
  %935 = vmatprep.subr.bf16.mxu0 0
  %936 = vmatpush1.bf16.msra.mxu0 0
  %937 = vmatprep.subr.bf16.mxu0 0
  %938 = vmatpush1.bf16.msra.mxu0 0
  %939 = vmatprep.subr.bf16.mxu0 0
  %940 = vmatpush1.bf16.msra.mxu0 0
  %941 = vmatprep.subr.bf16.mxu0 0
  %942 = vmatpush1.bf16.msra.mxu0 0
  %943 = vmatprep.subr.bf16.mxu0 0
  %944 = vmatpush1.bf16.msra.mxu0 0
  %945 = vmatprep.subr.bf16.mxu0 0
  %946 = vmatpush1.bf16.msra.mxu0 0
  %947 = vmatprep.subr.bf16.mxu0 0
  %948 = vmatpush1.bf16.msra.mxu0 0
  %949 = vmatprep.subr.bf16.mxu0 0
  %950 = vmatpush1.bf16.msra.mxu0 0
  %951 = vmatprep.subr.bf16.mxu0 0
  %952 = vmatpush1.bf16.msra.mxu0 0
  %953 = vmatprep.subr.bf16.mxu0 0
  %954 = vmatpush1.bf16.msra.mxu0 0
  %955 = vmatprep.mubr.bf16.mxu0 0
  %956 = vmatmul.mubr.bf16.gmra.mrb[0].mxu0 %v369
  %v957 = vpop.f32.mrb[0].mxu0
  %v958 = vadd.f32 0.0, %v957
  %v959 = vpop.f32.mrb[0].mxu0
  %v960 = vpop.f32.mrb[0].mxu0
  %v961 = vadd.f32 0.0, %v960
  %v962 = vpop.f32.mrb[0].mxu0
  %963 = vmatprep.mubr.bf16.mxu0 0
  %964 = vmatmul.mubr.bf16.gmra.mrb[0].mxu0 %v372
  %v965 = vpop.f32.mrb[0].mxu0
  %v966 = vadd.f32 0.0, %v965
  %v967 = vpop.f32.mrb[0].mxu0
  %v968 = vpop.f32.mrb[0].mxu0
  %v969 = vadd.f32 0.0, %v968
  %v970 = vpop.f32.mrb[0].mxu0
  %971 = vmatprep.mubr.bf16.mxu0 0
  %972 = vmatmul.mubr.bf16.gmra.mrb[0].mxu0 %v375
  %v973 = vpop.f32.mrb[0].mxu0
  %v974 = vadd.f32 0.0, %v973
  %v975 = vpop.f32.mrb[0].mxu0
  %v976 = vpop.f32.mrb[0].mxu0
  %v977 = vadd.f32 0.0, %v976
  %v978 = vpop.f32.mrb[0].mxu0
  %979 = vmatprep.mubr.bf16.mxu0 0
  %980 = vmatmul.mubr.bf16.gmra.mrb[0].mxu0 %v378
  %v981 = vpop.f32.mrb[0].mxu0
  %v982 = vadd.f32 0.0, %v981
  %v983 = vpop.f32.mrb[0].mxu0
  %v984 = vpop.f32.mrb[0].mxu0
  %v985 = vadd.f32 0.0, %v984
  %v986 = vpop.f32.mrb[0].mxu0
  %987 = vmatprep.mubr.bf16.mxu0 0
  %988 = vmatmul.mubr.bf16.gmra.mrb[0].mxu0 %v381
  %v989 = vpop.f32.mrb[0].mxu0
  %v990 = vadd.f32 0.0, %v989
  %v991 = vpop.f32.mrb[0].mxu0
  %v992 = vpop.f32.mrb[0].mxu0
  %v993 = vadd.f32 0.0, %v992
  %v994 = vpop.f32.mrb[0].mxu0
  %995 = vmatprep.mubr.bf16.mxu0 0
  %996 = vmatmul.mubr.bf16.gmra.mrb[0].mxu0 %v384
  %v997 = vpop.f32.mrb[0].mxu0
  %v998 = vadd.f32 0.0, %v997
  %v999 = vpop.f32.mrb[0].mxu0
  %v1000 = vpop.f32.mrb[0].mxu0
  %v1001 = vadd.f32 0.0, %v1000
  %v1002 = vpop.f32.mrb[0].mxu0
  %1003 = vmatprep.mubr.bf16.mxu0 0
  %1004 = vmatmul.mubr.bf16.gmra.mrb[0].mxu0 %v387
  %v1005 = vpop.f32.mrb[0].mxu0
  %v1006 = vpop.f32.mrb[0].mxu0
  %v1007 = vpop.f32.mrb[0].mxu0
  %v1008 = vpop.f32.mrb[0].mxu0
  %1009 = vmatprep.mubr.bf16.mxu0 0
  %1010 = vmatmul.mubr.bf16.gmra.mrb[0].mxu0 %v921
  %v1011 = vpop.f32.mrb[0].mxu0
  %v1012 = vpop.f32.mrb[0].mxu0
  %v1013 = vpop.f32.mrb[0].mxu0
  %v1014 = vpop.f32.mrb[0].mxu0
  %1015 = vdwg.mxu0
  %v1016 = vadd.f32 %v888, %v958
  %v1017 = vadd.f32 %v889, %v961
  %v1018 = vadd.f32 %v890, %v966
  %v1019 = vadd.f32 %v891, %v969
  %v1020 = vadd.f32 %v892, %v974
  %v1021 = vadd.f32 %v893, %v977
  %v1022 = vadd.f32 %v894, %v982
  %v1023 = vadd.f32 %v895, %v985
  %v1024 = vadd.f32 %v896, %v990
  %v1025 = vadd.f32 %v897, %v993
  %v1026 = vadd.f32 %v898, %v998
  %v1027 = vadd.f32 %v899, %v1001
  %s1028 = scalar_lea.vmem %s3, 80
  %v1029 = vld [vmem:[%s1028] sm:$0xf]
  %v1030 = vld [vmem:[%s1028 + $0x4] sm:$0xf]
  %v1031 = vld [vmem:[%s1028 + $0x8] sm:$0xf]
  %v1032 = vld [vmem:[%s1028 + $0xc] sm:$0xf]
  %v1033 = vrot.slane %v314, 2
  %v1034 = vsel %vm616, %v632, %v1033
  %v1039 = vunpack.c.l.b16 %v1029
  %v1040 = vunpack.c.l.b16 %v1030
  %v1041 = vunpack.c.l.b16 %v1031
  %v1042 = vunpack.c.l.b16 %v1032
  %v1043 = vpack.c.b16 %v1040, %v1039
  %v1044 = vpack.c.b16 %v1042, %v1041
  %v1048 = vsel %vm364, %v1034, 0
  %1050 = vmatprep.subr.bf16.mxu0 0
  %1051 = vmatpush1.bf16.msra.mxu0 %v1043
  %1052 = vmatprep.subr.bf16.mxu0 0
  %1053 = vmatpush1.bf16.msra.mxu0 %v1044
  %1054 = vmatprep.subr.bf16.mxu0 0
  %1055 = vmatpush1.bf16.msra.mxu0 0
  %1056 = vmatprep.subr.bf16.mxu0 0
  %1057 = vmatpush1.bf16.msra.mxu0 0
  %1058 = vmatprep.subr.bf16.mxu0 0
  %1059 = vmatpush1.bf16.msra.mxu0 0
  %1060 = vmatprep.subr.bf16.mxu0 0
  %1061 = vmatpush1.bf16.msra.mxu0 0
  %1062 = vmatprep.subr.bf16.mxu0 0
  %1063 = vmatpush1.bf16.msra.mxu0 0
  %1064 = vmatprep.subr.bf16.mxu0 0
  %1065 = vmatpush1.bf16.msra.mxu0 0
  %1066 = vmatprep.subr.bf16.mxu0 0
  %1067 = vmatpush1.bf16.msra.mxu0 0
  %1068 = vmatprep.subr.bf16.mxu0 0
  %1069 = vmatpush1.bf16.msra.mxu0 0
  %1070 = vmatprep.subr.bf16.mxu0 0
  %1071 = vmatpush1.bf16.msra.mxu0 0
  %1072 = vmatprep.subr.bf16.mxu0 0
  %1073 = vmatpush1.bf16.msra.mxu0 0
  %1074 = vmatprep.subr.bf16.mxu0 0
  %1075 = vmatpush1.bf16.msra.mxu0 0
  %1076 = vmatprep.subr.bf16.mxu0 0
  %1077 = vmatpush1.bf16.msra.mxu0 0
  %1078 = vmatprep.subr.bf16.mxu0 0
  %1079 = vmatpush1.bf16.msra.mxu0 0
  %1080 = vmatprep.subr.bf16.mxu0 0
  %1081 = vmatpush1.bf16.msra.mxu0 0
  %1082 = vmatprep.mubr.bf16.mxu0 0
  %1083 = vmatmul.mubr.bf16.gmra.mrb[0].mxu0 %v650
  %v1084 = vpop.f32.mrb[0].mxu0
  %v1085 = vadd.f32 0.0, %v1084
  %v1086 = vpop.f32.mrb[0].mxu0
  %v1087 = vpop.f32.mrb[0].mxu0
  %v1088 = vadd.f32 0.0, %v1087
  %v1089 = vpop.f32.mrb[0].mxu0
  %1090 = vmatprep.mubr.bf16.mxu0 0
  %1091 = vmatmul.mubr.bf16.gmra.mrb[0].mxu0 %v653
  %v1092 = vpop.f32.mrb[0].mxu0
  %v1093 = vadd.f32 0.0, %v1092
  %v1094 = vpop.f32.mrb[0].mxu0
  %v1095 = vpop.f32.mrb[0].mxu0
  %v1096 = vadd.f32 0.0, %v1095
  %v1097 = vpop.f32.mrb[0].mxu0
  %1098 = vmatprep.mubr.bf16.mxu0 0
  %1099 = vmatmul.mubr.bf16.gmra.mrb[0].mxu0 %v656
  %v1100 = vpop.f32.mrb[0].mxu0
  %v1101 = vadd.f32 0.0, %v1100
  %v1102 = vpop.f32.mrb[0].mxu0
  %v1103 = vpop.f32.mrb[0].mxu0
  %v1104 = vadd.f32 0.0, %v1103
  %v1105 = vpop.f32.mrb[0].mxu0
  %1106 = vmatprep.mubr.bf16.mxu0 0
  %1107 = vmatmul.mubr.bf16.gmra.mrb[0].mxu0 %v659
  %v1108 = vpop.f32.mrb[0].mxu0
  %v1109 = vadd.f32 0.0, %v1108
  %v1110 = vpop.f32.mrb[0].mxu0
  %v1111 = vpop.f32.mrb[0].mxu0
  %v1112 = vadd.f32 0.0, %v1111
  %v1113 = vpop.f32.mrb[0].mxu0
  %1114 = vmatprep.mubr.bf16.mxu0 0
  %1115 = vmatmul.mubr.bf16.gmra.mrb[0].mxu0 %v662
  %v1116 = vpop.f32.mrb[0].mxu0
  %v1117 = vadd.f32 0.0, %v1116
  %v1118 = vpop.f32.mrb[0].mxu0
  %v1119 = vpop.f32.mrb[0].mxu0
  %v1120 = vadd.f32 0.0, %v1119
  %v1121 = vpop.f32.mrb[0].mxu0
  %1122 = vmatprep.mubr.bf16.mxu0 0
  %1123 = vmatmul.mubr.bf16.gmra.mrb[0].mxu0 %v665
  %v1124 = vpop.f32.mrb[0].mxu0
  %v1125 = vadd.f32 0.0, %v1124
  %v1126 = vpop.f32.mrb[0].mxu0
  %v1127 = vpop.f32.mrb[0].mxu0
  %v1128 = vadd.f32 0.0, %v1127
  %v1129 = vpop.f32.mrb[0].mxu0
  %1130 = vmatprep.mubr.bf16.mxu0 0
  %1131 = vmatmul.mubr.bf16.gmra.mrb[0].mxu0 %v668
  %v1132 = vpop.f32.mrb[0].mxu0
  %v1133 = vpop.f32.mrb[0].mxu0
  %v1134 = vpop.f32.mrb[0].mxu0
  %v1135 = vpop.f32.mrb[0].mxu0
  %1136 = vmatprep.mubr.bf16.mxu0 0
  %1137 = vmatmul.mubr.bf16.gmra.mrb[0].mxu0 %v1048
  %v1138 = vpop.f32.mrb[0].mxu0
  %v1139 = vpop.f32.mrb[0].mxu0
  %v1140 = vpop.f32.mrb[0].mxu0
  %v1141 = vpop.f32.mrb[0].mxu0
  %1142 = vdwg.mxu0
  %v1143 = vadd.f32 %v1016, %v1085
  %v1144 = vadd.f32 %v1017, %v1088
  %v1145 = vadd.f32 %v1018, %v1093
  %v1146 = vadd.f32 %v1019, %v1096
  %v1147 = vadd.f32 %v1020, %v1101
  %v1148 = vadd.f32 %v1021, %v1104
  %v1149 = vadd.f32 %v1022, %v1109
  %v1150 = vadd.f32 %v1023, %v1112
  %v1151 = vadd.f32 %v1024, %v1117
  %v1152 = vadd.f32 %v1025, %v1120
  %v1153 = vadd.f32 %v1026, %v1125
  %v1154 = vadd.f32 %v1027, %v1128
  %s1155 = scalar_lea.vmem %s3, 96
  %v1156 = vld [vmem:[%s1155] sm:$0xf]
  %v1157 = vld [vmem:[%s1155 + $0x4] sm:$0xf]
  %v1158 = vld [vmem:[%s1155 + $0x8] sm:$0xf]
  %v1159 = vld [vmem:[%s1155 + $0xc] sm:$0xf]
  %v1164 = vunpack.c.l.b16 %v1156
  %v1165 = vunpack.c.l.b16 %v1157
  %v1166 = vunpack.c.l.b16 %v1158
  %v1167 = vunpack.c.l.b16 %v1159
  %v1168 = vpack.c.b16 %v1165, %v1164
  %v1169 = vpack.c.b16 %v1167, %v1166
  %v1173 = vsel %vm364, %v314, 0
  %1175 = vmatprep.subr.bf16.mxu0 0
  %1176 = vmatpush1.bf16.msra.mxu0 %v1168
  %1177 = vmatprep.subr.bf16.mxu0 0
  %1178 = vmatpush1.bf16.msra.mxu0 %v1169
  %1179 = vmatprep.subr.bf16.mxu0 0
  %1180 = vmatpush1.bf16.msra.mxu0 0
  %1181 = vmatprep.subr.bf16.mxu0 0
  %1182 = vmatpush1.bf16.msra.mxu0 0
  %1183 = vmatprep.subr.bf16.mxu0 0
  %1184 = vmatpush1.bf16.msra.mxu0 0
  %1185 = vmatprep.subr.bf16.mxu0 0
  %1186 = vmatpush1.bf16.msra.mxu0 0
  %1187 = vmatprep.subr.bf16.mxu0 0
  %1188 = vmatpush1.bf16.msra.mxu0 0
  %1189 = vmatprep.subr.bf16.mxu0 0
  %1190 = vmatpush1.bf16.msra.mxu0 0
  %1191 = vmatprep.subr.bf16.mxu0 0
  %1192 = vmatpush1.bf16.msra.mxu0 0
  %1193 = vmatprep.subr.bf16.mxu0 0
  %1194 = vmatpush1.bf16.msra.mxu0 0
  %1195 = vmatprep.subr.bf16.mxu0 0
  %1196 = vmatpush1.bf16.msra.mxu0 0
  %1197 = vmatprep.subr.bf16.mxu0 0
  %1198 = vmatpush1.bf16.msra.mxu0 0
  %1199 = vmatprep.subr.bf16.mxu0 0
  %1200 = vmatpush1.bf16.msra.mxu0 0
  %1201 = vmatprep.subr.bf16.mxu0 0
  %1202 = vmatpush1.bf16.msra.mxu0 0
  %1203 = vmatprep.subr.bf16.mxu0 0
  %1204 = vmatpush1.bf16.msra.mxu0 0
  %1205 = vmatprep.subr.bf16.mxu0 0
  %1206 = vmatpush1.bf16.msra.mxu0 0
  %1207 = vmatprep.mubr.bf16.mxu0 0
  %1208 = vmatmul.mubr.bf16.gmra.mrb[0].mxu0 %v501
  %v1209 = vpop.f32.mrb[0].mxu0
  %v1210 = vadd.f32 0.0, %v1209
  %v1211 = vpop.f32.mrb[0].mxu0
  %v1212 = vpop.f32.mrb[0].mxu0
  %v1213 = vadd.f32 0.0, %v1212
  %v1214 = vpop.f32.mrb[0].mxu0
  %1215 = vmatprep.mubr.bf16.mxu0 0
  %1216 = vmatmul.mubr.bf16.gmra.mrb[0].mxu0 %v504
  %v1217 = vpop.f32.mrb[0].mxu0
  %v1218 = vadd.f32 0.0, %v1217
  %v1219 = vpop.f32.mrb[0].mxu0
  %v1220 = vpop.f32.mrb[0].mxu0
  %v1221 = vadd.f32 0.0, %v1220
  %v1222 = vpop.f32.mrb[0].mxu0
  %1223 = vmatprep.mubr.bf16.mxu0 0
  %1224 = vmatmul.mubr.bf16.gmra.mrb[0].mxu0 %v507
  %v1225 = vpop.f32.mrb[0].mxu0
  %v1226 = vadd.f32 0.0, %v1225
  %v1227 = vpop.f32.mrb[0].mxu0
  %v1228 = vpop.f32.mrb[0].mxu0
  %v1229 = vadd.f32 0.0, %v1228
  %v1230 = vpop.f32.mrb[0].mxu0
  %1231 = vmatprep.mubr.bf16.mxu0 0
  %1232 = vmatmul.mubr.bf16.gmra.mrb[0].mxu0 %v510
  %v1233 = vpop.f32.mrb[0].mxu0
  %v1234 = vadd.f32 0.0, %v1233
  %v1235 = vpop.f32.mrb[0].mxu0
  %v1236 = vpop.f32.mrb[0].mxu0
  %v1237 = vadd.f32 0.0, %v1236
  %v1238 = vpop.f32.mrb[0].mxu0
  %1239 = vmatprep.mubr.bf16.mxu0 0
  %1240 = vmatmul.mubr.bf16.gmra.mrb[0].mxu0 %v513
  %v1241 = vpop.f32.mrb[0].mxu0
  %v1242 = vadd.f32 0.0, %v1241
  %v1243 = vpop.f32.mrb[0].mxu0
  %v1244 = vpop.f32.mrb[0].mxu0
  %v1245 = vadd.f32 0.0, %v1244
  %v1246 = vpop.f32.mrb[0].mxu0
  %1247 = vmatprep.mubr.bf16.mxu0 0
  %1248 = vmatmul.mubr.bf16.gmra.mrb[0].mxu0 %v516
  %v1249 = vpop.f32.mrb[0].mxu0
  %v1250 = vadd.f32 0.0, %v1249
  %v1251 = vpop.f32.mrb[0].mxu0
  %v1252 = vpop.f32.mrb[0].mxu0
  %v1253 = vadd.f32 0.0, %v1252
  %v1254 = vpop.f32.mrb[0].mxu0
  %1255 = vmatprep.mubr.bf16.mxu0 0
  %1256 = vmatmul.mubr.bf16.gmra.mrb[0].mxu0 %v793
  %v1257 = vpop.f32.mrb[0].mxu0
  %v1258 = vpop.f32.mrb[0].mxu0
  %v1259 = vpop.f32.mrb[0].mxu0
  %v1260 = vpop.f32.mrb[0].mxu0
  %1261 = vmatprep.mubr.bf16.mxu0 0
  %1262 = vmatmul.mubr.bf16.gmra.mrb[0].mxu0 %v1173
  %v1263 = vpop.f32.mrb[0].mxu0
  %v1264 = vpop.f32.mrb[0].mxu0
  %v1265 = vpop.f32.mrb[0].mxu0
  %v1266 = vpop.f32.mrb[0].mxu0
  %1267 = vdwg.mxu0
  %v1268 = vadd.f32 %v1143, %v1210
  %v1269 = vadd.f32 %v1144, %v1213
  %v1270 = vadd.f32 %v1145, %v1218
  %v1271 = vadd.f32 %v1146, %v1221
  %v1272 = vadd.f32 %v1147, %v1226
  %v1273 = vadd.f32 %v1148, %v1229
  %v1274 = vadd.f32 %v1149, %v1234
  %v1275 = vadd.f32 %v1150, %v1237
  %v1276 = vadd.f32 %v1151, %v1242
  %v1277 = vadd.f32 %v1152, %v1245
  %v1278 = vadd.f32 %v1153, %v1250
  %v1279 = vadd.f32 %v1154, %v1253
  %s1280 = scalar_lea.vmem %s3, 112
  %v1281 = vld [vmem:[%s1280] sm:$0xf]
  %v1282 = vld [vmem:[%s1280 + $0x4] sm:$0xf]
  %v1283 = vld [vmem:[%s1280 + $0x8] sm:$0xf]
  %v1284 = vld [vmem:[%s1280 + $0xc] sm:$0xf]
  %v1286 = vrot.slane %v315, 1
  %v1287 = vsel %vm334, %v906, %v1286
  %v1292 = vunpack.c.l.b16 %v1281
  %v1293 = vunpack.c.l.b16 %v1282
  %v1294 = vunpack.c.l.b16 %v1283
  %v1295 = vunpack.c.l.b16 %v1284
  %v1296 = vpack.c.b16 %v1293, %v1292
  %v1297 = vpack.c.b16 %v1295, %v1294
  %v1301 = vsel %vm364, %v1287, 0
  %1303 = vmatprep.subr.bf16.mxu0 0
  %1304 = vmatpush1.bf16.msra.mxu0 %v1296
  %1305 = vmatprep.subr.bf16.mxu0 0
  %1306 = vmatpush1.bf16.msra.mxu0 %v1297
  %1307 = vmatprep.subr.bf16.mxu0 0
  %1308 = vmatpush1.bf16.msra.mxu0 0
  %1309 = vmatprep.subr.bf16.mxu0 0
  %1310 = vmatpush1.bf16.msra.mxu0 0
  %1311 = vmatprep.subr.bf16.mxu0 0
  %1312 = vmatpush1.bf16.msra.mxu0 0
  %1313 = vmatprep.subr.bf16.mxu0 0
  %1314 = vmatpush1.bf16.msra.mxu0 0
  %1315 = vmatprep.subr.bf16.mxu0 0
  %1316 = vmatpush1.bf16.msra.mxu0 0
  %1317 = vmatprep.subr.bf16.mxu0 0
  %1318 = vmatpush1.bf16.msra.mxu0 0
  %1319 = vmatprep.subr.bf16.mxu0 0
  %1320 = vmatpush1.bf16.msra.mxu0 0
  %1321 = vmatprep.subr.bf16.mxu0 0
  %1322 = vmatpush1.bf16.msra.mxu0 0
  %1323 = vmatprep.subr.bf16.mxu0 0
  %1324 = vmatpush1.bf16.msra.mxu0 0
  %1325 = vmatprep.subr.bf16.mxu0 0
  %1326 = vmatpush1.bf16.msra.mxu0 0
  %1327 = vmatprep.subr.bf16.mxu0 0
  %1328 = vmatpush1.bf16.msra.mxu0 0
  %1329 = vmatprep.subr.bf16.mxu0 0
  %1330 = vmatpush1.bf16.msra.mxu0 0
  %1331 = vmatprep.subr.bf16.mxu0 0
  %1332 = vmatpush1.bf16.msra.mxu0 0
  %1333 = vmatprep.subr.bf16.mxu0 0
  %1334 = vmatpush1.bf16.msra.mxu0 0
  %1335 = vmatprep.mubr.bf16.mxu0 0
  %1336 = vmatmul.mubr.bf16.gmra.mrb[0].mxu0 %v372
  %v1337 = vpop.f32.mrb[0].mxu0
  %v1338 = vadd.f32 0.0, %v1337
  %v1339 = vpop.f32.mrb[0].mxu0
  %v1340 = vpop.f32.mrb[0].mxu0
  %v1341 = vadd.f32 0.0, %v1340
  %v1342 = vpop.f32.mrb[0].mxu0
  %1343 = vmatprep.mubr.bf16.mxu0 0
  %1344 = vmatmul.mubr.bf16.gmra.mrb[0].mxu0 %v375
  %v1345 = vpop.f32.mrb[0].mxu0
  %v1346 = vadd.f32 0.0, %v1345
  %v1347 = vpop.f32.mrb[0].mxu0
  %v1348 = vpop.f32.mrb[0].mxu0
  %v1349 = vadd.f32 0.0, %v1348
  %v1350 = vpop.f32.mrb[0].mxu0
  %1351 = vmatprep.mubr.bf16.mxu0 0
  %1352 = vmatmul.mubr.bf16.gmra.mrb[0].mxu0 %v378
  %v1353 = vpop.f32.mrb[0].mxu0
  %v1354 = vadd.f32 0.0, %v1353
  %v1355 = vpop.f32.mrb[0].mxu0
  %v1356 = vpop.f32.mrb[0].mxu0
  %v1357 = vadd.f32 0.0, %v1356
  %v1358 = vpop.f32.mrb[0].mxu0
  %1359 = vmatprep.mubr.bf16.mxu0 0
  %1360 = vmatmul.mubr.bf16.gmra.mrb[0].mxu0 %v381
  %v1361 = vpop.f32.mrb[0].mxu0
  %v1362 = vadd.f32 0.0, %v1361
  %v1363 = vpop.f32.mrb[0].mxu0
  %v1364 = vpop.f32.mrb[0].mxu0
  %v1365 = vadd.f32 0.0, %v1364
  %v1366 = vpop.f32.mrb[0].mxu0
  %1367 = vmatprep.mubr.bf16.mxu0 0
  %1368 = vmatmul.mubr.bf16.gmra.mrb[0].mxu0 %v384
  %v1369 = vpop.f32.mrb[0].mxu0
  %v1370 = vadd.f32 0.0, %v1369
  %v1371 = vpop.f32.mrb[0].mxu0
  %v1372 = vpop.f32.mrb[0].mxu0
  %v1373 = vadd.f32 0.0, %v1372
  %v1374 = vpop.f32.mrb[0].mxu0
  %1375 = vmatprep.mubr.bf16.mxu0 0
  %1376 = vmatmul.mubr.bf16.gmra.mrb[0].mxu0 %v387
  %v1377 = vpop.f32.mrb[0].mxu0
  %v1378 = vadd.f32 0.0, %v1377
  %v1379 = vpop.f32.mrb[0].mxu0
  %v1380 = vpop.f32.mrb[0].mxu0
  %v1381 = vadd.f32 0.0, %v1380
  %v1382 = vpop.f32.mrb[0].mxu0
  %1383 = vmatprep.mubr.bf16.mxu0 0
  %1384 = vmatmul.mubr.bf16.gmra.mrb[0].mxu0 %v921
  %v1385 = vpop.f32.mrb[0].mxu0
  %v1386 = vpop.f32.mrb[0].mxu0
  %v1387 = vpop.f32.mrb[0].mxu0
  %v1388 = vpop.f32.mrb[0].mxu0
  %1389 = vmatprep.mubr.bf16.mxu0 0
  %1390 = vmatmul.mubr.bf16.gmra.mrb[0].mxu0 %v1301
  %v1391 = vpop.f32.mrb[0].mxu0
  %v1392 = vpop.f32.mrb[0].mxu0
  %v1393 = vpop.f32.mrb[0].mxu0
  %v1394 = vpop.f32.mrb[0].mxu0
  %1395 = vdwg.mxu0
  %v1396 = vadd.f32 %v1268, %v1338
  %v1397 = vadd.f32 %v1269, %v1341
  %v1398 = vadd.f32 %v1270, %v1346
  %v1399 = vadd.f32 %v1271, %v1349
  %v1400 = vadd.f32 %v1272, %v1354
  %v1401 = vadd.f32 %v1273, %v1357
  %v1402 = vadd.f32 %v1274, %v1362
  %v1403 = vadd.f32 %v1275, %v1365
  %v1404 = vadd.f32 %v1276, %v1370
  %v1405 = vadd.f32 %v1277, %v1373
  %v1406 = vadd.f32 %v1278, %v1378
  %v1407 = vadd.f32 %v1279, %v1381
  %s1408 = scalar_lea.vmem %s3, 128
  %v1409 = vld [vmem:[%s1408] sm:$0xf]
  %v1410 = vld [vmem:[%s1408 + $0x4] sm:$0xf]
  %v1411 = vld [vmem:[%s1408 + $0x8] sm:$0xf]
  %v1412 = vld [vmem:[%s1408 + $0xc] sm:$0xf]
  %v1413 = vrot.slane %v315, 2
  %v1414 = vsel %vm616, %v1033, %v1413
  %v1419 = vunpack.c.l.b16 %v1409
  %v1420 = vunpack.c.l.b16 %v1410
  %v1421 = vunpack.c.l.b16 %v1411
  %v1422 = vunpack.c.l.b16 %v1412
  %v1423 = vpack.c.b16 %v1420, %v1419
  %v1424 = vpack.c.b16 %v1422, %v1421
  %v1428 = vsel %vm364, %v1414, 0
  %1430 = vmatprep.subr.bf16.mxu0 0
  %1431 = vmatpush1.bf16.msra.mxu0 %v1423
  %1432 = vmatprep.subr.bf16.mxu0 0
  %1433 = vmatpush1.bf16.msra.mxu0 %v1424
  %1434 = vmatprep.subr.bf16.mxu0 0
  %1435 = vmatpush1.bf16.msra.mxu0 0
  %1436 = vmatprep.subr.bf16.mxu0 0
  %1437 = vmatpush1.bf16.msra.mxu0 0
  %1438 = vmatprep.subr.bf16.mxu0 0
  %1439 = vmatpush1.bf16.msra.mxu0 0
  %1440 = vmatprep.subr.bf16.mxu0 0
  %1441 = vmatpush1.bf16.msra.mxu0 0
  %1442 = vmatprep.subr.bf16.mxu0 0
  %1443 = vmatpush1.bf16.msra.mxu0 0
  %1444 = vmatprep.subr.bf16.mxu0 0
  %1445 = vmatpush1.bf16.msra.mxu0 0
  %1446 = vmatprep.subr.bf16.mxu0 0
  %1447 = vmatpush1.bf16.msra.mxu0 0
  %1448 = vmatprep.subr.bf16.mxu0 0
  %1449 = vmatpush1.bf16.msra.mxu0 0
  %1450 = vmatprep.subr.bf16.mxu0 0
  %1451 = vmatpush1.bf16.msra.mxu0 0
  %1452 = vmatprep.subr.bf16.mxu0 0
  %1453 = vmatpush1.bf16.msra.mxu0 0
  %1454 = vmatprep.subr.bf16.mxu0 0
  %1455 = vmatpush1.bf16.msra.mxu0 0
  %1456 = vmatprep.subr.bf16.mxu0 0
  %1457 = vmatpush1.bf16.msra.mxu0 0
  %1458 = vmatprep.subr.bf16.mxu0 0
  %1459 = vmatpush1.bf16.msra.mxu0 0
  %1460 = vmatprep.subr.bf16.mxu0 0
  %1461 = vmatpush1.bf16.msra.mxu0 0
  %1462 = vmatprep.mubr.bf16.mxu0 0
  %1463 = vmatmul.mubr.bf16.gmra.mrb[0].mxu0 %v653
  %v1464 = vpop.f32.mrb[0].mxu0
  %v1465 = vadd.f32 0.0, %v1464
  %v1466 = vpop.f32.mrb[0].mxu0
  %v1467 = vpop.f32.mrb[0].mxu0
  %v1468 = vadd.f32 0.0, %v1467
  %v1469 = vpop.f32.mrb[0].mxu0
  %1470 = vmatprep.mubr.bf16.mxu0 0
  %1471 = vmatmul.mubr.bf16.gmra.mrb[0].mxu0 %v656
  %v1472 = vpop.f32.mrb[0].mxu0
  %v1473 = vadd.f32 0.0, %v1472
  %v1474 = vpop.f32.mrb[0].mxu0
  %v1475 = vpop.f32.mrb[0].mxu0
  %v1476 = vadd.f32 0.0, %v1475
  %v1477 = vpop.f32.mrb[0].mxu0
  %1478 = vmatprep.mubr.bf16.mxu0 0
  %1479 = vmatmul.mubr.bf16.gmra.mrb[0].mxu0 %v659
  %v1480 = vpop.f32.mrb[0].mxu0
  %v1481 = vadd.f32 0.0, %v1480
  %v1482 = vpop.f32.mrb[0].mxu0
  %v1483 = vpop.f32.mrb[0].mxu0
  %v1484 = vadd.f32 0.0, %v1483
  %v1485 = vpop.f32.mrb[0].mxu0
  %1486 = vmatprep.mubr.bf16.mxu0 0
  %1487 = vmatmul.mubr.bf16.gmra.mrb[0].mxu0 %v662
  %v1488 = vpop.f32.mrb[0].mxu0
  %v1489 = vadd.f32 0.0, %v1488
  %v1490 = vpop.f32.mrb[0].mxu0
  %v1491 = vpop.f32.mrb[0].mxu0
  %v1492 = vadd.f32 0.0, %v1491
  %v1493 = vpop.f32.mrb[0].mxu0
  %1494 = vmatprep.mubr.bf16.mxu0 0
  %1495 = vmatmul.mubr.bf16.gmra.mrb[0].mxu0 %v665
  %v1496 = vpop.f32.mrb[0].mxu0
  %v1497 = vadd.f32 0.0, %v1496
  %v1498 = vpop.f32.mrb[0].mxu0
  %v1499 = vpop.f32.mrb[0].mxu0
  %v1500 = vadd.f32 0.0, %v1499
  %v1501 = vpop.f32.mrb[0].mxu0
  %1502 = vmatprep.mubr.bf16.mxu0 0
  %1503 = vmatmul.mubr.bf16.gmra.mrb[0].mxu0 %v668
  %v1504 = vpop.f32.mrb[0].mxu0
  %v1505 = vadd.f32 0.0, %v1504
  %v1506 = vpop.f32.mrb[0].mxu0
  %v1507 = vpop.f32.mrb[0].mxu0
  %v1508 = vadd.f32 0.0, %v1507
  %v1509 = vpop.f32.mrb[0].mxu0
  %1510 = vmatprep.mubr.bf16.mxu0 0
  %1511 = vmatmul.mubr.bf16.gmra.mrb[0].mxu0 %v1048
  %v1512 = vpop.f32.mrb[0].mxu0
  %v1513 = vpop.f32.mrb[0].mxu0
  %v1514 = vpop.f32.mrb[0].mxu0
  %v1515 = vpop.f32.mrb[0].mxu0
  %1516 = vmatprep.mubr.bf16.mxu0 0
  %1517 = vmatmul.mubr.bf16.gmra.mrb[0].mxu0 %v1428
  %v1518 = vpop.f32.mrb[0].mxu0
  %v1519 = vpop.f32.mrb[0].mxu0
  %v1520 = vpop.f32.mrb[0].mxu0
  %v1521 = vpop.f32.mrb[0].mxu0
  %1522 = vdwg.mxu0
  %v1523 = vadd.f32 %v1396, %v1465
  %v1524 = vadd.f32 %v1397, %v1468
  %v1525 = vadd.f32 %v1398, %v1473
  %v1526 = vadd.f32 %v1399, %v1476
  %v1527 = vadd.f32 %v1400, %v1481
  %v1528 = vadd.f32 %v1401, %v1484
  %v1529 = vadd.f32 %v1402, %v1489
  %v1530 = vadd.f32 %v1403, %v1492
  %v1531 = vadd.f32 %v1404, %v1497
  %v1532 = vadd.f32 %v1405, %v1500
  %v1533 = vadd.f32 %v1406, %v1505
  %v1534 = vadd.f32 %v1407, %v1508
  %v1535 = vld [vmem:[%s4] sm:$0x1]
  %v1537 = vlaneseq
  %v1538 = vshrl.u32 %v1537, 7
  %v1539 = vsub.s32 0, %v1538
  %v1540 = vrot.slane %v1535, %v1539
  %v1542 = vadd.f32 %v1523, %v1540
  %v1543 = vadd.f32 %v1524, %v1540
  %v1544 = vadd.f32 %v1525, %v1540
  %v1545 = vadd.f32 %v1526, %v1540
  %v1546 = vadd.f32 %v1527, %v1540
  %v1547 = vadd.f32 %v1528, %v1540
  %v1548 = vadd.f32 %v1529, %v1540
  %v1549 = vadd.f32 %v1530, %v1540
  %v1550 = vadd.f32 %v1531, %v1540
  %v1551 = vadd.f32 %v1532, %v1540
  %v1552 = vadd.f32 %v1533, %v1540
  %v1553 = vadd.f32 %v1534, %v1540
  %v1554 = vmax.f32 %v1542, 0.0
  %v1555 = vmax.f32 %v1543, 0.0
  %v1556 = vmax.f32 %v1544, 0.0
  %v1557 = vmax.f32 %v1545, 0.0
  %v1558 = vmax.f32 %v1546, 0.0
  %v1559 = vmax.f32 %v1547, 0.0
  %v1560 = vmax.f32 %v1548, 0.0
  %v1561 = vmax.f32 %v1549, 0.0
  %v1562 = vmax.f32 %v1550, 0.0
  %v1563 = vmax.f32 %v1551, 0.0
  %v1564 = vmax.f32 %v1552, 0.0
  %v1565 = vmax.f32 %v1553, 0.0
  %v1566 = vpack.c.bf16 %v1555, %v1554
  %v1567 = vpack.c.bf16 %v1557, %v1556
  %v1568 = vpack.c.bf16 %v1559, %v1558
  %v1569 = vpack.c.bf16 %v1561, %v1560
  %v1570 = vpack.c.bf16 %v1563, %v1562
  %v1571 = vpack.c.bf16 %v1565, %v1564
  %v1572 = vld [vmem:[%s5] sm:$0xf]
  %v1573 = vld [vmem:[%s5 + $0x4] sm:$0xf]
  %v1574 = vld [vmem:[%s5 + $0x8] sm:$0xf]
  %v1575 = vld [vmem:[%s5 + $0xc] sm:$0xf]
  %v1576 = vld [vmem:[%s5 + $0x10] sm:$0xf]
  %v1577 = vld [vmem:[%s5 + $0x14] sm:$0xf]
  %v1578 = vld [vmem:[%s5 + $0x18] sm:$0xf]
  %v1579 = vld [vmem:[%s5 + $0x1c] sm:$0xf]
  %s1580 = scalar_lea.vmem %s5, 32
  %v1581 = vld [vmem:[%s1580] sm:$0xf]
  %v1582 = vld [vmem:[%s1580 + $0x4] sm:$0xf]
  %v1583 = vld [vmem:[%s1580 + $0x8] sm:$0xf]
  %v1584 = vld [vmem:[%s1580 + $0xc] sm:$0xf]
  %v1585 = vld [vmem:[%s1580 + $0x10] sm:$0xf]
  %v1586 = vld [vmem:[%s1580 + $0x14] sm:$0xf]
  %v1587 = vld [vmem:[%s1580 + $0x18] sm:$0xf]
  %v1588 = vld [vmem:[%s1580 + $0x1c] sm:$0xf]
  %v1590 = vrot.slane %v1566, 1
  %v1599 = vunpack.c.l.b16 %v1581
  %v1600 = vunpack.c.l.b16 %v1582
  %v1601 = vunpack.c.l.b16 %v1583
  %v1602 = vunpack.c.l.b16 %v1584
  %v1603 = vunpack.c.l.b16 %v1585
  %v1604 = vunpack.c.l.b16 %v1586
  %v1605 = vunpack.c.l.b16 %v1587
  %v1606 = vunpack.c.l.b16 %v1588
  %v1607 = vpack.c.b16 %v1600, %v1599
  %v1608 = vpack.c.b16 %v1602, %v1601
  %v1609 = vpack.c.b16 %v1604, %v1603
  %v1610 = vpack.c.b16 %v1606, %v1605
  %vm1615 = vcmask 523264
  %v1617 = vsel %vm1615, %v1590, 0
  %1619 = vmatprep.subr.bf16.mxu0 0
  %1620 = vmatpush1.bf16.msra.mxu0 %v1607
  %1621 = vmatprep.subr.bf16.mxu0 0
  %1622 = vmatpush1.bf16.msra.mxu0 %v1608
  %1623 = vmatprep.subr.bf16.mxu0 0
  %1624 = vmatpush1.bf16.msra.mxu0 %v1609
  %1625 = vmatprep.subr.bf16.mxu0 0
  %1626 = vmatpush1.bf16.msra.mxu0 %v1610
  %1627 = vmatprep.subr.bf16.mxu0 0
  %1628 = vmatpush1.bf16.msra.mxu0 0
  %1629 = vmatprep.subr.bf16.mxu0 0
  %1630 = vmatpush1.bf16.msra.mxu0 0
  %1631 = vmatprep.subr.bf16.mxu0 0
  %1632 = vmatpush1.bf16.msra.mxu0 0
  %1633 = vmatprep.subr.bf16.mxu0 0
  %1634 = vmatpush1.bf16.msra.mxu0 0
  %1635 = vmatprep.subr.bf16.mxu0 0
  %1636 = vmatpush1.bf16.msra.mxu0 0
  %1637 = vmatprep.subr.bf16.mxu0 0
  %1638 = vmatpush1.bf16.msra.mxu0 0
  %1639 = vmatprep.subr.bf16.mxu0 0
  %1640 = vmatpush1.bf16.msra.mxu0 0
  %1641 = vmatprep.subr.bf16.mxu0 0
  %1642 = vmatpush1.bf16.msra.mxu0 0
  %1643 = vmatprep.subr.bf16.mxu0 0
  %1644 = vmatpush1.bf16.msra.mxu0 0
  %1645 = vmatprep.subr.bf16.mxu0 0
  %1646 = vmatpush1.bf16.msra.mxu0 0
  %1647 = vmatprep.subr.bf16.mxu0 0
  %1648 = vmatpush1.bf16.msra.mxu0 0
  %1649 = vmatprep.subr.bf16.mxu0 0
  %1650 = vmatpush1.bf16.msra.mxu0 0
  %1651 = vmatprep.mubr.bf16.mxu0 0
  %1652 = vmatmul.mubr.bf16.gmra.mrb[0].mxu0 %v1617
  %v1653 = vpop.f32.mrb[0].mxu0
  %v1654 = vadd.f32 0.0, %v1653
  %v1655 = vpop.f32.mrb[0].mxu0
  %v1656 = vpop.f32.mrb[0].mxu0
  %v1657 = vpop.f32.mrb[0].mxu0
  %1658 = vdwg.mxu0
  %v1667 = vunpack.c.l.b16 %v1572
  %v1668 = vunpack.c.l.b16 %v1573
  %v1669 = vunpack.c.l.b16 %v1574
  %v1670 = vunpack.c.l.b16 %v1575
  %v1671 = vunpack.c.l.b16 %v1576
  %v1672 = vunpack.c.l.b16 %v1577
  %v1673 = vunpack.c.l.b16 %v1578
  %v1674 = vunpack.c.l.b16 %v1579
  %v1675 = vpack.c.b16 %v1668, %v1667
  %v1676 = vpack.c.b16 %v1670, %v1669
  %v1677 = vpack.c.b16 %v1672, %v1671
  %v1678 = vpack.c.b16 %v1674, %v1673
  %v1684 = vsel %vm1615, %v1566, 0
  %1686 = vmatprep.subr.bf16.mxu0 0
  %1687 = vmatpush1.bf16.msra.mxu0 %v1675
  %1688 = vmatprep.subr.bf16.mxu0 0
  %1689 = vmatpush1.bf16.msra.mxu0 %v1676
  %1690 = vmatprep.subr.bf16.mxu0 0
  %1691 = vmatpush1.bf16.msra.mxu0 %v1677
  %1692 = vmatprep.subr.bf16.mxu0 0
  %1693 = vmatpush1.bf16.msra.mxu0 %v1678
  %1694 = vmatprep.subr.bf16.mxu0 0
  %1695 = vmatpush1.bf16.msra.mxu0 0
  %1696 = vmatprep.subr.bf16.mxu0 0
  %1697 = vmatpush1.bf16.msra.mxu0 0
  %1698 = vmatprep.subr.bf16.mxu0 0
  %1699 = vmatpush1.bf16.msra.mxu0 0
  %1700 = vmatprep.subr.bf16.mxu0 0
  %1701 = vmatpush1.bf16.msra.mxu0 0
  %1702 = vmatprep.subr.bf16.mxu0 0
  %1703 = vmatpush1.bf16.msra.mxu0 0
  %1704 = vmatprep.subr.bf16.mxu0 0
  %1705 = vmatpush1.bf16.msra.mxu0 0
  %1706 = vmatprep.subr.bf16.mxu0 0
  %1707 = vmatpush1.bf16.msra.mxu0 0
  %1708 = vmatprep.subr.bf16.mxu0 0
  %1709 = vmatpush1.bf16.msra.mxu0 0
  %1710 = vmatprep.subr.bf16.mxu0 0
  %1711 = vmatpush1.bf16.msra.mxu0 0
  %1712 = vmatprep.subr.bf16.mxu0 0
  %1713 = vmatpush1.bf16.msra.mxu0 0
  %1714 = vmatprep.subr.bf16.mxu0 0
  %1715 = vmatpush1.bf16.msra.mxu0 0
  %1716 = vmatprep.subr.bf16.mxu0 0
  %1717 = vmatpush1.bf16.msra.mxu0 0
  %1718 = vmatprep.mubr.bf16.mxu0 0
  %1719 = vmatmul.mubr.bf16.gmra.mrb[0].mxu0 %v1684
  %v1720 = vpop.f32.mrb[0].mxu0
  %v1721 = vadd.f32 %v1654, %v1720
  %v1722 = vpop.f32.mrb[0].mxu0
  %v1723 = vpop.f32.mrb[0].mxu0
  %v1724 = vpop.f32.mrb[0].mxu0
  %1725 = vdwg.mxu0
  %s1726 = scalar_lea.vmem %s5, 64
  %v1727 = vld [vmem:[%s1726] sm:$0xf]
  %v1728 = vld [vmem:[%s1726 + $0x4] sm:$0xf]
  %v1729 = vld [vmem:[%s1726 + $0x8] sm:$0xf]
  %v1730 = vld [vmem:[%s1726 + $0xc] sm:$0xf]
  %v1731 = vld [vmem:[%s1726 + $0x10] sm:$0xf]
  %v1732 = vld [vmem:[%s1726 + $0x14] sm:$0xf]
  %v1733 = vld [vmem:[%s1726 + $0x18] sm:$0xf]
  %v1734 = vld [vmem:[%s1726 + $0x1c] sm:$0xf]
  %v1735 = vrot.slane %v1566, 2
  %v1744 = vunpack.c.l.b16 %v1727
  %v1745 = vunpack.c.l.b16 %v1728
  %v1746 = vunpack.c.l.b16 %v1729
  %v1747 = vunpack.c.l.b16 %v1730
  %v1748 = vunpack.c.l.b16 %v1731
  %v1749 = vunpack.c.l.b16 %v1732
  %v1750 = vunpack.c.l.b16 %v1733
  %v1751 = vunpack.c.l.b16 %v1734
  %v1752 = vpack.c.b16 %v1745, %v1744
  %v1753 = vpack.c.b16 %v1747, %v1746
  %v1754 = vpack.c.b16 %v1749, %v1748
  %v1755 = vpack.c.b16 %v1751, %v1750
  %v1761 = vsel %vm1615, %v1735, 0
  %1763 = vmatprep.subr.bf16.mxu0 0
  %1764 = vmatpush1.bf16.msra.mxu0 %v1752
  %1765 = vmatprep.subr.bf16.mxu0 0
  %1766 = vmatpush1.bf16.msra.mxu0 %v1753
  %1767 = vmatprep.subr.bf16.mxu0 0
  %1768 = vmatpush1.bf16.msra.mxu0 %v1754
  %1769 = vmatprep.subr.bf16.mxu0 0
  %1770 = vmatpush1.bf16.msra.mxu0 %v1755
  %1771 = vmatprep.subr.bf16.mxu0 0
  %1772 = vmatpush1.bf16.msra.mxu0 0
  %1773 = vmatprep.subr.bf16.mxu0 0
  %1774 = vmatpush1.bf16.msra.mxu0 0
  %1775 = vmatprep.subr.bf16.mxu0 0
  %1776 = vmatpush1.bf16.msra.mxu0 0
  %1777 = vmatprep.subr.bf16.mxu0 0
  %1778 = vmatpush1.bf16.msra.mxu0 0
  %1779 = vmatprep.subr.bf16.mxu0 0
  %1780 = vmatpush1.bf16.msra.mxu0 0
  %1781 = vmatprep.subr.bf16.mxu0 0
  %1782 = vmatpush1.bf16.msra.mxu0 0
  %1783 = vmatprep.subr.bf16.mxu0 0
  %1784 = vmatpush1.bf16.msra.mxu0 0
  %1785 = vmatprep.subr.bf16.mxu0 0
  %1786 = vmatpush1.bf16.msra.mxu0 0
  %1787 = vmatprep.subr.bf16.mxu0 0
  %1788 = vmatpush1.bf16.msra.mxu0 0
  %1789 = vmatprep.subr.bf16.mxu0 0
  %1790 = vmatpush1.bf16.msra.mxu0 0
  %1791 = vmatprep.subr.bf16.mxu0 0
  %1792 = vmatpush1.bf16.msra.mxu0 0
  %1793 = vmatprep.subr.bf16.mxu0 0
  %1794 = vmatpush1.bf16.msra.mxu0 0
  %1795 = vmatprep.mubr.bf16.mxu0 0
  %1796 = vmatmul.mubr.bf16.gmra.mrb[0].mxu0 %v1761
  %v1797 = vpop.f32.mrb[0].mxu0
  %v1798 = vadd.f32 0.0, %v1797
  %v1799 = vpop.f32.mrb[0].mxu0
  %v1800 = vpop.f32.mrb[0].mxu0
  %v1801 = vpop.f32.mrb[0].mxu0
  %1802 = vdwg.mxu0
  %v1803 = vadd.f32 %v1721, %v1798
  %s1804 = scalar_lea.vmem %s5, 96
  %v1805 = vld [vmem:[%s1804] sm:$0xf]
  %v1806 = vld [vmem:[%s1804 + $0x4] sm:$0xf]
  %v1807 = vld [vmem:[%s1804 + $0x8] sm:$0xf]
  %v1808 = vld [vmem:[%s1804 + $0xc] sm:$0xf]
  %v1809 = vld [vmem:[%s1804 + $0x10] sm:$0xf]
  %v1810 = vld [vmem:[%s1804 + $0x14] sm:$0xf]
  %v1811 = vld [vmem:[%s1804 + $0x18] sm:$0xf]
  %v1812 = vld [vmem:[%s1804 + $0x1c] sm:$0xf]
  %v1813 = vrot.slane %v1566, 3
  %v1822 = vunpack.c.l.b16 %v1805
  %v1823 = vunpack.c.l.b16 %v1806
  %v1824 = vunpack.c.l.b16 %v1807
  %v1825 = vunpack.c.l.b16 %v1808
  %v1826 = vunpack.c.l.b16 %v1809
  %v1827 = vunpack.c.l.b16 %v1810
  %v1828 = vunpack.c.l.b16 %v1811
  %v1829 = vunpack.c.l.b16 %v1812
  %v1830 = vpack.c.b16 %v1823, %v1822
  %v1831 = vpack.c.b16 %v1825, %v1824
  %v1832 = vpack.c.b16 %v1827, %v1826
  %v1833 = vpack.c.b16 %v1829, %v1828
  %v1839 = vsel %vm1615, %v1813, 0
  %1841 = vmatprep.subr.bf16.mxu0 0
  %1842 = vmatpush1.bf16.msra.mxu0 %v1830
  %1843 = vmatprep.subr.bf16.mxu0 0
  %1844 = vmatpush1.bf16.msra.mxu0 %v1831
  %1845 = vmatprep.subr.bf16.mxu0 0
  %1846 = vmatpush1.bf16.msra.mxu0 %v1832
  %1847 = vmatprep.subr.bf16.mxu0 0
  %1848 = vmatpush1.bf16.msra.mxu0 %v1833
  %1849 = vmatprep.subr.bf16.mxu0 0
  %1850 = vmatpush1.bf16.msra.mxu0 0
  %1851 = vmatprep.subr.bf16.mxu0 0
  %1852 = vmatpush1.bf16.msra.mxu0 0
  %1853 = vmatprep.subr.bf16.mxu0 0
  %1854 = vmatpush1.bf16.msra.mxu0 0
  %1855 = vmatprep.subr.bf16.mxu0 0
  %1856 = vmatpush1.bf16.msra.mxu0 0
  %1857 = vmatprep.subr.bf16.mxu0 0
  %1858 = vmatpush1.bf16.msra.mxu0 0
  %1859 = vmatprep.subr.bf16.mxu0 0
  %1860 = vmatpush1.bf16.msra.mxu0 0
  %1861 = vmatprep.subr.bf16.mxu0 0
  %1862 = vmatpush1.bf16.msra.mxu0 0
  %1863 = vmatprep.subr.bf16.mxu0 0
  %1864 = vmatpush1.bf16.msra.mxu0 0
  %1865 = vmatprep.subr.bf16.mxu0 0
  %1866 = vmatpush1.bf16.msra.mxu0 0
  %1867 = vmatprep.subr.bf16.mxu0 0
  %1868 = vmatpush1.bf16.msra.mxu0 0
  %1869 = vmatprep.subr.bf16.mxu0 0
  %1870 = vmatpush1.bf16.msra.mxu0 0
  %1871 = vmatprep.subr.bf16.mxu0 0
  %1872 = vmatpush1.bf16.msra.mxu0 0
  %1873 = vmatprep.mubr.bf16.mxu0 0
  %1874 = vmatmul.mubr.bf16.gmra.mrb[0].mxu0 %v1839
  %v1875 = vpop.f32.mrb[0].mxu0
  %v1876 = vadd.f32 0.0, %v1875
  %v1877 = vpop.f32.mrb[0].mxu0
  %v1878 = vpop.f32.mrb[0].mxu0
  %v1879 = vpop.f32.mrb[0].mxu0
  %1880 = vdwg.mxu0
  %v1881 = vadd.f32 %v1803, %v1876
  %s1882 = scalar_lea.vmem %s5, 128
  %v1883 = vld [vmem:[%s1882] sm:$0xf]
  %v1884 = vld [vmem:[%s1882 + $0x4] sm:$0xf]
  %v1885 = vld [vmem:[%s1882 + $0x8] sm:$0xf]
  %v1886 = vld [vmem:[%s1882 + $0xc] sm:$0xf]
  %v1887 = vld [vmem:[%s1882 + $0x10] sm:$0xf]
  %v1888 = vld [vmem:[%s1882 + $0x14] sm:$0xf]
  %v1889 = vld [vmem:[%s1882 + $0x18] sm:$0xf]
  %v1890 = vld [vmem:[%s1882 + $0x1c] sm:$0xf]
  %v1891 = vrot.slane %v1566, 4
  %v1900 = vunpack.c.l.b16 %v1883
  %v1901 = vunpack.c.l.b16 %v1884
  %v1902 = vunpack.c.l.b16 %v1885
  %v1903 = vunpack.c.l.b16 %v1886
  %v1904 = vunpack.c.l.b16 %v1887
  %v1905 = vunpack.c.l.b16 %v1888
  %v1906 = vunpack.c.l.b16 %v1889
  %v1907 = vunpack.c.l.b16 %v1890
  %v1908 = vpack.c.b16 %v1901, %v1900
  %v1909 = vpack.c.b16 %v1903, %v1902
  %v1910 = vpack.c.b16 %v1905, %v1904
  %v1911 = vpack.c.b16 %v1907, %v1906
  %v1917 = vsel %vm1615, %v1891, 0
  %1919 = vmatprep.subr.bf16.mxu0 0
  %1920 = vmatpush1.bf16.msra.mxu0 %v1908
  %1921 = vmatprep.subr.bf16.mxu0 0
  %1922 = vmatpush1.bf16.msra.mxu0 %v1909
  %1923 = vmatprep.subr.bf16.mxu0 0
  %1924 = vmatpush1.bf16.msra.mxu0 %v1910
  %1925 = vmatprep.subr.bf16.mxu0 0
  %1926 = vmatpush1.bf16.msra.mxu0 %v1911
  %1927 = vmatprep.subr.bf16.mxu0 0
  %1928 = vmatpush1.bf16.msra.mxu0 0
  %1929 = vmatprep.subr.bf16.mxu0 0
  %1930 = vmatpush1.bf16.msra.mxu0 0
  %1931 = vmatprep.subr.bf16.mxu0 0
  %1932 = vmatpush1.bf16.msra.mxu0 0
  %1933 = vmatprep.subr.bf16.mxu0 0
  %1934 = vmatpush1.bf16.msra.mxu0 0
  %1935 = vmatprep.subr.bf16.mxu0 0
  %1936 = vmatpush1.bf16.msra.mxu0 0
  %1937 = vmatprep.subr.bf16.mxu0 0
  %1938 = vmatpush1.bf16.msra.mxu0 0
  %1939 = vmatprep.subr.bf16.mxu0 0
  %1940 = vmatpush1.bf16.msra.mxu0 0
  %1941 = vmatprep.subr.bf16.mxu0 0
  %1942 = vmatpush1.bf16.msra.mxu0 0
  %1943 = vmatprep.subr.bf16.mxu0 0
  %1944 = vmatpush1.bf16.msra.mxu0 0
  %1945 = vmatprep.subr.bf16.mxu0 0
  %1946 = vmatpush1.bf16.msra.mxu0 0
  %1947 = vmatprep.subr.bf16.mxu0 0
  %1948 = vmatpush1.bf16.msra.mxu0 0
  %1949 = vmatprep.subr.bf16.mxu0 0
  %1950 = vmatpush1.bf16.msra.mxu0 0
  %1951 = vmatprep.mubr.bf16.mxu0 0
  %1952 = vmatmul.mubr.bf16.gmra.mrb[0].mxu0 %v1917
  %v1953 = vpop.f32.mrb[0].mxu0
  %v1954 = vadd.f32 0.0, %v1953
  %v1955 = vpop.f32.mrb[0].mxu0
  %v1956 = vpop.f32.mrb[0].mxu0
  %v1957 = vpop.f32.mrb[0].mxu0
  %1958 = vdwg.mxu0
  %v1959 = vadd.f32 %v1881, %v1954
  %s1960 = scalar_lea.vmem %s5, 160
  %v1961 = vld [vmem:[%s1960] sm:$0xf]
  %v1962 = vld [vmem:[%s1960 + $0x4] sm:$0xf]
  %v1963 = vld [vmem:[%s1960 + $0x8] sm:$0xf]
  %v1964 = vld [vmem:[%s1960 + $0xc] sm:$0xf]
  %v1965 = vld [vmem:[%s1960 + $0x10] sm:$0xf]
  %v1966 = vld [vmem:[%s1960 + $0x14] sm:$0xf]
  %v1967 = vld [vmem:[%s1960 + $0x18] sm:$0xf]
  %v1968 = vld [vmem:[%s1960 + $0x1c] sm:$0xf]
  %v1969 = vrot.slane %v1566, 5
  %v1978 = vunpack.c.l.b16 %v1961
  %v1979 = vunpack.c.l.b16 %v1962
  %v1980 = vunpack.c.l.b16 %v1963
  %v1981 = vunpack.c.l.b16 %v1964
  %v1982 = vunpack.c.l.b16 %v1965
  %v1983 = vunpack.c.l.b16 %v1966
  %v1984 = vunpack.c.l.b16 %v1967
  %v1985 = vunpack.c.l.b16 %v1968
  %v1986 = vpack.c.b16 %v1979, %v1978
  %v1987 = vpack.c.b16 %v1981, %v1980
  %v1988 = vpack.c.b16 %v1983, %v1982
  %v1989 = vpack.c.b16 %v1985, %v1984
  %v1995 = vsel %vm1615, %v1969, 0
  %1997 = vmatprep.subr.bf16.mxu0 0
  %1998 = vmatpush1.bf16.msra.mxu0 %v1986
  %1999 = vmatprep.subr.bf16.mxu0 0
  %2000 = vmatpush1.bf16.msra.mxu0 %v1987
  %2001 = vmatprep.subr.bf16.mxu0 0
  %2002 = vmatpush1.bf16.msra.mxu0 %v1988
  %2003 = vmatprep.subr.bf16.mxu0 0
  %2004 = vmatpush1.bf16.msra.mxu0 %v1989
  %2005 = vmatprep.subr.bf16.mxu0 0
  %2006 = vmatpush1.bf16.msra.mxu0 0
  %2007 = vmatprep.subr.bf16.mxu0 0
  %2008 = vmatpush1.bf16.msra.mxu0 0
  %2009 = vmatprep.subr.bf16.mxu0 0
  %2010 = vmatpush1.bf16.msra.mxu0 0
  %2011 = vmatprep.subr.bf16.mxu0 0
  %2012 = vmatpush1.bf16.msra.mxu0 0
  %2013 = vmatprep.subr.bf16.mxu0 0
  %2014 = vmatpush1.bf16.msra.mxu0 0
  %2015 = vmatprep.subr.bf16.mxu0 0
  %2016 = vmatpush1.bf16.msra.mxu0 0
  %2017 = vmatprep.subr.bf16.mxu0 0
  %2018 = vmatpush1.bf16.msra.mxu0 0
  %2019 = vmatprep.subr.bf16.mxu0 0
  %2020 = vmatpush1.bf16.msra.mxu0 0
  %2021 = vmatprep.subr.bf16.mxu0 0
  %2022 = vmatpush1.bf16.msra.mxu0 0
  %2023 = vmatprep.subr.bf16.mxu0 0
  %2024 = vmatpush1.bf16.msra.mxu0 0
  %2025 = vmatprep.subr.bf16.mxu0 0
  %2026 = vmatpush1.bf16.msra.mxu0 0
  %2027 = vmatprep.subr.bf16.mxu0 0
  %2028 = vmatpush1.bf16.msra.mxu0 0
  %2029 = vmatprep.mubr.bf16.mxu0 0
  %2030 = vmatmul.mubr.bf16.gmra.mrb[0].mxu0 %v1995
  %v2031 = vpop.f32.mrb[0].mxu0
  %v2032 = vadd.f32 0.0, %v2031
  %v2033 = vpop.f32.mrb[0].mxu0
  %v2034 = vpop.f32.mrb[0].mxu0
  %v2035 = vpop.f32.mrb[0].mxu0
  %2036 = vdwg.mxu0
  %v2037 = vadd.f32 %v1959, %v2032
  %s2038 = scalar_lea.vmem %s5, 192
  %v2039 = vld [vmem:[%s2038] sm:$0xf]
  %v2040 = vld [vmem:[%s2038 + $0x4] sm:$0xf]
  %v2041 = vld [vmem:[%s2038 + $0x8] sm:$0xf]
  %v2042 = vld [vmem:[%s2038 + $0xc] sm:$0xf]
  %v2043 = vld [vmem:[%s2038 + $0x10] sm:$0xf]
  %v2044 = vld [vmem:[%s2038 + $0x14] sm:$0xf]
  %v2045 = vld [vmem:[%s2038 + $0x18] sm:$0xf]
  %v2046 = vld [vmem:[%s2038 + $0x1c] sm:$0xf]
  %v2055 = vunpack.c.l.b16 %v2039
  %v2056 = vunpack.c.l.b16 %v2040
  %v2057 = vunpack.c.l.b16 %v2041
  %v2058 = vunpack.c.l.b16 %v2042
  %v2059 = vunpack.c.l.b16 %v2043
  %v2060 = vunpack.c.l.b16 %v2044
  %v2061 = vunpack.c.l.b16 %v2045
  %v2062 = vunpack.c.l.b16 %v2046
  %v2063 = vpack.c.b16 %v2056, %v2055
  %v2064 = vpack.c.b16 %v2058, %v2057
  %v2065 = vpack.c.b16 %v2060, %v2059
  %v2066 = vpack.c.b16 %v2062, %v2061
  %v2072 = vsel %vm1615, %v1567, 0
  %2074 = vmatprep.subr.bf16.mxu0 0
  %2075 = vmatpush1.bf16.msra.mxu0 %v2063
  %2076 = vmatprep.subr.bf16.mxu0 0
  %2077 = vmatpush1.bf16.msra.mxu0 %v2064
  %2078 = vmatprep.subr.bf16.mxu0 0
  %2079 = vmatpush1.bf16.msra.mxu0 %v2065
  %2080 = vmatprep.subr.bf16.mxu0 0
  %2081 = vmatpush1.bf16.msra.mxu0 %v2066
  %2082 = vmatprep.subr.bf16.mxu0 0
  %2083 = vmatpush1.bf16.msra.mxu0 0
  %2084 = vmatprep.subr.bf16.mxu0 0
  %2085 = vmatpush1.bf16.msra.mxu0 0
  %2086 = vmatprep.subr.bf16.mxu0 0
  %2087 = vmatpush1.bf16.msra.mxu0 0
  %2088 = vmatprep.subr.bf16.mxu0 0
  %2089 = vmatpush1.bf16.msra.mxu0 0
  %2090 = vmatprep.subr.bf16.mxu0 0
  %2091 = vmatpush1.bf16.msra.mxu0 0
  %2092 = vmatprep.subr.bf16.mxu0 0
  %2093 = vmatpush1.bf16.msra.mxu0 0
  %2094 = vmatprep.subr.bf16.mxu0 0
  %2095 = vmatpush1.bf16.msra.mxu0 0
  %2096 = vmatprep.subr.bf16.mxu0 0
  %2097 = vmatpush1.bf16.msra.mxu0 0
  %2098 = vmatprep.subr.bf16.mxu0 0
  %2099 = vmatpush1.bf16.msra.mxu0 0
  %2100 = vmatprep.subr.bf16.mxu0 0
  %2101 = vmatpush1.bf16.msra.mxu0 0
  %2102 = vmatprep.subr.bf16.mxu0 0
  %2103 = vmatpush1.bf16.msra.mxu0 0
  %2104 = vmatprep.subr.bf16.mxu0 0
  %2105 = vmatpush1.bf16.msra.mxu0 0
  %2106 = vmatprep.mubr.bf16.mxu0 0
  %2107 = vmatmul.mubr.bf16.gmra.mrb[0].mxu0 %v2072
  %v2108 = vpop.f32.mrb[0].mxu0
  %v2109 = vadd.f32 0.0, %v2108
  %v2110 = vpop.f32.mrb[0].mxu0
  %v2111 = vpop.f32.mrb[0].mxu0
  %v2112 = vpop.f32.mrb[0].mxu0
  %2113 = vdwg.mxu0
  %v2114 = vadd.f32 %v2037, %v2109
  %s2115 = scalar_lea.vmem %s5, 224
  %v2116 = vld [vmem:[%s2115] sm:$0xf]
  %v2117 = vld [vmem:[%s2115 + $0x4] sm:$0xf]
  %v2118 = vld [vmem:[%s2115 + $0x8] sm:$0xf]
  %v2119 = vld [vmem:[%s2115 + $0xc] sm:$0xf]
  %v2120 = vld [vmem:[%s2115 + $0x10] sm:$0xf]
  %v2121 = vld [vmem:[%s2115 + $0x14] sm:$0xf]
  %v2122 = vld [vmem:[%s2115 + $0x18] sm:$0xf]
  %v2123 = vld [vmem:[%s2115 + $0x1c] sm:$0xf]
  %v2125 = vrot.slane %v1567, 1
  %v2134 = vunpack.c.l.b16 %v2116
  %v2135 = vunpack.c.l.b16 %v2117
  %v2136 = vunpack.c.l.b16 %v2118
  %v2137 = vunpack.c.l.b16 %v2119
  %v2138 = vunpack.c.l.b16 %v2120
  %v2139 = vunpack.c.l.b16 %v2121
  %v2140 = vunpack.c.l.b16 %v2122
  %v2141 = vunpack.c.l.b16 %v2123
  %v2142 = vpack.c.b16 %v2135, %v2134
  %v2143 = vpack.c.b16 %v2137, %v2136
  %v2144 = vpack.c.b16 %v2139, %v2138
  %v2145 = vpack.c.b16 %v2141, %v2140
  %v2151 = vsel %vm1615, %v2125, 0
  %2153 = vmatprep.subr.bf16.mxu0 0
  %2154 = vmatpush1.bf16.msra.mxu0 %v2142
  %2155 = vmatprep.subr.bf16.mxu0 0
  %2156 = vmatpush1.bf16.msra.mxu0 %v2143
  %2157 = vmatprep.subr.bf16.mxu0 0
  %2158 = vmatpush1.bf16.msra.mxu0 %v2144
  %2159 = vmatprep.subr.bf16.mxu0 0
  %2160 = vmatpush1.bf16.msra.mxu0 %v2145
  %2161 = vmatprep.subr.bf16.mxu0 0
  %2162 = vmatpush1.bf16.msra.mxu0 0
  %2163 = vmatprep.subr.bf16.mxu0 0
  %2164 = vmatpush1.bf16.msra.mxu0 0
  %2165 = vmatprep.subr.bf16.mxu0 0
  %2166 = vmatpush1.bf16.msra.mxu0 0
  %2167 = vmatprep.subr.bf16.mxu0 0
  %2168 = vmatpush1.bf16.msra.mxu0 0
  %2169 = vmatprep.subr.bf16.mxu0 0
  %2170 = vmatpush1.bf16.msra.mxu0 0
  %2171 = vmatprep.subr.bf16.mxu0 0
  %2172 = vmatpush1.bf16.msra.mxu0 0
  %2173 = vmatprep.subr.bf16.mxu0 0
  %2174 = vmatpush1.bf16.msra.mxu0 0
  %2175 = vmatprep.subr.bf16.mxu0 0
  %2176 = vmatpush1.bf16.msra.mxu0 0
  %2177 = vmatprep.subr.bf16.mxu0 0
  %2178 = vmatpush1.bf16.msra.mxu0 0
  %2179 = vmatprep.subr.bf16.mxu0 0
  %2180 = vmatpush1.bf16.msra.mxu0 0
  %2181 = vmatprep.subr.bf16.mxu0 0
  %2182 = vmatpush1.bf16.msra.mxu0 0
  %2183 = vmatprep.subr.bf16.mxu0 0
  %2184 = vmatpush1.bf16.msra.mxu0 0
  %2185 = vmatprep.mubr.bf16.mxu0 0
  %2186 = vmatmul.mubr.bf16.gmra.mrb[0].mxu0 %v2151
  %v2187 = vpop.f32.mrb[0].mxu0
  %v2188 = vadd.f32 0.0, %v2187
  %v2189 = vpop.f32.mrb[0].mxu0
  %v2190 = vpop.f32.mrb[0].mxu0
  %v2191 = vpop.f32.mrb[0].mxu0
  %2192 = vdwg.mxu0
  %v2193 = vadd.f32 %v2114, %v2188
  %s2194 = scalar_lea.vmem %s5, 256
  %v2195 = vld [vmem:[%s2194] sm:$0xf]
  %v2196 = vld [vmem:[%s2194 + $0x4] sm:$0xf]
  %v2197 = vld [vmem:[%s2194 + $0x8] sm:$0xf]
  %v2198 = vld [vmem:[%s2194 + $0xc] sm:$0xf]
  %v2199 = vld [vmem:[%s2194 + $0x10] sm:$0xf]
  %v2200 = vld [vmem:[%s2194 + $0x14] sm:$0xf]
  %v2201 = vld [vmem:[%s2194 + $0x18] sm:$0xf]
  %v2202 = vld [vmem:[%s2194 + $0x1c] sm:$0xf]
  %v2203 = vrot.slane %v1567, 2
  %v2212 = vunpack.c.l.b16 %v2195
  %v2213 = vunpack.c.l.b16 %v2196
  %v2214 = vunpack.c.l.b16 %v2197
  %v2215 = vunpack.c.l.b16 %v2198
  %v2216 = vunpack.c.l.b16 %v2199
  %v2217 = vunpack.c.l.b16 %v2200
  %v2218 = vunpack.c.l.b16 %v2201
  %v2219 = vunpack.c.l.b16 %v2202
  %v2220 = vpack.c.b16 %v2213, %v2212
  %v2221 = vpack.c.b16 %v2215, %v2214
  %v2222 = vpack.c.b16 %v2217, %v2216
  %v2223 = vpack.c.b16 %v2219, %v2218
  %v2229 = vsel %vm1615, %v2203, 0
  %2231 = vmatprep.subr.bf16.mxu0 0
  %2232 = vmatpush1.bf16.msra.mxu0 %v2220
  %2233 = vmatprep.subr.bf16.mxu0 0
  %2234 = vmatpush1.bf16.msra.mxu0 %v2221
  %2235 = vmatprep.subr.bf16.mxu0 0
  %2236 = vmatpush1.bf16.msra.mxu0 %v2222
  %2237 = vmatprep.subr.bf16.mxu0 0
  %2238 = vmatpush1.bf16.msra.mxu0 %v2223
  %2239 = vmatprep.subr.bf16.mxu0 0
  %2240 = vmatpush1.bf16.msra.mxu0 0
  %2241 = vmatprep.subr.bf16.mxu0 0
  %2242 = vmatpush1.bf16.msra.mxu0 0
  %2243 = vmatprep.subr.bf16.mxu0 0
  %2244 = vmatpush1.bf16.msra.mxu0 0
  %2245 = vmatprep.subr.bf16.mxu0 0
  %2246 = vmatpush1.bf16.msra.mxu0 0
  %2247 = vmatprep.subr.bf16.mxu0 0
  %2248 = vmatpush1.bf16.msra.mxu0 0
  %2249 = vmatprep.subr.bf16.mxu0 0
  %2250 = vmatpush1.bf16.msra.mxu0 0
  %2251 = vmatprep.subr.bf16.mxu0 0
  %2252 = vmatpush1.bf16.msra.mxu0 0
  %2253 = vmatprep.subr.bf16.mxu0 0
  %2254 = vmatpush1.bf16.msra.mxu0 0
  %2255 = vmatprep.subr.bf16.mxu0 0
  %2256 = vmatpush1.bf16.msra.mxu0 0
  %2257 = vmatprep.subr.bf16.mxu0 0
  %2258 = vmatpush1.bf16.msra.mxu0 0
  %2259 = vmatprep.subr.bf16.mxu0 0
  %2260 = vmatpush1.bf16.msra.mxu0 0
  %2261 = vmatprep.subr.bf16.mxu0 0
  %2262 = vmatpush1.bf16.msra.mxu0 0
  %2263 = vmatprep.mubr.bf16.mxu0 0
  %2264 = vmatmul.mubr.bf16.gmra.mrb[0].mxu0 %v2229
  %v2265 = vpop.f32.mrb[0].mxu0
  %v2266 = vadd.f32 0.0, %v2265
  %v2267 = vpop.f32.mrb[0].mxu0
  %v2268 = vpop.f32.mrb[0].mxu0
  %v2269 = vpop.f32.mrb[0].mxu0
  %2270 = vdwg.mxu0
  %v2271 = vadd.f32 %v2193, %v2266
  %s2272 = scalar_lea.vmem %s5, 288
  %v2273 = vld [vmem:[%s2272] sm:$0xf]
  %v2274 = vld [vmem:[%s2272 + $0x4] sm:$0xf]
  %v2275 = vld [vmem:[%s2272 + $0x8] sm:$0xf]
  %v2276 = vld [vmem:[%s2272 + $0xc] sm:$0xf]
  %v2277 = vld [vmem:[%s2272 + $0x10] sm:$0xf]
  %v2278 = vld [vmem:[%s2272 + $0x14] sm:$0xf]
  %v2279 = vld [vmem:[%s2272 + $0x18] sm:$0xf]
  %v2280 = vld [vmem:[%s2272 + $0x1c] sm:$0xf]
  %v2281 = vrot.slane %v1567, 3
  %v2290 = vunpack.c.l.b16 %v2273
  %v2291 = vunpack.c.l.b16 %v2274
  %v2292 = vunpack.c.l.b16 %v2275
  %v2293 = vunpack.c.l.b16 %v2276
  %v2294 = vunpack.c.l.b16 %v2277
  %v2295 = vunpack.c.l.b16 %v2278
  %v2296 = vunpack.c.l.b16 %v2279
  %v2297 = vunpack.c.l.b16 %v2280
  %v2298 = vpack.c.b16 %v2291, %v2290
  %v2299 = vpack.c.b16 %v2293, %v2292
  %v2300 = vpack.c.b16 %v2295, %v2294
  %v2301 = vpack.c.b16 %v2297, %v2296
  %v2307 = vsel %vm1615, %v2281, 0
  %2309 = vmatprep.subr.bf16.mxu0 0
  %2310 = vmatpush1.bf16.msra.mxu0 %v2298
  %2311 = vmatprep.subr.bf16.mxu0 0
  %2312 = vmatpush1.bf16.msra.mxu0 %v2299
  %2313 = vmatprep.subr.bf16.mxu0 0
  %2314 = vmatpush1.bf16.msra.mxu0 %v2300
  %2315 = vmatprep.subr.bf16.mxu0 0
  %2316 = vmatpush1.bf16.msra.mxu0 %v2301
  %2317 = vmatprep.subr.bf16.mxu0 0
  %2318 = vmatpush1.bf16.msra.mxu0 0
  %2319 = vmatprep.subr.bf16.mxu0 0
  %2320 = vmatpush1.bf16.msra.mxu0 0
  %2321 = vmatprep.subr.bf16.mxu0 0
  %2322 = vmatpush1.bf16.msra.mxu0 0
  %2323 = vmatprep.subr.bf16.mxu0 0
  %2324 = vmatpush1.bf16.msra.mxu0 0
  %2325 = vmatprep.subr.bf16.mxu0 0
  %2326 = vmatpush1.bf16.msra.mxu0 0
  %2327 = vmatprep.subr.bf16.mxu0 0
  %2328 = vmatpush1.bf16.msra.mxu0 0
  %2329 = vmatprep.subr.bf16.mxu0 0
  %2330 = vmatpush1.bf16.msra.mxu0 0
  %2331 = vmatprep.subr.bf16.mxu0 0
  %2332 = vmatpush1.bf16.msra.mxu0 0
  %2333 = vmatprep.subr.bf16.mxu0 0
  %2334 = vmatpush1.bf16.msra.mxu0 0
  %2335 = vmatprep.subr.bf16.mxu0 0
  %2336 = vmatpush1.bf16.msra.mxu0 0
  %2337 = vmatprep.subr.bf16.mxu0 0
  %2338 = vmatpush1.bf16.msra.mxu0 0
  %2339 = vmatprep.subr.bf16.mxu0 0
  %2340 = vmatpush1.bf16.msra.mxu0 0
  %2341 = vmatprep.mubr.bf16.mxu0 0
  %2342 = vmatmul.mubr.bf16.gmra.mrb[0].mxu0 %v2307
  %v2343 = vpop.f32.mrb[0].mxu0
  %v2344 = vadd.f32 0.0, %v2343
  %v2345 = vpop.f32.mrb[0].mxu0
  %v2346 = vpop.f32.mrb[0].mxu0
  %v2347 = vpop.f32.mrb[0].mxu0
  %2348 = vdwg.mxu0
  %v2349 = vadd.f32 %v2271, %v2344
  %s2350 = scalar_lea.vmem %s5, 320
  %v2351 = vld [vmem:[%s2350] sm:$0xf]
  %v2352 = vld [vmem:[%s2350 + $0x4] sm:$0xf]
  %v2353 = vld [vmem:[%s2350 + $0x8] sm:$0xf]
  %v2354 = vld [vmem:[%s2350 + $0xc] sm:$0xf]
  %v2355 = vld [vmem:[%s2350 + $0x10] sm:$0xf]
  %v2356 = vld [vmem:[%s2350 + $0x14] sm:$0xf]
  %v2357 = vld [vmem:[%s2350 + $0x18] sm:$0xf]
  %v2358 = vld [vmem:[%s2350 + $0x1c] sm:$0xf]
  %v2359 = vrot.slane %v1567, 4
  %v2368 = vunpack.c.l.b16 %v2351
  %v2369 = vunpack.c.l.b16 %v2352
  %v2370 = vunpack.c.l.b16 %v2353
  %v2371 = vunpack.c.l.b16 %v2354
  %v2372 = vunpack.c.l.b16 %v2355
  %v2373 = vunpack.c.l.b16 %v2356
  %v2374 = vunpack.c.l.b16 %v2357
  %v2375 = vunpack.c.l.b16 %v2358
  %v2376 = vpack.c.b16 %v2369, %v2368
  %v2377 = vpack.c.b16 %v2371, %v2370
  %v2378 = vpack.c.b16 %v2373, %v2372
  %v2379 = vpack.c.b16 %v2375, %v2374
  %v2385 = vsel %vm1615, %v2359, 0
  %2387 = vmatprep.subr.bf16.mxu0 0
  %2388 = vmatpush1.bf16.msra.mxu0 %v2376
  %2389 = vmatprep.subr.bf16.mxu0 0
  %2390 = vmatpush1.bf16.msra.mxu0 %v2377
  %2391 = vmatprep.subr.bf16.mxu0 0
  %2392 = vmatpush1.bf16.msra.mxu0 %v2378
  %2393 = vmatprep.subr.bf16.mxu0 0
  %2394 = vmatpush1.bf16.msra.mxu0 %v2379
  %2395 = vmatprep.subr.bf16.mxu0 0
  %2396 = vmatpush1.bf16.msra.mxu0 0
  %2397 = vmatprep.subr.bf16.mxu0 0
  %2398 = vmatpush1.bf16.msra.mxu0 0
  %2399 = vmatprep.subr.bf16.mxu0 0
  %2400 = vmatpush1.bf16.msra.mxu0 0
  %2401 = vmatprep.subr.bf16.mxu0 0
  %2402 = vmatpush1.bf16.msra.mxu0 0
  %2403 = vmatprep.subr.bf16.mxu0 0
  %2404 = vmatpush1.bf16.msra.mxu0 0
  %2405 = vmatprep.subr.bf16.mxu0 0
  %2406 = vmatpush1.bf16.msra.mxu0 0
  %2407 = vmatprep.subr.bf16.mxu0 0
  %2408 = vmatpush1.bf16.msra.mxu0 0
  %2409 = vmatprep.subr.bf16.mxu0 0
  %2410 = vmatpush1.bf16.msra.mxu0 0
  %2411 = vmatprep.subr.bf16.mxu0 0
  %2412 = vmatpush1.bf16.msra.mxu0 0
  %2413 = vmatprep.subr.bf16.mxu0 0
  %2414 = vmatpush1.bf16.msra.mxu0 0
  %2415 = vmatprep.subr.bf16.mxu0 0
  %2416 = vmatpush1.bf16.msra.mxu0 0
  %2417 = vmatprep.subr.bf16.mxu0 0
  %2418 = vmatpush1.bf16.msra.mxu0 0
  %2419 = vmatprep.mubr.bf16.mxu0 0
  %2420 = vmatmul.mubr.bf16.gmra.mrb[0].mxu0 %v2385
  %v2421 = vpop.f32.mrb[0].mxu0
  %v2422 = vadd.f32 0.0, %v2421
  %v2423 = vpop.f32.mrb[0].mxu0
  %v2424 = vpop.f32.mrb[0].mxu0
  %v2425 = vpop.f32.mrb[0].mxu0
  %2426 = vdwg.mxu0
  %v2427 = vadd.f32 %v2349, %v2422
  %s2428 = scalar_lea.vmem %s5, 352
  %v2429 = vld [vmem:[%s2428] sm:$0xf]
  %v2430 = vld [vmem:[%s2428 + $0x4] sm:$0xf]
  %v2431 = vld [vmem:[%s2428 + $0x8] sm:$0xf]
  %v2432 = vld [vmem:[%s2428 + $0xc] sm:$0xf]
  %v2433 = vld [vmem:[%s2428 + $0x10] sm:$0xf]
  %v2434 = vld [vmem:[%s2428 + $0x14] sm:$0xf]
  %v2435 = vld [vmem:[%s2428 + $0x18] sm:$0xf]
  %v2436 = vld [vmem:[%s2428 + $0x1c] sm:$0xf]
  %v2437 = vrot.slane %v1567, 5
  %v2446 = vunpack.c.l.b16 %v2429
  %v2447 = vunpack.c.l.b16 %v2430
  %v2448 = vunpack.c.l.b16 %v2431
  %v2449 = vunpack.c.l.b16 %v2432
  %v2450 = vunpack.c.l.b16 %v2433
  %v2451 = vunpack.c.l.b16 %v2434
  %v2452 = vunpack.c.l.b16 %v2435
  %v2453 = vunpack.c.l.b16 %v2436
  %v2454 = vpack.c.b16 %v2447, %v2446
  %v2455 = vpack.c.b16 %v2449, %v2448
  %v2456 = vpack.c.b16 %v2451, %v2450
  %v2457 = vpack.c.b16 %v2453, %v2452
  %v2463 = vsel %vm1615, %v2437, 0
  %2465 = vmatprep.subr.bf16.mxu0 0
  %2466 = vmatpush1.bf16.msra.mxu0 %v2454
  %2467 = vmatprep.subr.bf16.mxu0 0
  %2468 = vmatpush1.bf16.msra.mxu0 %v2455
  %2469 = vmatprep.subr.bf16.mxu0 0
  %2470 = vmatpush1.bf16.msra.mxu0 %v2456
  %2471 = vmatprep.subr.bf16.mxu0 0
  %2472 = vmatpush1.bf16.msra.mxu0 %v2457
  %2473 = vmatprep.subr.bf16.mxu0 0
  %2474 = vmatpush1.bf16.msra.mxu0 0
  %2475 = vmatprep.subr.bf16.mxu0 0
  %2476 = vmatpush1.bf16.msra.mxu0 0
  %2477 = vmatprep.subr.bf16.mxu0 0
  %2478 = vmatpush1.bf16.msra.mxu0 0
  %2479 = vmatprep.subr.bf16.mxu0 0
  %2480 = vmatpush1.bf16.msra.mxu0 0
  %2481 = vmatprep.subr.bf16.mxu0 0
  %2482 = vmatpush1.bf16.msra.mxu0 0
  %2483 = vmatprep.subr.bf16.mxu0 0
  %2484 = vmatpush1.bf16.msra.mxu0 0
  %2485 = vmatprep.subr.bf16.mxu0 0
  %2486 = vmatpush1.bf16.msra.mxu0 0
  %2487 = vmatprep.subr.bf16.mxu0 0
  %2488 = vmatpush1.bf16.msra.mxu0 0
  %2489 = vmatprep.subr.bf16.mxu0 0
  %2490 = vmatpush1.bf16.msra.mxu0 0
  %2491 = vmatprep.subr.bf16.mxu0 0
  %2492 = vmatpush1.bf16.msra.mxu0 0
  %2493 = vmatprep.subr.bf16.mxu0 0
  %2494 = vmatpush1.bf16.msra.mxu0 0
  %2495 = vmatprep.subr.bf16.mxu0 0
  %2496 = vmatpush1.bf16.msra.mxu0 0
  %2497 = vmatprep.mubr.bf16.mxu0 0
  %2498 = vmatmul.mubr.bf16.gmra.mrb[0].mxu0 %v2463
  %v2499 = vpop.f32.mrb[0].mxu0
  %v2500 = vadd.f32 0.0, %v2499
  %v2501 = vpop.f32.mrb[0].mxu0
  %v2502 = vpop.f32.mrb[0].mxu0
  %v2503 = vpop.f32.mrb[0].mxu0
  %2504 = vdwg.mxu0
  %v2505 = vadd.f32 %v2427, %v2500
  %s2506 = scalar_lea.vmem %s5, 384
  %v2507 = vld [vmem:[%s2506] sm:$0xf]
  %v2508 = vld [vmem:[%s2506 + $0x4] sm:$0xf]
  %v2509 = vld [vmem:[%s2506 + $0x8] sm:$0xf]
  %v2510 = vld [vmem:[%s2506 + $0xc] sm:$0xf]
  %v2511 = vld [vmem:[%s2506 + $0x10] sm:$0xf]
  %v2512 = vld [vmem:[%s2506 + $0x14] sm:$0xf]
  %v2513 = vld [vmem:[%s2506 + $0x18] sm:$0xf]
  %v2514 = vld [vmem:[%s2506 + $0x1c] sm:$0xf]
  %v2523 = vunpack.c.l.b16 %v2507
  %v2524 = vunpack.c.l.b16 %v2508
  %v2525 = vunpack.c.l.b16 %v2509
  %v2526 = vunpack.c.l.b16 %v2510
  %v2527 = vunpack.c.l.b16 %v2511
  %v2528 = vunpack.c.l.b16 %v2512
  %v2529 = vunpack.c.l.b16 %v2513
  %v2530 = vunpack.c.l.b16 %v2514
  %v2531 = vpack.c.b16 %v2524, %v2523
  %v2532 = vpack.c.b16 %v2526, %v2525
  %v2533 = vpack.c.b16 %v2528, %v2527
  %v2534 = vpack.c.b16 %v2530, %v2529
  %v2540 = vsel %vm1615, %v1568, 0
  %2542 = vmatprep.subr.bf16.mxu0 0
  %2543 = vmatpush1.bf16.msra.mxu0 %v2531
  %2544 = vmatprep.subr.bf16.mxu0 0
  %2545 = vmatpush1.bf16.msra.mxu0 %v2532
  %2546 = vmatprep.subr.bf16.mxu0 0
  %2547 = vmatpush1.bf16.msra.mxu0 %v2533
  %2548 = vmatprep.subr.bf16.mxu0 0
  %2549 = vmatpush1.bf16.msra.mxu0 %v2534
  %2550 = vmatprep.subr.bf16.mxu0 0
  %2551 = vmatpush1.bf16.msra.mxu0 0
  %2552 = vmatprep.subr.bf16.mxu0 0
  %2553 = vmatpush1.bf16.msra.mxu0 0
  %2554 = vmatprep.subr.bf16.mxu0 0
  %2555 = vmatpush1.bf16.msra.mxu0 0
  %2556 = vmatprep.subr.bf16.mxu0 0
  %2557 = vmatpush1.bf16.msra.mxu0 0
  %2558 = vmatprep.subr.bf16.mxu0 0
  %2559 = vmatpush1.bf16.msra.mxu0 0
  %2560 = vmatprep.subr.bf16.mxu0 0
  %2561 = vmatpush1.bf16.msra.mxu0 0
  %2562 = vmatprep.subr.bf16.mxu0 0
  %2563 = vmatpush1.bf16.msra.mxu0 0
  %2564 = vmatprep.subr.bf16.mxu0 0
  %2565 = vmatpush1.bf16.msra.mxu0 0
  %2566 = vmatprep.subr.bf16.mxu0 0
  %2567 = vmatpush1.bf16.msra.mxu0 0
  %2568 = vmatprep.subr.bf16.mxu0 0
  %2569 = vmatpush1.bf16.msra.mxu0 0
  %2570 = vmatprep.subr.bf16.mxu0 0
  %2571 = vmatpush1.bf16.msra.mxu0 0
  %2572 = vmatprep.subr.bf16.mxu0 0
  %2573 = vmatpush1.bf16.msra.mxu0 0
  %2574 = vmatprep.mubr.bf16.mxu0 0
  %2575 = vmatmul.mubr.bf16.gmra.mrb[0].mxu0 %v2540
  %v2576 = vpop.f32.mrb[0].mxu0
  %v2577 = vadd.f32 0.0, %v2576
  %v2578 = vpop.f32.mrb[0].mxu0
  %v2579 = vpop.f32.mrb[0].mxu0
  %v2580 = vpop.f32.mrb[0].mxu0
  %2581 = vdwg.mxu0
  %v2582 = vadd.f32 %v2505, %v2577
  %s2583 = scalar_lea.vmem %s5, 416
  %v2584 = vld [vmem:[%s2583] sm:$0xf]
  %v2585 = vld [vmem:[%s2583 + $0x4] sm:$0xf]
  %v2586 = vld [vmem:[%s2583 + $0x8] sm:$0xf]
  %v2587 = vld [vmem:[%s2583 + $0xc] sm:$0xf]
  %v2588 = vld [vmem:[%s2583 + $0x10] sm:$0xf]
  %v2589 = vld [vmem:[%s2583 + $0x14] sm:$0xf]
  %v2590 = vld [vmem:[%s2583 + $0x18] sm:$0xf]
  %v2591 = vld [vmem:[%s2583 + $0x1c] sm:$0xf]
  %v2593 = vrot.slane %v1568, 1
  %v2602 = vunpack.c.l.b16 %v2584
  %v2603 = vunpack.c.l.b16 %v2585
  %v2604 = vunpack.c.l.b16 %v2586
  %v2605 = vunpack.c.l.b16 %v2587
  %v2606 = vunpack.c.l.b16 %v2588
  %v2607 = vunpack.c.l.b16 %v2589
  %v2608 = vunpack.c.l.b16 %v2590
  %v2609 = vunpack.c.l.b16 %v2591
  %v2610 = vpack.c.b16 %v2603, %v2602
  %v2611 = vpack.c.b16 %v2605, %v2604
  %v2612 = vpack.c.b16 %v2607, %v2606
  %v2613 = vpack.c.b16 %v2609, %v2608
  %v2619 = vsel %vm1615, %v2593, 0
  %2621 = vmatprep.subr.bf16.mxu0 0
  %2622 = vmatpush1.bf16.msra.mxu0 %v2610
  %2623 = vmatprep.subr.bf16.mxu0 0
  %2624 = vmatpush1.bf16.msra.mxu0 %v2611
  %2625 = vmatprep.subr.bf16.mxu0 0
  %2626 = vmatpush1.bf16.msra.mxu0 %v2612
  %2627 = vmatprep.subr.bf16.mxu0 0
  %2628 = vmatpush1.bf16.msra.mxu0 %v2613
  %2629 = vmatprep.subr.bf16.mxu0 0
  %2630 = vmatpush1.bf16.msra.mxu0 0
  %2631 = vmatprep.subr.bf16.mxu0 0
  %2632 = vmatpush1.bf16.msra.mxu0 0
  %2633 = vmatprep.subr.bf16.mxu0 0
  %2634 = vmatpush1.bf16.msra.mxu0 0
  %2635 = vmatprep.subr.bf16.mxu0 0
  %2636 = vmatpush1.bf16.msra.mxu0 0
  %2637 = vmatprep.subr.bf16.mxu0 0
  %2638 = vmatpush1.bf16.msra.mxu0 0
  %2639 = vmatprep.subr.bf16.mxu0 0
  %2640 = vmatpush1.bf16.msra.mxu0 0
  %2641 = vmatprep.subr.bf16.mxu0 0
  %2642 = vmatpush1.bf16.msra.mxu0 0
  %2643 = vmatprep.subr.bf16.mxu0 0
  %2644 = vmatpush1.bf16.msra.mxu0 0
  %2645 = vmatprep.subr.bf16.mxu0 0
  %2646 = vmatpush1.bf16.msra.mxu0 0
  %2647 = vmatprep.subr.bf16.mxu0 0
  %2648 = vmatpush1.bf16.msra.mxu0 0
  %2649 = vmatprep.subr.bf16.mxu0 0
  %2650 = vmatpush1.bf16.msra.mxu0 0
  %2651 = vmatprep.subr.bf16.mxu0 0
  %2652 = vmatpush1.bf16.msra.mxu0 0
  %2653 = vmatprep.mubr.bf16.mxu0 0
  %2654 = vmatmul.mubr.bf16.gmra.mrb[0].mxu0 %v2619
  %v2655 = vpop.f32.mrb[0].mxu0
  %v2656 = vadd.f32 0.0, %v2655
  %v2657 = vpop.f32.mrb[0].mxu0
  %v2658 = vpop.f32.mrb[0].mxu0
  %v2659 = vpop.f32.mrb[0].mxu0
  %2660 = vdwg.mxu0
  %v2661 = vadd.f32 %v2582, %v2656
  %s2662 = scalar_lea.vmem %s5, 448
  %v2663 = vld [vmem:[%s2662] sm:$0xf]
  %v2664 = vld [vmem:[%s2662 + $0x4] sm:$0xf]
  %v2665 = vld [vmem:[%s2662 + $0x8] sm:$0xf]
  %v2666 = vld [vmem:[%s2662 + $0xc] sm:$0xf]
  %v2667 = vld [vmem:[%s2662 + $0x10] sm:$0xf]
  %v2668 = vld [vmem:[%s2662 + $0x14] sm:$0xf]
  %v2669 = vld [vmem:[%s2662 + $0x18] sm:$0xf]
  %v2670 = vld [vmem:[%s2662 + $0x1c] sm:$0xf]
  %v2671 = vrot.slane %v1568, 2
  %v2680 = vunpack.c.l.b16 %v2663
  %v2681 = vunpack.c.l.b16 %v2664
  %v2682 = vunpack.c.l.b16 %v2665
  %v2683 = vunpack.c.l.b16 %v2666
  %v2684 = vunpack.c.l.b16 %v2667
  %v2685 = vunpack.c.l.b16 %v2668
  %v2686 = vunpack.c.l.b16 %v2669
  %v2687 = vunpack.c.l.b16 %v2670
  %v2688 = vpack.c.b16 %v2681, %v2680
  %v2689 = vpack.c.b16 %v2683, %v2682
  %v2690 = vpack.c.b16 %v2685, %v2684
  %v2691 = vpack.c.b16 %v2687, %v2686
  %v2697 = vsel %vm1615, %v2671, 0
  %2699 = vmatprep.subr.bf16.mxu0 0
  %2700 = vmatpush1.bf16.msra.mxu0 %v2688
  %2701 = vmatprep.subr.bf16.mxu0 0
  %2702 = vmatpush1.bf16.msra.mxu0 %v2689
  %2703 = vmatprep.subr.bf16.mxu0 0
  %2704 = vmatpush1.bf16.msra.mxu0 %v2690
  %2705 = vmatprep.subr.bf16.mxu0 0
  %2706 = vmatpush1.bf16.msra.mxu0 %v2691
  %2707 = vmatprep.subr.bf16.mxu0 0
  %2708 = vmatpush1.bf16.msra.mxu0 0
  %2709 = vmatprep.subr.bf16.mxu0 0
  %2710 = vmatpush1.bf16.msra.mxu0 0
  %2711 = vmatprep.subr.bf16.mxu0 0
  %2712 = vmatpush1.bf16.msra.mxu0 0
  %2713 = vmatprep.subr.bf16.mxu0 0
  %2714 = vmatpush1.bf16.msra.mxu0 0
  %2715 = vmatprep.subr.bf16.mxu0 0
  %2716 = vmatpush1.bf16.msra.mxu0 0
  %2717 = vmatprep.subr.bf16.mxu0 0
  %2718 = vmatpush1.bf16.msra.mxu0 0
  %2719 = vmatprep.subr.bf16.mxu0 0
  %2720 = vmatpush1.bf16.msra.mxu0 0
  %2721 = vmatprep.subr.bf16.mxu0 0
  %2722 = vmatpush1.bf16.msra.mxu0 0
  %2723 = vmatprep.subr.bf16.mxu0 0
  %2724 = vmatpush1.bf16.msra.mxu0 0
  %2725 = vmatprep.subr.bf16.mxu0 0
  %2726 = vmatpush1.bf16.msra.mxu0 0
  %2727 = vmatprep.subr.bf16.mxu0 0
  %2728 = vmatpush1.bf16.msra.mxu0 0
  %2729 = vmatprep.subr.bf16.mxu0 0
  %2730 = vmatpush1.bf16.msra.mxu0 0
  %2731 = vmatprep.mubr.bf16.mxu0 0
  %2732 = vmatmul.mubr.bf16.gmra.mrb[0].mxu0 %v2697
  %v2733 = vpop.f32.mrb[0].mxu0
  %v2734 = vadd.f32 0.0, %v2733
  %v2735 = vpop.f32.mrb[0].mxu0
  %v2736 = vpop.f32.mrb[0].mxu0
  %v2737 = vpop.f32.mrb[0].mxu0
  %2738 = vdwg.mxu0
  %v2739 = vadd.f32 %v2661, %v2734
  %s2740 = scalar_lea.vmem %s5, 480
  %v2741 = vld [vmem:[%s2740] sm:$0xf]
  %v2742 = vld [vmem:[%s2740 + $0x4] sm:$0xf]
  %v2743 = vld [vmem:[%s2740 + $0x8] sm:$0xf]
  %v2744 = vld [vmem:[%s2740 + $0xc] sm:$0xf]
  %v2745 = vld [vmem:[%s2740 + $0x10] sm:$0xf]
  %v2746 = vld [vmem:[%s2740 + $0x14] sm:$0xf]
  %v2747 = vld [vmem:[%s2740 + $0x18] sm:$0xf]
  %v2748 = vld [vmem:[%s2740 + $0x1c] sm:$0xf]
  %v2749 = vrot.slane %v1568, 3
  %v2758 = vunpack.c.l.b16 %v2741
  %v2759 = vunpack.c.l.b16 %v2742
  %v2760 = vunpack.c.l.b16 %v2743
  %v2761 = vunpack.c.l.b16 %v2744
  %v2762 = vunpack.c.l.b16 %v2745
  %v2763 = vunpack.c.l.b16 %v2746
  %v2764 = vunpack.c.l.b16 %v2747
  %v2765 = vunpack.c.l.b16 %v2748
  %v2766 = vpack.c.b16 %v2759, %v2758
  %v2767 = vpack.c.b16 %v2761, %v2760
  %v2768 = vpack.c.b16 %v2763, %v2762
  %v2769 = vpack.c.b16 %v2765, %v2764
  %v2775 = vsel %vm1615, %v2749, 0
  %2777 = vmatprep.subr.bf16.mxu0 0
  %2778 = vmatpush1.bf16.msra.mxu0 %v2766
  %2779 = vmatprep.subr.bf16.mxu0 0
  %2780 = vmatpush1.bf16.msra.mxu0 %v2767
  %2781 = vmatprep.subr.bf16.mxu0 0
  %2782 = vmatpush1.bf16.msra.mxu0 %v2768
  %2783 = vmatprep.subr.bf16.mxu0 0
  %2784 = vmatpush1.bf16.msra.mxu0 %v2769
  %2785 = vmatprep.subr.bf16.mxu0 0
  %2786 = vmatpush1.bf16.msra.mxu0 0
  %2787 = vmatprep.subr.bf16.mxu0 0
  %2788 = vmatpush1.bf16.msra.mxu0 0
  %2789 = vmatprep.subr.bf16.mxu0 0
  %2790 = vmatpush1.bf16.msra.mxu0 0
  %2791 = vmatprep.subr.bf16.mxu0 0
  %2792 = vmatpush1.bf16.msra.mxu0 0
  %2793 = vmatprep.subr.bf16.mxu0 0
  %2794 = vmatpush1.bf16.msra.mxu0 0
  %2795 = vmatprep.subr.bf16.mxu0 0
  %2796 = vmatpush1.bf16.msra.mxu0 0
  %2797 = vmatprep.subr.bf16.mxu0 0
  %2798 = vmatpush1.bf16.msra.mxu0 0
  %2799 = vmatprep.subr.bf16.mxu0 0
  %2800 = vmatpush1.bf16.msra.mxu0 0
  %2801 = vmatprep.subr.bf16.mxu0 0
  %2802 = vmatpush1.bf16.msra.mxu0 0
  %2803 = vmatprep.subr.bf16.mxu0 0
  %2804 = vmatpush1.bf16.msra.mxu0 0
  %2805 = vmatprep.subr.bf16.mxu0 0
  %2806 = vmatpush1.bf16.msra.mxu0 0
  %2807 = vmatprep.subr.bf16.mxu0 0
  %2808 = vmatpush1.bf16.msra.mxu0 0
  %2809 = vmatprep.mubr.bf16.mxu0 0
  %2810 = vmatmul.mubr.bf16.gmra.mrb[0].mxu0 %v2775
  %v2811 = vpop.f32.mrb[0].mxu0
  %v2812 = vadd.f32 0.0, %v2811
  %v2813 = vpop.f32.mrb[0].mxu0
  %v2814 = vpop.f32.mrb[0].mxu0
  %v2815 = vpop.f32.mrb[0].mxu0
  %2816 = vdwg.mxu0
  %v2817 = vadd.f32 %v2739, %v2812
  %s2818 = scalar_lea.vmem %s5, 512
  %v2819 = vld [vmem:[%s2818] sm:$0xf]
  %v2820 = vld [vmem:[%s2818 + $0x4] sm:$0xf]
  %v2821 = vld [vmem:[%s2818 + $0x8] sm:$0xf]
  %v2822 = vld [vmem:[%s2818 + $0xc] sm:$0xf]
  %v2823 = vld [vmem:[%s2818 + $0x10] sm:$0xf]
  %v2824 = vld [vmem:[%s2818 + $0x14] sm:$0xf]
  %v2825 = vld [vmem:[%s2818 + $0x18] sm:$0xf]
  %v2826 = vld [vmem:[%s2818 + $0x1c] sm:$0xf]
  %v2827 = vrot.slane %v1568, 4
  %v2836 = vunpack.c.l.b16 %v2819
  %v2837 = vunpack.c.l.b16 %v2820
  %v2838 = vunpack.c.l.b16 %v2821
  %v2839 = vunpack.c.l.b16 %v2822
  %v2840 = vunpack.c.l.b16 %v2823
  %v2841 = vunpack.c.l.b16 %v2824
  %v2842 = vunpack.c.l.b16 %v2825
  %v2843 = vunpack.c.l.b16 %v2826
  %v2844 = vpack.c.b16 %v2837, %v2836
  %v2845 = vpack.c.b16 %v2839, %v2838
  %v2846 = vpack.c.b16 %v2841, %v2840
  %v2847 = vpack.c.b16 %v2843, %v2842
  %v2853 = vsel %vm1615, %v2827, 0
  %2855 = vmatprep.subr.bf16.mxu0 0
  %2856 = vmatpush1.bf16.msra.mxu0 %v2844
  %2857 = vmatprep.subr.bf16.mxu0 0
  %2858 = vmatpush1.bf16.msra.mxu0 %v2845
  %2859 = vmatprep.subr.bf16.mxu0 0
  %2860 = vmatpush1.bf16.msra.mxu0 %v2846
  %2861 = vmatprep.subr.bf16.mxu0 0
  %2862 = vmatpush1.bf16.msra.mxu0 %v2847
  %2863 = vmatprep.subr.bf16.mxu0 0
  %2864 = vmatpush1.bf16.msra.mxu0 0
  %2865 = vmatprep.subr.bf16.mxu0 0
  %2866 = vmatpush1.bf16.msra.mxu0 0
  %2867 = vmatprep.subr.bf16.mxu0 0
  %2868 = vmatpush1.bf16.msra.mxu0 0
  %2869 = vmatprep.subr.bf16.mxu0 0
  %2870 = vmatpush1.bf16.msra.mxu0 0
  %2871 = vmatprep.subr.bf16.mxu0 0
  %2872 = vmatpush1.bf16.msra.mxu0 0
  %2873 = vmatprep.subr.bf16.mxu0 0
  %2874 = vmatpush1.bf16.msra.mxu0 0
  %2875 = vmatprep.subr.bf16.mxu0 0
  %2876 = vmatpush1.bf16.msra.mxu0 0
  %2877 = vmatprep.subr.bf16.mxu0 0
  %2878 = vmatpush1.bf16.msra.mxu0 0
  %2879 = vmatprep.subr.bf16.mxu0 0
  %2880 = vmatpush1.bf16.msra.mxu0 0
  %2881 = vmatprep.subr.bf16.mxu0 0
  %2882 = vmatpush1.bf16.msra.mxu0 0
  %2883 = vmatprep.subr.bf16.mxu0 0
  %2884 = vmatpush1.bf16.msra.mxu0 0
  %2885 = vmatprep.subr.bf16.mxu0 0
  %2886 = vmatpush1.bf16.msra.mxu0 0
  %2887 = vmatprep.mubr.bf16.mxu0 0
  %2888 = vmatmul.mubr.bf16.gmra.mrb[0].mxu0 %v2853
  %v2889 = vpop.f32.mrb[0].mxu0
  %v2890 = vadd.f32 0.0, %v2889
  %v2891 = vpop.f32.mrb[0].mxu0
  %v2892 = vpop.f32.mrb[0].mxu0
  %v2893 = vpop.f32.mrb[0].mxu0
  %2894 = vdwg.mxu0
  %v2895 = vadd.f32 %v2817, %v2890
  %s2896 = scalar_lea.vmem %s5, 544
  %v2897 = vld [vmem:[%s2896] sm:$0xf]
  %v2898 = vld [vmem:[%s2896 + $0x4] sm:$0xf]
  %v2899 = vld [vmem:[%s2896 + $0x8] sm:$0xf]
  %v2900 = vld [vmem:[%s2896 + $0xc] sm:$0xf]
  %v2901 = vld [vmem:[%s2896 + $0x10] sm:$0xf]
  %v2902 = vld [vmem:[%s2896 + $0x14] sm:$0xf]
  %v2903 = vld [vmem:[%s2896 + $0x18] sm:$0xf]
  %v2904 = vld [vmem:[%s2896 + $0x1c] sm:$0xf]
  %v2905 = vrot.slane %v1568, 5
  %v2914 = vunpack.c.l.b16 %v2897
  %v2915 = vunpack.c.l.b16 %v2898
  %v2916 = vunpack.c.l.b16 %v2899
  %v2917 = vunpack.c.l.b16 %v2900
  %v2918 = vunpack.c.l.b16 %v2901
  %v2919 = vunpack.c.l.b16 %v2902
  %v2920 = vunpack.c.l.b16 %v2903
  %v2921 = vunpack.c.l.b16 %v2904
  %v2922 = vpack.c.b16 %v2915, %v2914
  %v2923 = vpack.c.b16 %v2917, %v2916
  %v2924 = vpack.c.b16 %v2919, %v2918
  %v2925 = vpack.c.b16 %v2921, %v2920
  %v2931 = vsel %vm1615, %v2905, 0
  %2933 = vmatprep.subr.bf16.mxu0 0
  %2934 = vmatpush1.bf16.msra.mxu0 %v2922
  %2935 = vmatprep.subr.bf16.mxu0 0
  %2936 = vmatpush1.bf16.msra.mxu0 %v2923
  %2937 = vmatprep.subr.bf16.mxu0 0
  %2938 = vmatpush1.bf16.msra.mxu0 %v2924
  %2939 = vmatprep.subr.bf16.mxu0 0
  %2940 = vmatpush1.bf16.msra.mxu0 %v2925
  %2941 = vmatprep.subr.bf16.mxu0 0
  %2942 = vmatpush1.bf16.msra.mxu0 0
  %2943 = vmatprep.subr.bf16.mxu0 0
  %2944 = vmatpush1.bf16.msra.mxu0 0
  %2945 = vmatprep.subr.bf16.mxu0 0
  %2946 = vmatpush1.bf16.msra.mxu0 0
  %2947 = vmatprep.subr.bf16.mxu0 0
  %2948 = vmatpush1.bf16.msra.mxu0 0
  %2949 = vmatprep.subr.bf16.mxu0 0
  %2950 = vmatpush1.bf16.msra.mxu0 0
  %2951 = vmatprep.subr.bf16.mxu0 0
  %2952 = vmatpush1.bf16.msra.mxu0 0
  %2953 = vmatprep.subr.bf16.mxu0 0
  %2954 = vmatpush1.bf16.msra.mxu0 0
  %2955 = vmatprep.subr.bf16.mxu0 0
  %2956 = vmatpush1.bf16.msra.mxu0 0
  %2957 = vmatprep.subr.bf16.mxu0 0
  %2958 = vmatpush1.bf16.msra.mxu0 0
  %2959 = vmatprep.subr.bf16.mxu0 0
  %2960 = vmatpush1.bf16.msra.mxu0 0
  %2961 = vmatprep.subr.bf16.mxu0 0
  %2962 = vmatpush1.bf16.msra.mxu0 0
  %2963 = vmatprep.subr.bf16.mxu0 0
  %2964 = vmatpush1.bf16.msra.mxu0 0
  %2965 = vmatprep.mubr.bf16.mxu0 0
  %2966 = vmatmul.mubr.bf16.gmra.mrb[0].mxu0 %v2931
  %v2967 = vpop.f32.mrb[0].mxu0
  %v2968 = vadd.f32 0.0, %v2967
  %v2969 = vpop.f32.mrb[0].mxu0
  %v2970 = vpop.f32.mrb[0].mxu0
  %v2971 = vpop.f32.mrb[0].mxu0
  %2972 = vdwg.mxu0
  %v2973 = vadd.f32 %v2895, %v2968
  %s2974 = scalar_lea.vmem %s5, 576
  %v2975 = vld [vmem:[%s2974] sm:$0xf]
  %v2976 = vld [vmem:[%s2974 + $0x4] sm:$0xf]
  %v2977 = vld [vmem:[%s2974 + $0x8] sm:$0xf]
  %v2978 = vld [vmem:[%s2974 + $0xc] sm:$0xf]
  %v2979 = vld [vmem:[%s2974 + $0x10] sm:$0xf]
  %v2980 = vld [vmem:[%s2974 + $0x14] sm:$0xf]
  %v2981 = vld [vmem:[%s2974 + $0x18] sm:$0xf]
  %v2982 = vld [vmem:[%s2974 + $0x1c] sm:$0xf]
  %v2991 = vunpack.c.l.b16 %v2975
  %v2992 = vunpack.c.l.b16 %v2976
  %v2993 = vunpack.c.l.b16 %v2977
  %v2994 = vunpack.c.l.b16 %v2978
  %v2995 = vunpack.c.l.b16 %v2979
  %v2996 = vunpack.c.l.b16 %v2980
  %v2997 = vunpack.c.l.b16 %v2981
  %v2998 = vunpack.c.l.b16 %v2982
  %v2999 = vpack.c.b16 %v2992, %v2991
  %v3000 = vpack.c.b16 %v2994, %v2993
  %v3001 = vpack.c.b16 %v2996, %v2995
  %v3002 = vpack.c.b16 %v2998, %v2997
  %v3008 = vsel %vm1615, %v1569, 0
  %3010 = vmatprep.subr.bf16.mxu0 0
  %3011 = vmatpush1.bf16.msra.mxu0 %v2999
  %3012 = vmatprep.subr.bf16.mxu0 0
  %3013 = vmatpush1.bf16.msra.mxu0 %v3000
  %3014 = vmatprep.subr.bf16.mxu0 0
  %3015 = vmatpush1.bf16.msra.mxu0 %v3001
  %3016 = vmatprep.subr.bf16.mxu0 0
  %3017 = vmatpush1.bf16.msra.mxu0 %v3002
  %3018 = vmatprep.subr.bf16.mxu0 0
  %3019 = vmatpush1.bf16.msra.mxu0 0
  %3020 = vmatprep.subr.bf16.mxu0 0
  %3021 = vmatpush1.bf16.msra.mxu0 0
  %3022 = vmatprep.subr.bf16.mxu0 0
  %3023 = vmatpush1.bf16.msra.mxu0 0
  %3024 = vmatprep.subr.bf16.mxu0 0
  %3025 = vmatpush1.bf16.msra.mxu0 0
  %3026 = vmatprep.subr.bf16.mxu0 0
  %3027 = vmatpush1.bf16.msra.mxu0 0
  %3028 = vmatprep.subr.bf16.mxu0 0
  %3029 = vmatpush1.bf16.msra.mxu0 0
  %3030 = vmatprep.subr.bf16.mxu0 0
  %3031 = vmatpush1.bf16.msra.mxu0 0
  %3032 = vmatprep.subr.bf16.mxu0 0
  %3033 = vmatpush1.bf16.msra.mxu0 0
  %3034 = vmatprep.subr.bf16.mxu0 0
  %3035 = vmatpush1.bf16.msra.mxu0 0
  %3036 = vmatprep.subr.bf16.mxu0 0
  %3037 = vmatpush1.bf16.msra.mxu0 0
  %3038 = vmatprep.subr.bf16.mxu0 0
  %3039 = vmatpush1.bf16.msra.mxu0 0
  %3040 = vmatprep.subr.bf16.mxu0 0
  %3041 = vmatpush1.bf16.msra.mxu0 0
  %3042 = vmatprep.mubr.bf16.mxu0 0
  %3043 = vmatmul.mubr.bf16.gmra.mrb[0].mxu0 %v3008
  %v3044 = vpop.f32.mrb[0].mxu0
  %v3045 = vadd.f32 0.0, %v3044
  %v3046 = vpop.f32.mrb[0].mxu0
  %v3047 = vpop.f32.mrb[0].mxu0
  %v3048 = vpop.f32.mrb[0].mxu0
  %3049 = vdwg.mxu0
  %v3050 = vadd.f32 %v2973, %v3045
  %s3051 = scalar_lea.vmem %s5, 608
  %v3052 = vld [vmem:[%s3051] sm:$0xf]
  %v3053 = vld [vmem:[%s3051 + $0x4] sm:$0xf]
  %v3054 = vld [vmem:[%s3051 + $0x8] sm:$0xf]
  %v3055 = vld [vmem:[%s3051 + $0xc] sm:$0xf]
  %v3056 = vld [vmem:[%s3051 + $0x10] sm:$0xf]
  %v3057 = vld [vmem:[%s3051 + $0x14] sm:$0xf]
  %v3058 = vld [vmem:[%s3051 + $0x18] sm:$0xf]
  %v3059 = vld [vmem:[%s3051 + $0x1c] sm:$0xf]
  %v3061 = vrot.slane %v1569, 1
  %v3070 = vunpack.c.l.b16 %v3052
  %v3071 = vunpack.c.l.b16 %v3053
  %v3072 = vunpack.c.l.b16 %v3054
  %v3073 = vunpack.c.l.b16 %v3055
  %v3074 = vunpack.c.l.b16 %v3056
  %v3075 = vunpack.c.l.b16 %v3057
  %v3076 = vunpack.c.l.b16 %v3058
  %v3077 = vunpack.c.l.b16 %v3059
  %v3078 = vpack.c.b16 %v3071, %v3070
  %v3079 = vpack.c.b16 %v3073, %v3072
  %v3080 = vpack.c.b16 %v3075, %v3074
  %v3081 = vpack.c.b16 %v3077, %v3076
  %v3087 = vsel %vm1615, %v3061, 0
  %3089 = vmatprep.subr.bf16.mxu0 0
  %3090 = vmatpush1.bf16.msra.mxu0 %v3078
  %3091 = vmatprep.subr.bf16.mxu0 0
  %3092 = vmatpush1.bf16.msra.mxu0 %v3079
  %3093 = vmatprep.subr.bf16.mxu0 0
  %3094 = vmatpush1.bf16.msra.mxu0 %v3080
  %3095 = vmatprep.subr.bf16.mxu0 0
  %3096 = vmatpush1.bf16.msra.mxu0 %v3081
  %3097 = vmatprep.subr.bf16.mxu0 0
  %3098 = vmatpush1.bf16.msra.mxu0 0
  %3099 = vmatprep.subr.bf16.mxu0 0
  %3100 = vmatpush1.bf16.msra.mxu0 0
  %3101 = vmatprep.subr.bf16.mxu0 0
  %3102 = vmatpush1.bf16.msra.mxu0 0
  %3103 = vmatprep.subr.bf16.mxu0 0
  %3104 = vmatpush1.bf16.msra.mxu0 0
  %3105 = vmatprep.subr.bf16.mxu0 0
  %3106 = vmatpush1.bf16.msra.mxu0 0
  %3107 = vmatprep.subr.bf16.mxu0 0
  %3108 = vmatpush1.bf16.msra.mxu0 0
  %3109 = vmatprep.subr.bf16.mxu0 0
  %3110 = vmatpush1.bf16.msra.mxu0 0
  %3111 = vmatprep.subr.bf16.mxu0 0
  %3112 = vmatpush1.bf16.msra.mxu0 0
  %3113 = vmatprep.subr.bf16.mxu0 0
  %3114 = vmatpush1.bf16.msra.mxu0 0
  %3115 = vmatprep.subr.bf16.mxu0 0
  %3116 = vmatpush1.bf16.msra.mxu0 0
  %3117 = vmatprep.subr.bf16.mxu0 0
  %3118 = vmatpush1.bf16.msra.mxu0 0
  %3119 = vmatprep.subr.bf16.mxu0 0
  %3120 = vmatpush1.bf16.msra.mxu0 0
  %3121 = vmatprep.mubr.bf16.mxu0 0
  %3122 = vmatmul.mubr.bf16.gmra.mrb[0].mxu0 %v3087
  %v3123 = vpop.f32.mrb[0].mxu0
  %v3124 = vadd.f32 0.0, %v3123
  %v3125 = vpop.f32.mrb[0].mxu0
  %v3126 = vpop.f32.mrb[0].mxu0
  %v3127 = vpop.f32.mrb[0].mxu0
  %3128 = vdwg.mxu0
  %v3129 = vadd.f32 %v3050, %v3124
  %s3130 = scalar_lea.vmem %s5, 640
  %v3131 = vld [vmem:[%s3130] sm:$0xf]
  %v3132 = vld [vmem:[%s3130 + $0x4] sm:$0xf]
  %v3133 = vld [vmem:[%s3130 + $0x8] sm:$0xf]
  %v3134 = vld [vmem:[%s3130 + $0xc] sm:$0xf]
  %v3135 = vld [vmem:[%s3130 + $0x10] sm:$0xf]
  %v3136 = vld [vmem:[%s3130 + $0x14] sm:$0xf]
  %v3137 = vld [vmem:[%s3130 + $0x18] sm:$0xf]
  %v3138 = vld [vmem:[%s3130 + $0x1c] sm:$0xf]
  %v3139 = vrot.slane %v1569, 2
  %v3148 = vunpack.c.l.b16 %v3131
  %v3149 = vunpack.c.l.b16 %v3132
  %v3150 = vunpack.c.l.b16 %v3133
  %v3151 = vunpack.c.l.b16 %v3134
  %v3152 = vunpack.c.l.b16 %v3135
  %v3153 = vunpack.c.l.b16 %v3136
  %v3154 = vunpack.c.l.b16 %v3137
  %v3155 = vunpack.c.l.b16 %v3138
  %v3156 = vpack.c.b16 %v3149, %v3148
  %v3157 = vpack.c.b16 %v3151, %v3150
  %v3158 = vpack.c.b16 %v3153, %v3152
  %v3159 = vpack.c.b16 %v3155, %v3154
  %v3165 = vsel %vm1615, %v3139, 0
  %3167 = vmatprep.subr.bf16.mxu0 0
  %3168 = vmatpush1.bf16.msra.mxu0 %v3156
  %3169 = vmatprep.subr.bf16.mxu0 0
  %3170 = vmatpush1.bf16.msra.mxu0 %v3157
  %3171 = vmatprep.subr.bf16.mxu0 0
  %3172 = vmatpush1.bf16.msra.mxu0 %v3158
  %3173 = vmatprep.subr.bf16.mxu0 0
  %3174 = vmatpush1.bf16.msra.mxu0 %v3159
  %3175 = vmatprep.subr.bf16.mxu0 0
  %3176 = vmatpush1.bf16.msra.mxu0 0
  %3177 = vmatprep.subr.bf16.mxu0 0
  %3178 = vmatpush1.bf16.msra.mxu0 0
  %3179 = vmatprep.subr.bf16.mxu0 0
  %3180 = vmatpush1.bf16.msra.mxu0 0
  %3181 = vmatprep.subr.bf16.mxu0 0
  %3182 = vmatpush1.bf16.msra.mxu0 0
  %3183 = vmatprep.subr.bf16.mxu0 0
  %3184 = vmatpush1.bf16.msra.mxu0 0
  %3185 = vmatprep.subr.bf16.mxu0 0
  %3186 = vmatpush1.bf16.msra.mxu0 0
  %3187 = vmatprep.subr.bf16.mxu0 0
  %3188 = vmatpush1.bf16.msra.mxu0 0
  %3189 = vmatprep.subr.bf16.mxu0 0
  %3190 = vmatpush1.bf16.msra.mxu0 0
  %3191 = vmatprep.subr.bf16.mxu0 0
  %3192 = vmatpush1.bf16.msra.mxu0 0
  %3193 = vmatprep.subr.bf16.mxu0 0
  %3194 = vmatpush1.bf16.msra.mxu0 0
  %3195 = vmatprep.subr.bf16.mxu0 0
  %3196 = vmatpush1.bf16.msra.mxu0 0
  %3197 = vmatprep.subr.bf16.mxu0 0
  %3198 = vmatpush1.bf16.msra.mxu0 0
  %3199 = vmatprep.mubr.bf16.mxu0 0
  %3200 = vmatmul.mubr.bf16.gmra.mrb[0].mxu0 %v3165
  %v3201 = vpop.f32.mrb[0].mxu0
  %v3202 = vadd.f32 0.0, %v3201
  %v3203 = vpop.f32.mrb[0].mxu0
  %v3204 = vpop.f32.mrb[0].mxu0
  %v3205 = vpop.f32.mrb[0].mxu0
  %3206 = vdwg.mxu0
  %v3207 = vadd.f32 %v3129, %v3202
  %s3208 = scalar_lea.vmem %s5, 672
  %v3209 = vld [vmem:[%s3208] sm:$0xf]
  %v3210 = vld [vmem:[%s3208 + $0x4] sm:$0xf]
  %v3211 = vld [vmem:[%s3208 + $0x8] sm:$0xf]
  %v3212 = vld [vmem:[%s3208 + $0xc] sm:$0xf]
  %v3213 = vld [vmem:[%s3208 + $0x10] sm:$0xf]
  %v3214 = vld [vmem:[%s3208 + $0x14] sm:$0xf]
  %v3215 = vld [vmem:[%s3208 + $0x18] sm:$0xf]
  %v3216 = vld [vmem:[%s3208 + $0x1c] sm:$0xf]
  %v3217 = vrot.slane %v1569, 3
  %v3226 = vunpack.c.l.b16 %v3209
  %v3227 = vunpack.c.l.b16 %v3210
  %v3228 = vunpack.c.l.b16 %v3211
  %v3229 = vunpack.c.l.b16 %v3212
  %v3230 = vunpack.c.l.b16 %v3213
  %v3231 = vunpack.c.l.b16 %v3214
  %v3232 = vunpack.c.l.b16 %v3215
  %v3233 = vunpack.c.l.b16 %v3216
  %v3234 = vpack.c.b16 %v3227, %v3226
  %v3235 = vpack.c.b16 %v3229, %v3228
  %v3236 = vpack.c.b16 %v3231, %v3230
  %v3237 = vpack.c.b16 %v3233, %v3232
  %v3243 = vsel %vm1615, %v3217, 0
  %3245 = vmatprep.subr.bf16.mxu0 0
  %3246 = vmatpush1.bf16.msra.mxu0 %v3234
  %3247 = vmatprep.subr.bf16.mxu0 0
  %3248 = vmatpush1.bf16.msra.mxu0 %v3235
  %3249 = vmatprep.subr.bf16.mxu0 0
  %3250 = vmatpush1.bf16.msra.mxu0 %v3236
  %3251 = vmatprep.subr.bf16.mxu0 0
  %3252 = vmatpush1.bf16.msra.mxu0 %v3237
  %3253 = vmatprep.subr.bf16.mxu0 0
  %3254 = vmatpush1.bf16.msra.mxu0 0
  %3255 = vmatprep.subr.bf16.mxu0 0
  %3256 = vmatpush1.bf16.msra.mxu0 0
  %3257 = vmatprep.subr.bf16.mxu0 0
  %3258 = vmatpush1.bf16.msra.mxu0 0
  %3259 = vmatprep.subr.bf16.mxu0 0
  %3260 = vmatpush1.bf16.msra.mxu0 0
  %3261 = vmatprep.subr.bf16.mxu0 0
  %3262 = vmatpush1.bf16.msra.mxu0 0
  %3263 = vmatprep.subr.bf16.mxu0 0
  %3264 = vmatpush1.bf16.msra.mxu0 0
  %3265 = vmatprep.subr.bf16.mxu0 0
  %3266 = vmatpush1.bf16.msra.mxu0 0
  %3267 = vmatprep.subr.bf16.mxu0 0
  %3268 = vmatpush1.bf16.msra.mxu0 0
  %3269 = vmatprep.subr.bf16.mxu0 0
  %3270 = vmatpush1.bf16.msra.mxu0 0
  %3271 = vmatprep.subr.bf16.mxu0 0
  %3272 = vmatpush1.bf16.msra.mxu0 0
  %3273 = vmatprep.subr.bf16.mxu0 0
  %3274 = vmatpush1.bf16.msra.mxu0 0
  %3275 = vmatprep.subr.bf16.mxu0 0
  %3276 = vmatpush1.bf16.msra.mxu0 0
  %3277 = vmatprep.mubr.bf16.mxu0 0
  %3278 = vmatmul.mubr.bf16.gmra.mrb[0].mxu0 %v3243
  %v3279 = vpop.f32.mrb[0].mxu0
  %v3280 = vadd.f32 0.0, %v3279
  %v3281 = vpop.f32.mrb[0].mxu0
  %v3282 = vpop.f32.mrb[0].mxu0
  %v3283 = vpop.f32.mrb[0].mxu0
  %3284 = vdwg.mxu0
  %v3285 = vadd.f32 %v3207, %v3280
  %s3286 = scalar_lea.vmem %s5, 704
  %v3287 = vld [vmem:[%s3286] sm:$0xf]
  %v3288 = vld [vmem:[%s3286 + $0x4] sm:$0xf]
  %v3289 = vld [vmem:[%s3286 + $0x8] sm:$0xf]
  %v3290 = vld [vmem:[%s3286 + $0xc] sm:$0xf]
  %v3291 = vld [vmem:[%s3286 + $0x10] sm:$0xf]
  %v3292 = vld [vmem:[%s3286 + $0x14] sm:$0xf]
  %v3293 = vld [vmem:[%s3286 + $0x18] sm:$0xf]
  %v3294 = vld [vmem:[%s3286 + $0x1c] sm:$0xf]
  %v3295 = vrot.slane %v1569, 4
  %v3304 = vunpack.c.l.b16 %v3287
  %v3305 = vunpack.c.l.b16 %v3288
  %v3306 = vunpack.c.l.b16 %v3289
  %v3307 = vunpack.c.l.b16 %v3290
  %v3308 = vunpack.c.l.b16 %v3291
  %v3309 = vunpack.c.l.b16 %v3292
  %v3310 = vunpack.c.l.b16 %v3293
  %v3311 = vunpack.c.l.b16 %v3294
  %v3312 = vpack.c.b16 %v3305, %v3304
  %v3313 = vpack.c.b16 %v3307, %v3306
  %v3314 = vpack.c.b16 %v3309, %v3308
  %v3315 = vpack.c.b16 %v3311, %v3310
  %v3321 = vsel %vm1615, %v3295, 0
  %3323 = vmatprep.subr.bf16.mxu0 0
  %3324 = vmatpush1.bf16.msra.mxu0 %v3312
  %3325 = vmatprep.subr.bf16.mxu0 0
  %3326 = vmatpush1.bf16.msra.mxu0 %v3313
  %3327 = vmatprep.subr.bf16.mxu0 0
  %3328 = vmatpush1.bf16.msra.mxu0 %v3314
  %3329 = vmatprep.subr.bf16.mxu0 0
  %3330 = vmatpush1.bf16.msra.mxu0 %v3315
  %3331 = vmatprep.subr.bf16.mxu0 0
  %3332 = vmatpush1.bf16.msra.mxu0 0
  %3333 = vmatprep.subr.bf16.mxu0 0
  %3334 = vmatpush1.bf16.msra.mxu0 0
  %3335 = vmatprep.subr.bf16.mxu0 0
  %3336 = vmatpush1.bf16.msra.mxu0 0
  %3337 = vmatprep.subr.bf16.mxu0 0
  %3338 = vmatpush1.bf16.msra.mxu0 0
  %3339 = vmatprep.subr.bf16.mxu0 0
  %3340 = vmatpush1.bf16.msra.mxu0 0
  %3341 = vmatprep.subr.bf16.mxu0 0
  %3342 = vmatpush1.bf16.msra.mxu0 0
  %3343 = vmatprep.subr.bf16.mxu0 0
  %3344 = vmatpush1.bf16.msra.mxu0 0
  %3345 = vmatprep.subr.bf16.mxu0 0
  %3346 = vmatpush1.bf16.msra.mxu0 0
  %3347 = vmatprep.subr.bf16.mxu0 0
  %3348 = vmatpush1.bf16.msra.mxu0 0
  %3349 = vmatprep.subr.bf16.mxu0 0
  %3350 = vmatpush1.bf16.msra.mxu0 0
  %3351 = vmatprep.subr.bf16.mxu0 0
  %3352 = vmatpush1.bf16.msra.mxu0 0
  %3353 = vmatprep.subr.bf16.mxu0 0
  %3354 = vmatpush1.bf16.msra.mxu0 0
  %3355 = vmatprep.mubr.bf16.mxu0 0
  %3356 = vmatmul.mubr.bf16.gmra.mrb[0].mxu0 %v3321
  %v3357 = vpop.f32.mrb[0].mxu0
  %v3358 = vadd.f32 0.0, %v3357
  %v3359 = vpop.f32.mrb[0].mxu0
  %v3360 = vpop.f32.mrb[0].mxu0
  %v3361 = vpop.f32.mrb[0].mxu0
  %3362 = vdwg.mxu0
  %v3363 = vadd.f32 %v3285, %v3358
  %s3364 = scalar_lea.vmem %s5, 736
  %v3365 = vld [vmem:[%s3364] sm:$0xf]
  %v3366 = vld [vmem:[%s3364 + $0x4] sm:$0xf]
  %v3367 = vld [vmem:[%s3364 + $0x8] sm:$0xf]
  %v3368 = vld [vmem:[%s3364 + $0xc] sm:$0xf]
  %v3369 = vld [vmem:[%s3364 + $0x10] sm:$0xf]
  %v3370 = vld [vmem:[%s3364 + $0x14] sm:$0xf]
  %v3371 = vld [vmem:[%s3364 + $0x18] sm:$0xf]
  %v3372 = vld [vmem:[%s3364 + $0x1c] sm:$0xf]
  %v3373 = vrot.slane %v1569, 5
  %v3382 = vunpack.c.l.b16 %v3365
  %v3383 = vunpack.c.l.b16 %v3366
  %v3384 = vunpack.c.l.b16 %v3367
  %v3385 = vunpack.c.l.b16 %v3368
  %v3386 = vunpack.c.l.b16 %v3369
  %v3387 = vunpack.c.l.b16 %v3370
  %v3388 = vunpack.c.l.b16 %v3371
  %v3389 = vunpack.c.l.b16 %v3372
  %v3390 = vpack.c.b16 %v3383, %v3382
  %v3391 = vpack.c.b16 %v3385, %v3384
  %v3392 = vpack.c.b16 %v3387, %v3386
  %v3393 = vpack.c.b16 %v3389, %v3388
  %v3399 = vsel %vm1615, %v3373, 0
  %3401 = vmatprep.subr.bf16.mxu0 0
  %3402 = vmatpush1.bf16.msra.mxu0 %v3390
  %3403 = vmatprep.subr.bf16.mxu0 0
  %3404 = vmatpush1.bf16.msra.mxu0 %v3391
  %3405 = vmatprep.subr.bf16.mxu0 0
  %3406 = vmatpush1.bf16.msra.mxu0 %v3392
  %3407 = vmatprep.subr.bf16.mxu0 0
  %3408 = vmatpush1.bf16.msra.mxu0 %v3393
  %3409 = vmatprep.subr.bf16.mxu0 0
  %3410 = vmatpush1.bf16.msra.mxu0 0
  %3411 = vmatprep.subr.bf16.mxu0 0
  %3412 = vmatpush1.bf16.msra.mxu0 0
  %3413 = vmatprep.subr.bf16.mxu0 0
  %3414 = vmatpush1.bf16.msra.mxu0 0
  %3415 = vmatprep.subr.bf16.mxu0 0
  %3416 = vmatpush1.bf16.msra.mxu0 0
  %3417 = vmatprep.subr.bf16.mxu0 0
  %3418 = vmatpush1.bf16.msra.mxu0 0
  %3419 = vmatprep.subr.bf16.mxu0 0
  %3420 = vmatpush1.bf16.msra.mxu0 0
  %3421 = vmatprep.subr.bf16.mxu0 0
  %3422 = vmatpush1.bf16.msra.mxu0 0
  %3423 = vmatprep.subr.bf16.mxu0 0
  %3424 = vmatpush1.bf16.msra.mxu0 0
  %3425 = vmatprep.subr.bf16.mxu0 0
  %3426 = vmatpush1.bf16.msra.mxu0 0
  %3427 = vmatprep.subr.bf16.mxu0 0
  %3428 = vmatpush1.bf16.msra.mxu0 0
  %3429 = vmatprep.subr.bf16.mxu0 0
  %3430 = vmatpush1.bf16.msra.mxu0 0
  %3431 = vmatprep.subr.bf16.mxu0 0
  %3432 = vmatpush1.bf16.msra.mxu0 0
  %3433 = vmatprep.mubr.bf16.mxu0 0
  %3434 = vmatmul.mubr.bf16.gmra.mrb[0].mxu0 %v3399
  %v3435 = vpop.f32.mrb[0].mxu0
  %v3436 = vadd.f32 0.0, %v3435
  %v3437 = vpop.f32.mrb[0].mxu0
  %v3438 = vpop.f32.mrb[0].mxu0
  %v3439 = vpop.f32.mrb[0].mxu0
  %3440 = vdwg.mxu0
  %v3441 = vadd.f32 %v3363, %v3436
  %s3442 = scalar_lea.vmem %s5, 768
  %v3443 = vld [vmem:[%s3442] sm:$0xf]
  %v3444 = vld [vmem:[%s3442 + $0x4] sm:$0xf]
  %v3445 = vld [vmem:[%s3442 + $0x8] sm:$0xf]
  %v3446 = vld [vmem:[%s3442 + $0xc] sm:$0xf]
  %v3447 = vld [vmem:[%s3442 + $0x10] sm:$0xf]
  %v3448 = vld [vmem:[%s3442 + $0x14] sm:$0xf]
  %v3449 = vld [vmem:[%s3442 + $0x18] sm:$0xf]
  %v3450 = vld [vmem:[%s3442 + $0x1c] sm:$0xf]
  %v3459 = vunpack.c.l.b16 %v3443
  %v3460 = vunpack.c.l.b16 %v3444
  %v3461 = vunpack.c.l.b16 %v3445
  %v3462 = vunpack.c.l.b16 %v3446
  %v3463 = vunpack.c.l.b16 %v3447
  %v3464 = vunpack.c.l.b16 %v3448
  %v3465 = vunpack.c.l.b16 %v3449
  %v3466 = vunpack.c.l.b16 %v3450
  %v3467 = vpack.c.b16 %v3460, %v3459
  %v3468 = vpack.c.b16 %v3462, %v3461
  %v3469 = vpack.c.b16 %v3464, %v3463
  %v3470 = vpack.c.b16 %v3466, %v3465
  %v3476 = vsel %vm1615, %v1570, 0
  %3478 = vmatprep.subr.bf16.mxu0 0
  %3479 = vmatpush1.bf16.msra.mxu0 %v3467
  %3480 = vmatprep.subr.bf16.mxu0 0
  %3481 = vmatpush1.bf16.msra.mxu0 %v3468
  %3482 = vmatprep.subr.bf16.mxu0 0
  %3483 = vmatpush1.bf16.msra.mxu0 %v3469
  %3484 = vmatprep.subr.bf16.mxu0 0
  %3485 = vmatpush1.bf16.msra.mxu0 %v3470
  %3486 = vmatprep.subr.bf16.mxu0 0
  %3487 = vmatpush1.bf16.msra.mxu0 0
  %3488 = vmatprep.subr.bf16.mxu0 0
  %3489 = vmatpush1.bf16.msra.mxu0 0
  %3490 = vmatprep.subr.bf16.mxu0 0
  %3491 = vmatpush1.bf16.msra.mxu0 0
  %3492 = vmatprep.subr.bf16.mxu0 0
  %3493 = vmatpush1.bf16.msra.mxu0 0
  %3494 = vmatprep.subr.bf16.mxu0 0
  %3495 = vmatpush1.bf16.msra.mxu0 0
  %3496 = vmatprep.subr.bf16.mxu0 0
  %3497 = vmatpush1.bf16.msra.mxu0 0
  %3498 = vmatprep.subr.bf16.mxu0 0
  %3499 = vmatpush1.bf16.msra.mxu0 0
  %3500 = vmatprep.subr.bf16.mxu0 0
  %3501 = vmatpush1.bf16.msra.mxu0 0
  %3502 = vmatprep.subr.bf16.mxu0 0
  %3503 = vmatpush1.bf16.msra.mxu0 0
  %3504 = vmatprep.subr.bf16.mxu0 0
  %3505 = vmatpush1.bf16.msra.mxu0 0
  %3506 = vmatprep.subr.bf16.mxu0 0
  %3507 = vmatpush1.bf16.msra.mxu0 0
  %3508 = vmatprep.subr.bf16.mxu0 0
  %3509 = vmatpush1.bf16.msra.mxu0 0
  %3510 = vmatprep.mubr.bf16.mxu0 0
  %3511 = vmatmul.mubr.bf16.gmra.mrb[0].mxu0 %v3476
  %v3512 = vpop.f32.mrb[0].mxu0
  %v3513 = vadd.f32 0.0, %v3512
  %v3514 = vpop.f32.mrb[0].mxu0
  %v3515 = vpop.f32.mrb[0].mxu0
  %v3516 = vpop.f32.mrb[0].mxu0
  %3517 = vdwg.mxu0
  %v3518 = vadd.f32 %v3441, %v3513
  %s3519 = scalar_lea.vmem %s5, 800
  %v3520 = vld [vmem:[%s3519] sm:$0xf]
  %v3521 = vld [vmem:[%s3519 + $0x4] sm:$0xf]
  %v3522 = vld [vmem:[%s3519 + $0x8] sm:$0xf]
  %v3523 = vld [vmem:[%s3519 + $0xc] sm:$0xf]
  %v3524 = vld [vmem:[%s3519 + $0x10] sm:$0xf]
  %v3525 = vld [vmem:[%s3519 + $0x14] sm:$0xf]
  %v3526 = vld [vmem:[%s3519 + $0x18] sm:$0xf]
  %v3527 = vld [vmem:[%s3519 + $0x1c] sm:$0xf]
  %v3529 = vrot.slane %v1570, 1
  %v3538 = vunpack.c.l.b16 %v3520
  %v3539 = vunpack.c.l.b16 %v3521
  %v3540 = vunpack.c.l.b16 %v3522
  %v3541 = vunpack.c.l.b16 %v3523
  %v3542 = vunpack.c.l.b16 %v3524
  %v3543 = vunpack.c.l.b16 %v3525
  %v3544 = vunpack.c.l.b16 %v3526
  %v3545 = vunpack.c.l.b16 %v3527
  %v3546 = vpack.c.b16 %v3539, %v3538
  %v3547 = vpack.c.b16 %v3541, %v3540
  %v3548 = vpack.c.b16 %v3543, %v3542
  %v3549 = vpack.c.b16 %v3545, %v3544
  %v3555 = vsel %vm1615, %v3529, 0
  %3557 = vmatprep.subr.bf16.mxu0 0
  %3558 = vmatpush1.bf16.msra.mxu0 %v3546
  %3559 = vmatprep.subr.bf16.mxu0 0
  %3560 = vmatpush1.bf16.msra.mxu0 %v3547
  %3561 = vmatprep.subr.bf16.mxu0 0
  %3562 = vmatpush1.bf16.msra.mxu0 %v3548
  %3563 = vmatprep.subr.bf16.mxu0 0
  %3564 = vmatpush1.bf16.msra.mxu0 %v3549
  %3565 = vmatprep.subr.bf16.mxu0 0
  %3566 = vmatpush1.bf16.msra.mxu0 0
  %3567 = vmatprep.subr.bf16.mxu0 0
  %3568 = vmatpush1.bf16.msra.mxu0 0
  %3569 = vmatprep.subr.bf16.mxu0 0
  %3570 = vmatpush1.bf16.msra.mxu0 0
  %3571 = vmatprep.subr.bf16.mxu0 0
  %3572 = vmatpush1.bf16.msra.mxu0 0
  %3573 = vmatprep.subr.bf16.mxu0 0
  %3574 = vmatpush1.bf16.msra.mxu0 0
  %3575 = vmatprep.subr.bf16.mxu0 0
  %3576 = vmatpush1.bf16.msra.mxu0 0
  %3577 = vmatprep.subr.bf16.mxu0 0
  %3578 = vmatpush1.bf16.msra.mxu0 0
  %3579 = vmatprep.subr.bf16.mxu0 0
  %3580 = vmatpush1.bf16.msra.mxu0 0
  %3581 = vmatprep.subr.bf16.mxu0 0
  %3582 = vmatpush1.bf16.msra.mxu0 0
  %3583 = vmatprep.subr.bf16.mxu0 0
  %3584 = vmatpush1.bf16.msra.mxu0 0
  %3585 = vmatprep.subr.bf16.mxu0 0
  %3586 = vmatpush1.bf16.msra.mxu0 0
  %3587 = vmatprep.subr.bf16.mxu0 0
  %3588 = vmatpush1.bf16.msra.mxu0 0
  %3589 = vmatprep.mubr.bf16.mxu0 0
  %3590 = vmatmul.mubr.bf16.gmra.mrb[0].mxu0 %v3555
  %v3591 = vpop.f32.mrb[0].mxu0
  %v3592 = vadd.f32 0.0, %v3591
  %v3593 = vpop.f32.mrb[0].mxu0
  %v3594 = vpop.f32.mrb[0].mxu0
  %v3595 = vpop.f32.mrb[0].mxu0
  %3596 = vdwg.mxu0
  %v3597 = vadd.f32 %v3518, %v3592
  %s3598 = scalar_lea.vmem %s5, 832
  %v3599 = vld [vmem:[%s3598] sm:$0xf]
  %v3600 = vld [vmem:[%s3598 + $0x4] sm:$0xf]
  %v3601 = vld [vmem:[%s3598 + $0x8] sm:$0xf]
  %v3602 = vld [vmem:[%s3598 + $0xc] sm:$0xf]
  %v3603 = vld [vmem:[%s3598 + $0x10] sm:$0xf]
  %v3604 = vld [vmem:[%s3598 + $0x14] sm:$0xf]
  %v3605 = vld [vmem:[%s3598 + $0x18] sm:$0xf]
  %v3606 = vld [vmem:[%s3598 + $0x1c] sm:$0xf]
  %v3607 = vrot.slane %v1570, 2
  %v3616 = vunpack.c.l.b16 %v3599
  %v3617 = vunpack.c.l.b16 %v3600
  %v3618 = vunpack.c.l.b16 %v3601
  %v3619 = vunpack.c.l.b16 %v3602
  %v3620 = vunpack.c.l.b16 %v3603
  %v3621 = vunpack.c.l.b16 %v3604
  %v3622 = vunpack.c.l.b16 %v3605
  %v3623 = vunpack.c.l.b16 %v3606
  %v3624 = vpack.c.b16 %v3617, %v3616
  %v3625 = vpack.c.b16 %v3619, %v3618
  %v3626 = vpack.c.b16 %v3621, %v3620
  %v3627 = vpack.c.b16 %v3623, %v3622
  %v3633 = vsel %vm1615, %v3607, 0
  %3635 = vmatprep.subr.bf16.mxu0 0
  %3636 = vmatpush1.bf16.msra.mxu0 %v3624
  %3637 = vmatprep.subr.bf16.mxu0 0
  %3638 = vmatpush1.bf16.msra.mxu0 %v3625
  %3639 = vmatprep.subr.bf16.mxu0 0
  %3640 = vmatpush1.bf16.msra.mxu0 %v3626
  %3641 = vmatprep.subr.bf16.mxu0 0
  %3642 = vmatpush1.bf16.msra.mxu0 %v3627
  %3643 = vmatprep.subr.bf16.mxu0 0
  %3644 = vmatpush1.bf16.msra.mxu0 0
  %3645 = vmatprep.subr.bf16.mxu0 0
  %3646 = vmatpush1.bf16.msra.mxu0 0
  %3647 = vmatprep.subr.bf16.mxu0 0
  %3648 = vmatpush1.bf16.msra.mxu0 0
  %3649 = vmatprep.subr.bf16.mxu0 0
  %3650 = vmatpush1.bf16.msra.mxu0 0
  %3651 = vmatprep.subr.bf16.mxu0 0
  %3652 = vmatpush1.bf16.msra.mxu0 0
  %3653 = vmatprep.subr.bf16.mxu0 0
  %3654 = vmatpush1.bf16.msra.mxu0 0
  %3655 = vmatprep.subr.bf16.mxu0 0
  %3656 = vmatpush1.bf16.msra.mxu0 0
  %3657 = vmatprep.subr.bf16.mxu0 0
  %3658 = vmatpush1.bf16.msra.mxu0 0
  %3659 = vmatprep.subr.bf16.mxu0 0
  %3660 = vmatpush1.bf16.msra.mxu0 0
  %3661 = vmatprep.subr.bf16.mxu0 0
  %3662 = vmatpush1.bf16.msra.mxu0 0
  %3663 = vmatprep.subr.bf16.mxu0 0
  %3664 = vmatpush1.bf16.msra.mxu0 0
  %3665 = vmatprep.subr.bf16.mxu0 0
  %3666 = vmatpush1.bf16.msra.mxu0 0
  %3667 = vmatprep.mubr.bf16.mxu0 0
  %3668 = vmatmul.mubr.bf16.gmra.mrb[0].mxu0 %v3633
  %v3669 = vpop.f32.mrb[0].mxu0
  %v3670 = vadd.f32 0.0, %v3669
  %v3671 = vpop.f32.mrb[0].mxu0
  %v3672 = vpop.f32.mrb[0].mxu0
  %v3673 = vpop.f32.mrb[0].mxu0
  %3674 = vdwg.mxu0
  %v3675 = vadd.f32 %v3597, %v3670
  %s3676 = scalar_lea.vmem %s5, 864
  %v3677 = vld [vmem:[%s3676] sm:$0xf]
  %v3678 = vld [vmem:[%s3676 + $0x4] sm:$0xf]
  %v3679 = vld [vmem:[%s3676 + $0x8] sm:$0xf]
  %v3680 = vld [vmem:[%s3676 + $0xc] sm:$0xf]
  %v3681 = vld [vmem:[%s3676 + $0x10] sm:$0xf]
  %v3682 = vld [vmem:[%s3676 + $0x14] sm:$0xf]
  %v3683 = vld [vmem:[%s3676 + $0x18] sm:$0xf]
  %v3684 = vld [vmem:[%s3676 + $0x1c] sm:$0xf]
  %v3685 = vrot.slane %v1570, 3
  %v3694 = vunpack.c.l.b16 %v3677
  %v3695 = vunpack.c.l.b16 %v3678
  %v3696 = vunpack.c.l.b16 %v3679
  %v3697 = vunpack.c.l.b16 %v3680
  %v3698 = vunpack.c.l.b16 %v3681
  %v3699 = vunpack.c.l.b16 %v3682
  %v3700 = vunpack.c.l.b16 %v3683
  %v3701 = vunpack.c.l.b16 %v3684
  %v3702 = vpack.c.b16 %v3695, %v3694
  %v3703 = vpack.c.b16 %v3697, %v3696
  %v3704 = vpack.c.b16 %v3699, %v3698
  %v3705 = vpack.c.b16 %v3701, %v3700
  %v3711 = vsel %vm1615, %v3685, 0
  %3713 = vmatprep.subr.bf16.mxu0 0
  %3714 = vmatpush1.bf16.msra.mxu0 %v3702
  %3715 = vmatprep.subr.bf16.mxu0 0
  %3716 = vmatpush1.bf16.msra.mxu0 %v3703
  %3717 = vmatprep.subr.bf16.mxu0 0
  %3718 = vmatpush1.bf16.msra.mxu0 %v3704
  %3719 = vmatprep.subr.bf16.mxu0 0
  %3720 = vmatpush1.bf16.msra.mxu0 %v3705
  %3721 = vmatprep.subr.bf16.mxu0 0
  %3722 = vmatpush1.bf16.msra.mxu0 0
  %3723 = vmatprep.subr.bf16.mxu0 0
  %3724 = vmatpush1.bf16.msra.mxu0 0
  %3725 = vmatprep.subr.bf16.mxu0 0
  %3726 = vmatpush1.bf16.msra.mxu0 0
  %3727 = vmatprep.subr.bf16.mxu0 0
  %3728 = vmatpush1.bf16.msra.mxu0 0
  %3729 = vmatprep.subr.bf16.mxu0 0
  %3730 = vmatpush1.bf16.msra.mxu0 0
  %3731 = vmatprep.subr.bf16.mxu0 0
  %3732 = vmatpush1.bf16.msra.mxu0 0
  %3733 = vmatprep.subr.bf16.mxu0 0
  %3734 = vmatpush1.bf16.msra.mxu0 0
  %3735 = vmatprep.subr.bf16.mxu0 0
  %3736 = vmatpush1.bf16.msra.mxu0 0
  %3737 = vmatprep.subr.bf16.mxu0 0
  %3738 = vmatpush1.bf16.msra.mxu0 0
  %3739 = vmatprep.subr.bf16.mxu0 0
  %3740 = vmatpush1.bf16.msra.mxu0 0
  %3741 = vmatprep.subr.bf16.mxu0 0
  %3742 = vmatpush1.bf16.msra.mxu0 0
  %3743 = vmatprep.subr.bf16.mxu0 0
  %3744 = vmatpush1.bf16.msra.mxu0 0
  %3745 = vmatprep.mubr.bf16.mxu0 0
  %3746 = vmatmul.mubr.bf16.gmra.mrb[0].mxu0 %v3711
  %v3747 = vpop.f32.mrb[0].mxu0
  %v3748 = vadd.f32 0.0, %v3747
  %v3749 = vpop.f32.mrb[0].mxu0
  %v3750 = vpop.f32.mrb[0].mxu0
  %v3751 = vpop.f32.mrb[0].mxu0
  %3752 = vdwg.mxu0
  %v3753 = vadd.f32 %v3675, %v3748
  %s3754 = scalar_lea.vmem %s5, 896
  %v3755 = vld [vmem:[%s3754] sm:$0xf]
  %v3756 = vld [vmem:[%s3754 + $0x4] sm:$0xf]
  %v3757 = vld [vmem:[%s3754 + $0x8] sm:$0xf]
  %v3758 = vld [vmem:[%s3754 + $0xc] sm:$0xf]
  %v3759 = vld [vmem:[%s3754 + $0x10] sm:$0xf]
  %v3760 = vld [vmem:[%s3754 + $0x14] sm:$0xf]
  %v3761 = vld [vmem:[%s3754 + $0x18] sm:$0xf]
  %v3762 = vld [vmem:[%s3754 + $0x1c] sm:$0xf]
  %v3763 = vrot.slane %v1570, 4
  %v3772 = vunpack.c.l.b16 %v3755
  %v3773 = vunpack.c.l.b16 %v3756
  %v3774 = vunpack.c.l.b16 %v3757
  %v3775 = vunpack.c.l.b16 %v3758
  %v3776 = vunpack.c.l.b16 %v3759
  %v3777 = vunpack.c.l.b16 %v3760
  %v3778 = vunpack.c.l.b16 %v3761
  %v3779 = vunpack.c.l.b16 %v3762
  %v3780 = vpack.c.b16 %v3773, %v3772
  %v3781 = vpack.c.b16 %v3775, %v3774
  %v3782 = vpack.c.b16 %v3777, %v3776
  %v3783 = vpack.c.b16 %v3779, %v3778
  %v3789 = vsel %vm1615, %v3763, 0
  %3791 = vmatprep.subr.bf16.mxu0 0
  %3792 = vmatpush1.bf16.msra.mxu0 %v3780
  %3793 = vmatprep.subr.bf16.mxu0 0
  %3794 = vmatpush1.bf16.msra.mxu0 %v3781
  %3795 = vmatprep.subr.bf16.mxu0 0
  %3796 = vmatpush1.bf16.msra.mxu0 %v3782
  %3797 = vmatprep.subr.bf16.mxu0 0
  %3798 = vmatpush1.bf16.msra.mxu0 %v3783
  %3799 = vmatprep.subr.bf16.mxu0 0
  %3800 = vmatpush1.bf16.msra.mxu0 0
  %3801 = vmatprep.subr.bf16.mxu0 0
  %3802 = vmatpush1.bf16.msra.mxu0 0
  %3803 = vmatprep.subr.bf16.mxu0 0
  %3804 = vmatpush1.bf16.msra.mxu0 0
  %3805 = vmatprep.subr.bf16.mxu0 0
  %3806 = vmatpush1.bf16.msra.mxu0 0
  %3807 = vmatprep.subr.bf16.mxu0 0
  %3808 = vmatpush1.bf16.msra.mxu0 0
  %3809 = vmatprep.subr.bf16.mxu0 0
  %3810 = vmatpush1.bf16.msra.mxu0 0
  %3811 = vmatprep.subr.bf16.mxu0 0
  %3812 = vmatpush1.bf16.msra.mxu0 0
  %3813 = vmatprep.subr.bf16.mxu0 0
  %3814 = vmatpush1.bf16.msra.mxu0 0
  %3815 = vmatprep.subr.bf16.mxu0 0
  %3816 = vmatpush1.bf16.msra.mxu0 0
  %3817 = vmatprep.subr.bf16.mxu0 0
  %3818 = vmatpush1.bf16.msra.mxu0 0
  %3819 = vmatprep.subr.bf16.mxu0 0
  %3820 = vmatpush1.bf16.msra.mxu0 0
  %3821 = vmatprep.subr.bf16.mxu0 0
  %3822 = vmatpush1.bf16.msra.mxu0 0
  %3823 = vmatprep.mubr.bf16.mxu0 0
  %3824 = vmatmul.mubr.bf16.gmra.mrb[0].mxu0 %v3789
  %v3825 = vpop.f32.mrb[0].mxu0
  %v3826 = vadd.f32 0.0, %v3825
  %v3827 = vpop.f32.mrb[0].mxu0
  %v3828 = vpop.f32.mrb[0].mxu0
  %v3829 = vpop.f32.mrb[0].mxu0
  %3830 = vdwg.mxu0
  %v3831 = vadd.f32 %v3753, %v3826
  %s3832 = scalar_lea.vmem %s5, 928
  %v3833 = vld [vmem:[%s3832] sm:$0xf]
  %v3834 = vld [vmem:[%s3832 + $0x4] sm:$0xf]
  %v3835 = vld [vmem:[%s3832 + $0x8] sm:$0xf]
  %v3836 = vld [vmem:[%s3832 + $0xc] sm:$0xf]
  %v3837 = vld [vmem:[%s3832 + $0x10] sm:$0xf]
  %v3838 = vld [vmem:[%s3832 + $0x14] sm:$0xf]
  %v3839 = vld [vmem:[%s3832 + $0x18] sm:$0xf]
  %v3840 = vld [vmem:[%s3832 + $0x1c] sm:$0xf]
  %v3841 = vrot.slane %v1570, 5
  %v3850 = vunpack.c.l.b16 %v3833
  %v3851 = vunpack.c.l.b16 %v3834
  %v3852 = vunpack.c.l.b16 %v3835
  %v3853 = vunpack.c.l.b16 %v3836
  %v3854 = vunpack.c.l.b16 %v3837
  %v3855 = vunpack.c.l.b16 %v3838
  %v3856 = vunpack.c.l.b16 %v3839
  %v3857 = vunpack.c.l.b16 %v3840
  %v3858 = vpack.c.b16 %v3851, %v3850
  %v3859 = vpack.c.b16 %v3853, %v3852
  %v3860 = vpack.c.b16 %v3855, %v3854
  %v3861 = vpack.c.b16 %v3857, %v3856
  %v3867 = vsel %vm1615, %v3841, 0
  %3869 = vmatprep.subr.bf16.mxu0 0
  %3870 = vmatpush1.bf16.msra.mxu0 %v3858
  %3871 = vmatprep.subr.bf16.mxu0 0
  %3872 = vmatpush1.bf16.msra.mxu0 %v3859
  %3873 = vmatprep.subr.bf16.mxu0 0
  %3874 = vmatpush1.bf16.msra.mxu0 %v3860
  %3875 = vmatprep.subr.bf16.mxu0 0
  %3876 = vmatpush1.bf16.msra.mxu0 %v3861
  %3877 = vmatprep.subr.bf16.mxu0 0
  %3878 = vmatpush1.bf16.msra.mxu0 0
  %3879 = vmatprep.subr.bf16.mxu0 0
  %3880 = vmatpush1.bf16.msra.mxu0 0
  %3881 = vmatprep.subr.bf16.mxu0 0
  %3882 = vmatpush1.bf16.msra.mxu0 0
  %3883 = vmatprep.subr.bf16.mxu0 0
  %3884 = vmatpush1.bf16.msra.mxu0 0
  %3885 = vmatprep.subr.bf16.mxu0 0
  %3886 = vmatpush1.bf16.msra.mxu0 0
  %3887 = vmatprep.subr.bf16.mxu0 0
  %3888 = vmatpush1.bf16.msra.mxu0 0
  %3889 = vmatprep.subr.bf16.mxu0 0
  %3890 = vmatpush1.bf16.msra.mxu0 0
  %3891 = vmatprep.subr.bf16.mxu0 0
  %3892 = vmatpush1.bf16.msra.mxu0 0
  %3893 = vmatprep.subr.bf16.mxu0 0
  %3894 = vmatpush1.bf16.msra.mxu0 0
  %3895 = vmatprep.subr.bf16.mxu0 0
  %3896 = vmatpush1.bf16.msra.mxu0 0
  %3897 = vmatprep.subr.bf16.mxu0 0
  %3898 = vmatpush1.bf16.msra.mxu0 0
  %3899 = vmatprep.subr.bf16.mxu0 0
  %3900 = vmatpush1.bf16.msra.mxu0 0
  %3901 = vmatprep.mubr.bf16.mxu0 0
  %3902 = vmatmul.mubr.bf16.gmra.mrb[0].mxu0 %v3867
  %v3903 = vpop.f32.mrb[0].mxu0
  %v3904 = vadd.f32 0.0, %v3903
  %v3905 = vpop.f32.mrb[0].mxu0
  %v3906 = vpop.f32.mrb[0].mxu0
  %v3907 = vpop.f32.mrb[0].mxu0
  %3908 = vdwg.mxu0
  %v3909 = vadd.f32 %v3831, %v3904
  %s3910 = scalar_lea.vmem %s5, 960
  %v3911 = vld [vmem:[%s3910] sm:$0xf]
  %v3912 = vld [vmem:[%s3910 + $0x4] sm:$0xf]
  %v3913 = vld [vmem:[%s3910 + $0x8] sm:$0xf]
  %v3914 = vld [vmem:[%s3910 + $0xc] sm:$0xf]
  %v3915 = vld [vmem:[%s3910 + $0x10] sm:$0xf]
  %v3916 = vld [vmem:[%s3910 + $0x14] sm:$0xf]
  %v3917 = vld [vmem:[%s3910 + $0x18] sm:$0xf]
  %v3918 = vld [vmem:[%s3910 + $0x1c] sm:$0xf]
  %v3927 = vunpack.c.l.b16 %v3911
  %v3928 = vunpack.c.l.b16 %v3912
  %v3929 = vunpack.c.l.b16 %v3913
  %v3930 = vunpack.c.l.b16 %v3914
  %v3931 = vunpack.c.l.b16 %v3915
  %v3932 = vunpack.c.l.b16 %v3916
  %v3933 = vunpack.c.l.b16 %v3917
  %v3934 = vunpack.c.l.b16 %v3918
  %v3935 = vpack.c.b16 %v3928, %v3927
  %v3936 = vpack.c.b16 %v3930, %v3929
  %v3937 = vpack.c.b16 %v3932, %v3931
  %v3938 = vpack.c.b16 %v3934, %v3933
  %v3944 = vsel %vm1615, %v1571, 0
  %3946 = vmatprep.subr.bf16.mxu0 0
  %3947 = vmatpush1.bf16.msra.mxu0 %v3935
  %3948 = vmatprep.subr.bf16.mxu0 0
  %3949 = vmatpush1.bf16.msra.mxu0 %v3936
  %3950 = vmatprep.subr.bf16.mxu0 0
  %3951 = vmatpush1.bf16.msra.mxu0 %v3937
  %3952 = vmatprep.subr.bf16.mxu0 0
  %3953 = vmatpush1.bf16.msra.mxu0 %v3938
  %3954 = vmatprep.subr.bf16.mxu0 0
  %3955 = vmatpush1.bf16.msra.mxu0 0
  %3956 = vmatprep.subr.bf16.mxu0 0
  %3957 = vmatpush1.bf16.msra.mxu0 0
  %3958 = vmatprep.subr.bf16.mxu0 0
  %3959 = vmatpush1.bf16.msra.mxu0 0
  %3960 = vmatprep.subr.bf16.mxu0 0
  %3961 = vmatpush1.bf16.msra.mxu0 0
  %3962 = vmatprep.subr.bf16.mxu0 0
  %3963 = vmatpush1.bf16.msra.mxu0 0
  %3964 = vmatprep.subr.bf16.mxu0 0
  %3965 = vmatpush1.bf16.msra.mxu0 0
  %3966 = vmatprep.subr.bf16.mxu0 0
  %3967 = vmatpush1.bf16.msra.mxu0 0
  %3968 = vmatprep.subr.bf16.mxu0 0
  %3969 = vmatpush1.bf16.msra.mxu0 0
  %3970 = vmatprep.subr.bf16.mxu0 0
  %3971 = vmatpush1.bf16.msra.mxu0 0
  %3972 = vmatprep.subr.bf16.mxu0 0
  %3973 = vmatpush1.bf16.msra.mxu0 0
  %3974 = vmatprep.subr.bf16.mxu0 0
  %3975 = vmatpush1.bf16.msra.mxu0 0
  %3976 = vmatprep.subr.bf16.mxu0 0
  %3977 = vmatpush1.bf16.msra.mxu0 0
  %3978 = vmatprep.mubr.bf16.mxu0 0
  %3979 = vmatmul.mubr.bf16.gmra.mrb[0].mxu0 %v3944
  %v3980 = vpop.f32.mrb[0].mxu0
  %v3981 = vadd.f32 0.0, %v3980
  %v3982 = vpop.f32.mrb[0].mxu0
  %v3983 = vpop.f32.mrb[0].mxu0
  %v3984 = vpop.f32.mrb[0].mxu0
  %3985 = vdwg.mxu0
  %v3986 = vadd.f32 %v3909, %v3981
  %s3987 = scalar_lea.vmem %s5, 992
  %v3988 = vld [vmem:[%s3987] sm:$0xf]
  %v3989 = vld [vmem:[%s3987 + $0x4] sm:$0xf]
  %v3990 = vld [vmem:[%s3987 + $0x8] sm:$0xf]
  %v3991 = vld [vmem:[%s3987 + $0xc] sm:$0xf]
  %v3992 = vld [vmem:[%s3987 + $0x10] sm:$0xf]
  %v3993 = vld [vmem:[%s3987 + $0x14] sm:$0xf]
  %v3994 = vld [vmem:[%s3987 + $0x18] sm:$0xf]
  %v3995 = vld [vmem:[%s3987 + $0x1c] sm:$0xf]
  %v3997 = vrot.slane %v1571, 1
  %v4006 = vunpack.c.l.b16 %v3988
  %v4007 = vunpack.c.l.b16 %v3989
  %v4008 = vunpack.c.l.b16 %v3990
  %v4009 = vunpack.c.l.b16 %v3991
  %v4010 = vunpack.c.l.b16 %v3992
  %v4011 = vunpack.c.l.b16 %v3993
  %v4012 = vunpack.c.l.b16 %v3994
  %v4013 = vunpack.c.l.b16 %v3995
  %v4014 = vpack.c.b16 %v4007, %v4006
  %v4015 = vpack.c.b16 %v4009, %v4008
  %v4016 = vpack.c.b16 %v4011, %v4010
  %v4017 = vpack.c.b16 %v4013, %v4012
  %v4023 = vsel %vm1615, %v3997, 0
  %4025 = vmatprep.subr.bf16.mxu0 0
  %4026 = vmatpush1.bf16.msra.mxu0 %v4014
  %4027 = vmatprep.subr.bf16.mxu0 0
  %4028 = vmatpush1.bf16.msra.mxu0 %v4015
  %4029 = vmatprep.subr.bf16.mxu0 0
  %4030 = vmatpush1.bf16.msra.mxu0 %v4016
  %4031 = vmatprep.subr.bf16.mxu0 0
  %4032 = vmatpush1.bf16.msra.mxu0 %v4017
  %4033 = vmatprep.subr.bf16.mxu0 0
  %4034 = vmatpush1.bf16.msra.mxu0 0
  %4035 = vmatprep.subr.bf16.mxu0 0
  %4036 = vmatpush1.bf16.msra.mxu0 0
  %4037 = vmatprep.subr.bf16.mxu0 0
  %4038 = vmatpush1.bf16.msra.mxu0 0
  %4039 = vmatprep.subr.bf16.mxu0 0
  %4040 = vmatpush1.bf16.msra.mxu0 0
  %4041 = vmatprep.subr.bf16.mxu0 0
  %4042 = vmatpush1.bf16.msra.mxu0 0
  %4043 = vmatprep.subr.bf16.mxu0 0
  %4044 = vmatpush1.bf16.msra.mxu0 0
  %4045 = vmatprep.subr.bf16.mxu0 0
  %4046 = vmatpush1.bf16.msra.mxu0 0
  %4047 = vmatprep.subr.bf16.mxu0 0
  %4048 = vmatpush1.bf16.msra.mxu0 0
  %4049 = vmatprep.subr.bf16.mxu0 0
  %4050 = vmatpush1.bf16.msra.mxu0 0
  %4051 = vmatprep.subr.bf16.mxu0 0
  %4052 = vmatpush1.bf16.msra.mxu0 0
  %4053 = vmatprep.subr.bf16.mxu0 0
  %4054 = vmatpush1.bf16.msra.mxu0 0
  %4055 = vmatprep.subr.bf16.mxu0 0
  %4056 = vmatpush1.bf16.msra.mxu0 0
  %4057 = vmatprep.mubr.bf16.mxu0 0
  %4058 = vmatmul.mubr.bf16.gmra.mrb[0].mxu0 %v4023
  %v4059 = vpop.f32.mrb[0].mxu0
  %v4060 = vadd.f32 0.0, %v4059
  %v4061 = vpop.f32.mrb[0].mxu0
  %v4062 = vpop.f32.mrb[0].mxu0
  %v4063 = vpop.f32.mrb[0].mxu0
  %4064 = vdwg.mxu0
  %v4065 = vadd.f32 %v3986, %v4060
  %s4066 = scalar_lea.vmem %s5, 1024
  %v4067 = vld [vmem:[%s4066] sm:$0xf]
  %v4068 = vld [vmem:[%s4066 + $0x4] sm:$0xf]
  %v4069 = vld [vmem:[%s4066 + $0x8] sm:$0xf]
  %v4070 = vld [vmem:[%s4066 + $0xc] sm:$0xf]
  %v4071 = vld [vmem:[%s4066 + $0x10] sm:$0xf]
  %v4072 = vld [vmem:[%s4066 + $0x14] sm:$0xf]
  %v4073 = vld [vmem:[%s4066 + $0x18] sm:$0xf]
  %v4074 = vld [vmem:[%s4066 + $0x1c] sm:$0xf]
  %v4075 = vrot.slane %v1571, 2
  %v4084 = vunpack.c.l.b16 %v4067
  %v4085 = vunpack.c.l.b16 %v4068
  %v4086 = vunpack.c.l.b16 %v4069
  %v4087 = vunpack.c.l.b16 %v4070
  %v4088 = vunpack.c.l.b16 %v4071
  %v4089 = vunpack.c.l.b16 %v4072
  %v4090 = vunpack.c.l.b16 %v4073
  %v4091 = vunpack.c.l.b16 %v4074
  %v4092 = vpack.c.b16 %v4085, %v4084
  %v4093 = vpack.c.b16 %v4087, %v4086
  %v4094 = vpack.c.b16 %v4089, %v4088
  %v4095 = vpack.c.b16 %v4091, %v4090
  %v4101 = vsel %vm1615, %v4075, 0
  %4103 = vmatprep.subr.bf16.mxu0 0
  %4104 = vmatpush1.bf16.msra.mxu0 %v4092
  %4105 = vmatprep.subr.bf16.mxu0 0
  %4106 = vmatpush1.bf16.msra.mxu0 %v4093
  %4107 = vmatprep.subr.bf16.mxu0 0
  %4108 = vmatpush1.bf16.msra.mxu0 %v4094
  %4109 = vmatprep.subr.bf16.mxu0 0
  %4110 = vmatpush1.bf16.msra.mxu0 %v4095
  %4111 = vmatprep.subr.bf16.mxu0 0
  %4112 = vmatpush1.bf16.msra.mxu0 0
  %4113 = vmatprep.subr.bf16.mxu0 0
  %4114 = vmatpush1.bf16.msra.mxu0 0
  %4115 = vmatprep.subr.bf16.mxu0 0
  %4116 = vmatpush1.bf16.msra.mxu0 0
  %4117 = vmatprep.subr.bf16.mxu0 0
  %4118 = vmatpush1.bf16.msra.mxu0 0
  %4119 = vmatprep.subr.bf16.mxu0 0
  %4120 = vmatpush1.bf16.msra.mxu0 0
  %4121 = vmatprep.subr.bf16.mxu0 0
  %4122 = vmatpush1.bf16.msra.mxu0 0
  %4123 = vmatprep.subr.bf16.mxu0 0
  %4124 = vmatpush1.bf16.msra.mxu0 0
  %4125 = vmatprep.subr.bf16.mxu0 0
  %4126 = vmatpush1.bf16.msra.mxu0 0
  %4127 = vmatprep.subr.bf16.mxu0 0
  %4128 = vmatpush1.bf16.msra.mxu0 0
  %4129 = vmatprep.subr.bf16.mxu0 0
  %4130 = vmatpush1.bf16.msra.mxu0 0
  %4131 = vmatprep.subr.bf16.mxu0 0
  %4132 = vmatpush1.bf16.msra.mxu0 0
  %4133 = vmatprep.subr.bf16.mxu0 0
  %4134 = vmatpush1.bf16.msra.mxu0 0
  %4135 = vmatprep.mubr.bf16.mxu0 0
  %4136 = vmatmul.mubr.bf16.gmra.mrb[0].mxu0 %v4101
  %v4137 = vpop.f32.mrb[0].mxu0
  %v4138 = vadd.f32 0.0, %v4137
  %v4139 = vpop.f32.mrb[0].mxu0
  %v4140 = vpop.f32.mrb[0].mxu0
  %v4141 = vpop.f32.mrb[0].mxu0
  %4142 = vdwg.mxu0
  %v4143 = vadd.f32 %v4065, %v4138
  %s4144 = scalar_lea.vmem %s5, 1056
  %v4145 = vld [vmem:[%s4144] sm:$0xf]
  %v4146 = vld [vmem:[%s4144 + $0x4] sm:$0xf]
  %v4147 = vld [vmem:[%s4144 + $0x8] sm:$0xf]
  %v4148 = vld [vmem:[%s4144 + $0xc] sm:$0xf]
  %v4149 = vld [vmem:[%s4144 + $0x10] sm:$0xf]
  %v4150 = vld [vmem:[%s4144 + $0x14] sm:$0xf]
  %v4151 = vld [vmem:[%s4144 + $0x18] sm:$0xf]
  %v4152 = vld [vmem:[%s4144 + $0x1c] sm:$0xf]
  %v4153 = vrot.slane %v1571, 3
  %v4162 = vunpack.c.l.b16 %v4145
  %v4163 = vunpack.c.l.b16 %v4146
  %v4164 = vunpack.c.l.b16 %v4147
  %v4165 = vunpack.c.l.b16 %v4148
  %v4166 = vunpack.c.l.b16 %v4149
  %v4167 = vunpack.c.l.b16 %v4150
  %v4168 = vunpack.c.l.b16 %v4151
  %v4169 = vunpack.c.l.b16 %v4152
  %v4170 = vpack.c.b16 %v4163, %v4162
  %v4171 = vpack.c.b16 %v4165, %v4164
  %v4172 = vpack.c.b16 %v4167, %v4166
  %v4173 = vpack.c.b16 %v4169, %v4168
  %v4179 = vsel %vm1615, %v4153, 0
  %4181 = vmatprep.subr.bf16.mxu0 0
  %4182 = vmatpush1.bf16.msra.mxu0 %v4170
  %4183 = vmatprep.subr.bf16.mxu0 0
  %4184 = vmatpush1.bf16.msra.mxu0 %v4171
  %4185 = vmatprep.subr.bf16.mxu0 0
  %4186 = vmatpush1.bf16.msra.mxu0 %v4172
  %4187 = vmatprep.subr.bf16.mxu0 0
  %4188 = vmatpush1.bf16.msra.mxu0 %v4173
  %4189 = vmatprep.subr.bf16.mxu0 0
  %4190 = vmatpush1.bf16.msra.mxu0 0
  %4191 = vmatprep.subr.bf16.mxu0 0
  %4192 = vmatpush1.bf16.msra.mxu0 0
  %4193 = vmatprep.subr.bf16.mxu0 0
  %4194 = vmatpush1.bf16.msra.mxu0 0
  %4195 = vmatprep.subr.bf16.mxu0 0
  %4196 = vmatpush1.bf16.msra.mxu0 0
  %4197 = vmatprep.subr.bf16.mxu0 0
  %4198 = vmatpush1.bf16.msra.mxu0 0
  %4199 = vmatprep.subr.bf16.mxu0 0
  %4200 = vmatpush1.bf16.msra.mxu0 0
  %4201 = vmatprep.subr.bf16.mxu0 0
  %4202 = vmatpush1.bf16.msra.mxu0 0
  %4203 = vmatprep.subr.bf16.mxu0 0
  %4204 = vmatpush1.bf16.msra.mxu0 0
  %4205 = vmatprep.subr.bf16.mxu0 0
  %4206 = vmatpush1.bf16.msra.mxu0 0
  %4207 = vmatprep.subr.bf16.mxu0 0
  %4208 = vmatpush1.bf16.msra.mxu0 0
  %4209 = vmatprep.subr.bf16.mxu0 0
  %4210 = vmatpush1.bf16.msra.mxu0 0
  %4211 = vmatprep.subr.bf16.mxu0 0
  %4212 = vmatpush1.bf16.msra.mxu0 0
  %4213 = vmatprep.mubr.bf16.mxu0 0
  %4214 = vmatmul.mubr.bf16.gmra.mrb[0].mxu0 %v4179
  %v4215 = vpop.f32.mrb[0].mxu0
  %v4216 = vadd.f32 0.0, %v4215
  %v4217 = vpop.f32.mrb[0].mxu0
  %v4218 = vpop.f32.mrb[0].mxu0
  %v4219 = vpop.f32.mrb[0].mxu0
  %4220 = vdwg.mxu0
  %v4221 = vadd.f32 %v4143, %v4216
  %s4222 = scalar_lea.vmem %s5, 1088
  %v4223 = vld [vmem:[%s4222] sm:$0xf]
  %v4224 = vld [vmem:[%s4222 + $0x4] sm:$0xf]
  %v4225 = vld [vmem:[%s4222 + $0x8] sm:$0xf]
  %v4226 = vld [vmem:[%s4222 + $0xc] sm:$0xf]
  %v4227 = vld [vmem:[%s4222 + $0x10] sm:$0xf]
  %v4228 = vld [vmem:[%s4222 + $0x14] sm:$0xf]
  %v4229 = vld [vmem:[%s4222 + $0x18] sm:$0xf]
  %v4230 = vld [vmem:[%s4222 + $0x1c] sm:$0xf]
  %v4231 = vrot.slane %v1571, 4
  %v4240 = vunpack.c.l.b16 %v4223
  %v4241 = vunpack.c.l.b16 %v4224
  %v4242 = vunpack.c.l.b16 %v4225
  %v4243 = vunpack.c.l.b16 %v4226
  %v4244 = vunpack.c.l.b16 %v4227
  %v4245 = vunpack.c.l.b16 %v4228
  %v4246 = vunpack.c.l.b16 %v4229
  %v4247 = vunpack.c.l.b16 %v4230
  %v4248 = vpack.c.b16 %v4241, %v4240
  %v4249 = vpack.c.b16 %v4243, %v4242
  %v4250 = vpack.c.b16 %v4245, %v4244
  %v4251 = vpack.c.b16 %v4247, %v4246
  %v4257 = vsel %vm1615, %v4231, 0
  %4259 = vmatprep.subr.bf16.mxu0 0
  %4260 = vmatpush1.bf16.msra.mxu0 %v4248
  %4261 = vmatprep.subr.bf16.mxu0 0
  %4262 = vmatpush1.bf16.msra.mxu0 %v4249
  %4263 = vmatprep.subr.bf16.mxu0 0
  %4264 = vmatpush1.bf16.msra.mxu0 %v4250
  %4265 = vmatprep.subr.bf16.mxu0 0
  %4266 = vmatpush1.bf16.msra.mxu0 %v4251
  %4267 = vmatprep.subr.bf16.mxu0 0
  %4268 = vmatpush1.bf16.msra.mxu0 0
  %4269 = vmatprep.subr.bf16.mxu0 0
  %4270 = vmatpush1.bf16.msra.mxu0 0
  %4271 = vmatprep.subr.bf16.mxu0 0
  %4272 = vmatpush1.bf16.msra.mxu0 0
  %4273 = vmatprep.subr.bf16.mxu0 0
  %4274 = vmatpush1.bf16.msra.mxu0 0
  %4275 = vmatprep.subr.bf16.mxu0 0
  %4276 = vmatpush1.bf16.msra.mxu0 0
  %4277 = vmatprep.subr.bf16.mxu0 0
  %4278 = vmatpush1.bf16.msra.mxu0 0
  %4279 = vmatprep.subr.bf16.mxu0 0
  %4280 = vmatpush1.bf16.msra.mxu0 0
  %4281 = vmatprep.subr.bf16.mxu0 0
  %4282 = vmatpush1.bf16.msra.mxu0 0
  %4283 = vmatprep.subr.bf16.mxu0 0
  %4284 = vmatpush1.bf16.msra.mxu0 0
  %4285 = vmatprep.subr.bf16.mxu0 0
  %4286 = vmatpush1.bf16.msra.mxu0 0
  %4287 = vmatprep.subr.bf16.mxu0 0
  %4288 = vmatpush1.bf16.msra.mxu0 0
  %4289 = vmatprep.subr.bf16.mxu0 0
  %4290 = vmatpush1.bf16.msra.mxu0 0
  %4291 = vmatprep.mubr.bf16.mxu0 0
  %4292 = vmatmul.mubr.bf16.gmra.mrb[0].mxu0 %v4257
  %v4293 = vpop.f32.mrb[0].mxu0
  %v4294 = vadd.f32 0.0, %v4293
  %v4295 = vpop.f32.mrb[0].mxu0
  %v4296 = vpop.f32.mrb[0].mxu0
  %v4297 = vpop.f32.mrb[0].mxu0
  %4298 = vdwg.mxu0
  %v4299 = vadd.f32 %v4221, %v4294
  %s4300 = scalar_lea.vmem %s5, 1120
  %v4301 = vld [vmem:[%s4300] sm:$0xf]
  %v4302 = vld [vmem:[%s4300 + $0x4] sm:$0xf]
  %v4303 = vld [vmem:[%s4300 + $0x8] sm:$0xf]
  %v4304 = vld [vmem:[%s4300 + $0xc] sm:$0xf]
  %v4305 = vld [vmem:[%s4300 + $0x10] sm:$0xf]
  %v4306 = vld [vmem:[%s4300 + $0x14] sm:$0xf]
  %v4307 = vld [vmem:[%s4300 + $0x18] sm:$0xf]
  %v4308 = vld [vmem:[%s4300 + $0x1c] sm:$0xf]
  %v4309 = vrot.slane %v1571, 5
  %v4318 = vunpack.c.l.b16 %v4301
  %v4319 = vunpack.c.l.b16 %v4302
  %v4320 = vunpack.c.l.b16 %v4303
  %v4321 = vunpack.c.l.b16 %v4304
  %v4322 = vunpack.c.l.b16 %v4305
  %v4323 = vunpack.c.l.b16 %v4306
  %v4324 = vunpack.c.l.b16 %v4307
  %v4325 = vunpack.c.l.b16 %v4308
  %v4326 = vpack.c.b16 %v4319, %v4318
  %v4327 = vpack.c.b16 %v4321, %v4320
  %v4328 = vpack.c.b16 %v4323, %v4322
  %v4329 = vpack.c.b16 %v4325, %v4324
  %v4335 = vsel %vm1615, %v4309, 0
  %4337 = vmatprep.subr.bf16.mxu0 0
  %4338 = vmatpush1.bf16.msra.mxu0 %v4326
  %4339 = vmatprep.subr.bf16.mxu0 0
  %4340 = vmatpush1.bf16.msra.mxu0 %v4327
  %4341 = vmatprep.subr.bf16.mxu0 0
  %4342 = vmatpush1.bf16.msra.mxu0 %v4328
  %4343 = vmatprep.subr.bf16.mxu0 0
  %4344 = vmatpush1.bf16.msra.mxu0 %v4329
  %4345 = vmatprep.subr.bf16.mxu0 0
  %4346 = vmatpush1.bf16.msra.mxu0 0
  %4347 = vmatprep.subr.bf16.mxu0 0
  %4348 = vmatpush1.bf16.msra.mxu0 0
  %4349 = vmatprep.subr.bf16.mxu0 0
  %4350 = vmatpush1.bf16.msra.mxu0 0
  %4351 = vmatprep.subr.bf16.mxu0 0
  %4352 = vmatpush1.bf16.msra.mxu0 0
  %4353 = vmatprep.subr.bf16.mxu0 0
  %4354 = vmatpush1.bf16.msra.mxu0 0
  %4355 = vmatprep.subr.bf16.mxu0 0
  %4356 = vmatpush1.bf16.msra.mxu0 0
  %4357 = vmatprep.subr.bf16.mxu0 0
  %4358 = vmatpush1.bf16.msra.mxu0 0
  %4359 = vmatprep.subr.bf16.mxu0 0
  %4360 = vmatpush1.bf16.msra.mxu0 0
  %4361 = vmatprep.subr.bf16.mxu0 0
  %4362 = vmatpush1.bf16.msra.mxu0 0
  %4363 = vmatprep.subr.bf16.mxu0 0
  %4364 = vmatpush1.bf16.msra.mxu0 0
  %4365 = vmatprep.subr.bf16.mxu0 0
  %4366 = vmatpush1.bf16.msra.mxu0 0
  %4367 = vmatprep.subr.bf16.mxu0 0
  %4368 = vmatpush1.bf16.msra.mxu0 0
  %4369 = vmatprep.mubr.bf16.mxu0 0
  %4370 = vmatmul.mubr.bf16.gmra.mrb[0].mxu0 %v4335
  %v4371 = vpop.f32.mrb[0].mxu0
  %v4372 = vadd.f32 0.0, %v4371
  %v4373 = vpop.f32.mrb[0].mxu0
  %v4374 = vpop.f32.mrb[0].mxu0
  %v4375 = vpop.f32.mrb[0].mxu0
  %4376 = vdwg.mxu0
  %v4377 = vadd.f32 %v4299, %v4372
  %v4378 = vld [vmem:[%s6] sm:$0x1]
  %v4380 = vlaneseq
  %v4381 = vshrl.u32 %v4380, 7
  %v4382 = vsub.s32 0, %v4381
  %v4383 = vrot.slane %v4378, %v4382
  %v4385 = vadd.f32 %v4377, %v4383
  %v4386 = vmax.f32 %v4385, 0.0
  %v4387 = vpack.c.bf16 %v4386, %v4386
  %v4388 = vld [vmem:[%s7] sm:$0xf]
  %v4389 = vld [vmem:[%s7 + $0x4] sm:$0xf]
  %v4390 = vld [vmem:[%s7 + $0x8] sm:$0xf]
  %v4391 = vld [vmem:[%s7 + $0xc] sm:$0xf]
  %v4392 = vld [vmem:[%s8] sm:$0x1]
  %v4394 = vlaneseq
  %v4395 = vshrl.u32 %v4394, 7
  %v4396 = vsub.s32 0, %v4395
  %v4397 = vrot.slane %v4392, %v4396
  %v4403 = vunpack.c.l.b16 %v4388
  %v4404 = vunpack.c.l.b16 %v4389
  %v4405 = vunpack.c.l.b16 %v4390
  %v4406 = vunpack.c.l.b16 %v4391
  %v4407 = vpack.c.b16 %v4404, %v4403
  %v4408 = vpack.c.b16 %v4406, %v4405
  %v4412 = vsel %vm364, %v4387, 0
  %4414 = vmatprep.subr.bf16.mxu0 0
  %4415 = vmatpush1.bf16.msra.mxu0 %v4407
  %4416 = vmatprep.subr.bf16.mxu0 0
  %4417 = vmatpush1.bf16.msra.mxu0 %v4408
  %4418 = vmatprep.subr.bf16.mxu0 0
  %4419 = vmatpush1.bf16.msra.mxu0 0
  %4420 = vmatprep.subr.bf16.mxu0 0
  %4421 = vmatpush1.bf16.msra.mxu0 0
  %4422 = vmatprep.subr.bf16.mxu0 0
  %4423 = vmatpush1.bf16.msra.mxu0 0
  %4424 = vmatprep.subr.bf16.mxu0 0
  %4425 = vmatpush1.bf16.msra.mxu0 0
  %4426 = vmatprep.subr.bf16.mxu0 0
  %4427 = vmatpush1.bf16.msra.mxu0 0
  %4428 = vmatprep.subr.bf16.mxu0 0
  %4429 = vmatpush1.bf16.msra.mxu0 0
  %4430 = vmatprep.subr.bf16.mxu0 0
  %4431 = vmatpush1.bf16.msra.mxu0 0
  %4432 = vmatprep.subr.bf16.mxu0 0
  %4433 = vmatpush1.bf16.msra.mxu0 0
  %4434 = vmatprep.subr.bf16.mxu0 0
  %4435 = vmatpush1.bf16.msra.mxu0 0
  %4436 = vmatprep.subr.bf16.mxu0 0
  %4437 = vmatpush1.bf16.msra.mxu0 0
  %4438 = vmatprep.subr.bf16.mxu0 0
  %4439 = vmatpush1.bf16.msra.mxu0 0
  %4440 = vmatprep.subr.bf16.mxu0 0
  %4441 = vmatpush1.bf16.msra.mxu0 0
  %4442 = vmatprep.subr.bf16.mxu0 0
  %4443 = vmatpush1.bf16.msra.mxu0 0
  %4444 = vmatprep.subr.bf16.mxu0 0
  %4445 = vmatpush1.bf16.msra.mxu0 0
  %4446 = vmatprep.mubr.bf16.mxu0 0
  %4447 = vmatmul.mubr.bf16.gmra.mrb[0].mxu0 %v4412
  %v4448 = vpop.f32.mrb[0].mxu0
  %v4449 = vadd.f32 %v4397, %v4448
  %v4450 = vpop.f32.mrb[0].mxu0
  %v4451 = vpop.f32.mrb[0].mxu0
  %v4452 = vpop.f32.mrb[0].mxu0
  %4453 = vdwg.mxu0
  %v4454 = vpack.c.bf16 %v4449, %v4449
  %v4455 = vld [vmem:[%s9] sm:$0xf]
  %v4456 = vld [vmem:[%s9 + $0x4] sm:$0xf]
  %v4457 = vld [vmem:[#allocation2] sm:$0x1]
  %v4459 = vlaneseq
  %v4460 = vshrl.u32 %v4459, 7
  %v4461 = vsub.s32 0, %v4460
  %v4462 = vrot.slane %v4457, %v4461
  %v4466 = vunpack.c.l.b16 %v4455
  %v4467 = vunpack.c.l.b16 %v4456
  %v4468 = vpack.c.b16 %v4467, %v4466
  %v4471 = vsel %vm130, %v4454, 0
  %4473 = vmatprep.subr.bf16.mxu0 0
  %4474 = vmatpush1.bf16.msra.mxu0 %v4468
  %4475 = vmatprep.subr.bf16.mxu0 0
  %4476 = vmatpush1.bf16.msra.mxu0 0
  %4477 = vmatprep.subr.bf16.mxu0 0
  %4478 = vmatpush1.bf16.msra.mxu0 0
  %4479 = vmatprep.subr.bf16.mxu0 0
  %4480 = vmatpush1.bf16.msra.mxu0 0
  %4481 = vmatprep.subr.bf16.mxu0 0
  %4482 = vmatpush1.bf16.msra.mxu0 0
  %4483 = vmatprep.subr.bf16.mxu0 0
  %4484 = vmatpush1.bf16.msra.mxu0 0
  %4485 = vmatprep.subr.bf16.mxu0 0
  %4486 = vmatpush1.bf16.msra.mxu0 0
  %4487 = vmatprep.subr.bf16.mxu0 0
  %4488 = vmatpush1.bf16.msra.mxu0 0
  %4489 = vmatprep.subr.bf16.mxu0 0
  %4490 = vmatpush1.bf16.msra.mxu0 0
  %4491 = vmatprep.subr.bf16.mxu0 0
  %4492 = vmatpush1.bf16.msra.mxu0 0
  %4493 = vmatprep.subr.bf16.mxu0 0
  %4494 = vmatpush1.bf16.msra.mxu0 0
  %4495 = vmatprep.subr.bf16.mxu0 0
  %4496 = vmatpush1.bf16.msra.mxu0 0
  %4497 = vmatprep.subr.bf16.mxu0 0
  %4498 = vmatpush1.bf16.msra.mxu0 0
  %4499 = vmatprep.subr.bf16.mxu0 0
  %4500 = vmatpush1.bf16.msra.mxu0 0
  %4501 = vmatprep.subr.bf16.mxu0 0
  %4502 = vmatpush1.bf16.msra.mxu0 0
  %4503 = vmatprep.subr.bf16.mxu0 0
  %4504 = vmatpush1.bf16.msra.mxu0 0
  %4505 = vmatprep.mubr.bf16.mxu0 0
  %4506 = vmatmul.mubr.bf16.gmra.mrb[0].mxu0 %v4471
  %v4507 = vpop.f32.mrb[0].mxu0
  %v4508 = vadd.f32 %v4462, %v4507
  %v4509 = vpop.f32.mrb[0].mxu0
  %v4510 = vpop.f32.mrb[0].mxu0
  %v4511 = vpop.f32.mrb[0].mxu0
  %4512 = vdwg.mxu0
  %v4513 = vsub.f32 0.0, %v4508
  %v4514 = vmul.f32 %v4513, 1.442695
  %v4515 = vpow.pop %v4514
  %v4516 = vadd.f32 %v4515, 1.0
  %v4517 = vrcp.pop %v4516
  %v4518 = vmax.f32 %v4517, 0.0
  %v4519 = vmin.f32 %v4518, 1.0
  %vm4520 = vcmask 1024
  %4521 = vst.msk [vmem:[%s11] sm:$0x3] %vm4520, %v4519
  // Predicated region
  $region46: #{discriminator_forward.1} parent=0 // pred_check
    _
  $region47: #{discriminator_forward.1} parent=0 // pred_check_branch
    %4523 = sbr.rel (0) target = $region49
  $region48: #{discriminator_forward.1} parent=0 // pred_region
    _
  $region49: #{discriminator_forward.1} parent=0 // pred_fallthru
    _
  // Predicated region
  $region50: #{discriminator_forward.1} parent=0 // pred_check
    _
  $region51: #{discriminator_forward.1} parent=0 // pred_check_branch
    %4525 = sbr.rel (0) target = $region53
  $region52: #{discriminator_forward.1} parent=0 // pred_region
    _
  $region53: #{discriminator_forward.1} parent=0 // pred_fallthru
    _

</llo_original>
